<compile_context>
chip_gen: v7x
topology: tpu7x:2x2x1
jax: 0.10.0
libtpu: 0.0.40
codegen_flags: <defaults>
</compile_context>

<pallas_src>
import jax
import jax.numpy as jnp
from jax.experimental import pallas as pl
from jax.experimental.pallas import tpu as pltpu

D_ACCOUNT_ENC = 256 // 8  # 32
LN_EPS = 1e-5
_MXU_PREC = jax.lax.Precision.HIGHEST  # keep true f32 accuracy through the MXU


def account_encoding_kernel(x_ref, wblk_ref, qblk_ref, psum_ref, segbc_ref,
                            nrow_ref, wrow_ref, o_ref):
    # x_ref:    (rm, Kp)   packed input rows (pack logical rows per physical row, lane-padded to Kp)
    # wblk_ref: (Kp, L)    block-diagonal gamma*(W - mean(W)) per logical-row segment
    # qblk_ref: (Kp, Kp)   block-diagonal 2x2 variance quadratic-form coefficients
    # psum_ref: (Kp, Pp)   pair-sum matrix (collapses each 2-lane slot to its variance)
    # segbc_ref:(Pp, L)    0/1 segment-broadcast matrix (one row -> D output lanes)
    # nrow_ref: (2, Kp)    row0: tiled [2*vb0, 2*vb1], row1: tiled vbb/2 (variance lin/const terms)
    # wrow_ref: (2, L)     row0: tiled gamma*(b - mean(b)), row1: tiled beta
    # o_ref:    (rm, L)    packed output rows
    f32 = jnp.float32
    x = x_ref[...].astype(f32)                                            # (rm, Kp)

    # --- linear stage on the MXU: gamma * (y - mean(y)) -------------------------------------
    lin = jnp.dot(x, wblk_ref[...], precision=_MXU_PREC,
                  preferred_element_type=f32)                             # (rm, L)
    ycg = lin + wrow_ref[0:1, :]                                          # + gamma*(b - mean b)

    # --- analytic LayerNorm variance, computed on narrow slabs only -------------------------
    # per 2-lane slot j:  u[2j] + u[2j+1] = v00*x0^2 + v11*x1^2 + 2*v01*x0*x1
    #                                       + 2*vb0*x0 + 2*vb1*x1 + vbb   == var(y_j)
    t = jnp.dot(x, qblk_ref[...], precision=_MXU_PREC,
                preferred_element_type=f32)                               # (rm, Kp)
    u = x * (t + nrow_ref[0:1, :]) + nrow_ref[1:2, :]                     # (rm, Kp)
    var_n = jnp.dot(u, psum_ref[...], precision=_MXU_PREC,
                    preferred_element_type=f32)                           # (rm, Pp)
    inv_n = jax.lax.rsqrt(jnp.maximum(var_n, 0.0) + LN_EPS)               # narrow EUP, clamped
    inv = jnp.dot(inv_n, segbc_ref[...], precision=_MXU_PREC,
                  preferred_element_type=f32)                             # (rm, L) broadcast 1/std

    # --- epilogue: 3 wide VPU ops / element --------------------------------------------------
    o_ref[...] = (ycg * inv + wrow_ref[1:2, :]).astype(o_ref.dtype)


def _choose_pack(M):
    # Largest lane packing that divides M and keeps >= 8 physical rows.  Awkward M (odd / tiny)
    # degrades to pack=1 (correct, but narrower / masked-store path).
    for p in (64, 32, 16, 8, 4, 2, 1):
        if M % p == 0 and M // p >= 8:
            return p
    return 1


def _build_params(weight, bias, gamma, beta, pack, Kp, Pp):
    # weight: (D, 2) PyTorch Linear convention; bias/gamma/beta: (D,)
    D = weight.shape[0]
    K = 2 * pack
    L = D * pack
    f32 = jnp.float32

    w0 = weight[:, 0].astype(f32)
    w1 = weight[:, 1].astype(f32)
    b = bias.astype(f32)
    g = gamma.astype(f32)
    bt = beta.astype(f32)

    wc0 = w0 - jnp.mean(w0)
    wc1 = w1 - jnp.mean(w1)
    bc = b - jnp.mean(b)

    v00 = jnp.mean(wc0 * wc0)
    v11 = jnp.mean(wc1 * wc1)
    v01 = jnp.mean(wc0 * wc1)
    vb0 = jnp.mean(wc0 * bc)
    vb1 = jnp.mean(wc1 * bc)
    vbb = jnp.mean(bc * bc)

    eyeP = jnp.eye(pack, dtype=f32)

    # Block-diagonal, gamma-folded, centered weights: wblk[2j+f, j*D+d] = gamma[d]*wc_f[d]
    gw = jnp.stack([g * wc0, g * wc1], axis=0)                            # (2, D)
    wblk = jnp.einsum("jk,fd->jfkd", eyeP, gw).reshape(K, L)
    wblk = jnp.pad(wblk, ((0, Kp - K), (0, 0)))

    # Per-slot 2x2 quadratic form: qblk[2j+f, 2j+g'] = Q[f, g']
    qmat = jnp.stack([jnp.stack([v00, v01]), jnp.stack([v01, v11])])      # (2, 2)
    qblk = jnp.einsum("jk,fg->jfkg", eyeP, qmat).reshape(K, K)
    qblk = jnp.pad(qblk, ((0, Kp - K), (0, Kp - K)))

    # Pair-sum: psum[2j+f, j] = 1
    psum = jnp.repeat(eyeP, 2, axis=0)                                    # (K, pack)
    psum = jnp.pad(psum, ((0, Kp - K), (0, Pp - pack)))

    # Segment broadcast: segbc[j, j*D+d] = 1
    segbc = jnp.einsum("jk,d->jkd", eyeP, jnp.ones((D,), f32)).reshape(pack, L)
    segbc = jnp.pad(segbc, ((0, Pp - pack), (0, 0)))

    # Narrow rows: linear / constant terms of the variance quadratic form (zero in padded lanes).
    clin = jnp.tile(jnp.stack([2.0 * vb0, 2.0 * vb1]), pack)              # (K,)
    ccst = jnp.tile(jnp.stack([0.5 * vbb, 0.5 * vbb]), pack)              # (K,)
    nrow = jnp.pad(jnp.stack([clin, ccst]), ((0, 0), (0, Kp - K)))        # (2, Kp)

    # Wide rows: gamma*(b - mean b) and beta, tiled over the pack segments.
    wrow = jnp.stack([jnp.tile(g * bc, pack), jnp.tile(bt, pack)])        # (2, L)

    return wblk, qblk, psum, segbc, nrow, wrow


def account_encoding(obs_history_account, weight, bias, gamma, beta,
                     *, out_block_bytes=4 * 1024 * 1024):
    """obs_history_account: (B, S, 2); weight: (D, 2); bias/gamma/beta: (D,). Returns (B, S, D) f32."""
    B, S, F = obs_history_account.shape
    assert F == 2, "AccountEncoding expects 2 account features"
    D = weight.shape[0]
    M = B * S

    pack = _choose_pack(M)
    K = 2 * pack
    Kp = max(K, 8)          # keep the MXU contraction dim sublane-aligned
    Pp = max(pack, 8)
    L = D * pack
    n_rows = M // pack

    # Free row-major view: `pack` logical rows per physical row; kernel casts, so no wrapper astype.
    x2d = obs_history_account.reshape(n_rows, K)
    if Kp != K:
        # Only hit for awkward / tiny M (pack < 4): tiny input copy, output path untouched.
        x2d = jnp.pad(x2d, ((0, 0), (0, Kp - K)))

    wblk, qblk, psum, segbc, nrow, wrow = _build_params(
        weight, bias, gamma, beta, pack, Kp, Pp)

    # Row tile: ~out_block_bytes of output per grid step (amortizes the ~0.35us/step overhead,
    # esp. on v7x) while staying well inside VMEM on every generation.
    if n_rows < 8:
        rm = n_rows                                   # block == full array dim (tiny inputs)
    else:
        rm = max(8, (out_block_bytes // (L * 4)) // 8 * 8)
        rm = min(rm, pl.cdiv(n_rows, 8) * 8)          # ragged tail handled by Pallas masking
    grid = (pl.cdiv(n_rows, rm),)

    const = lambda i: (0, 0)                          # resident parameter blocks
    out = pl.pallas_call(
        account_encoding_kernel,
        out_shape=jax.ShapeDtypeStruct((n_rows, L), jnp.float32),
        grid_spec=pltpu.PrefetchScalarGridSpec(
            num_scalar_prefetch=0,
            grid=grid,
            in_specs=[
                pl.BlockSpec((rm, Kp), lambda i: (i, 0)),   # packed input rows
                pl.BlockSpec((Kp, L), const),               # wblk
                pl.BlockSpec((Kp, Kp), const),              # qblk
                pl.BlockSpec((Kp, Pp), const),              # pair-sum
                pl.BlockSpec((Pp, L), const),               # segment broadcast
                pl.BlockSpec((2, Kp), const),               # narrow rows (variance lin/const)
                pl.BlockSpec((2, L), const),                # wide rows (gamma*bc, beta)
            ],
            out_specs=pl.BlockSpec((rm, L), lambda i: (i, 0)),   # lane-dense packed output
        ),
        compiler_params=pltpu.CompilerParams(
            dimension_semantics=("parallel",),               # independent row blocks (v7x: both TCs)
            vmem_limit_bytes=48 * 1024 * 1024,               # v5e's 16 MiB default is too tight
        ),
    )(x2d, wblk, qblk, psum, segbc, nrow, wrow)

    # Free row-major view back to (B, S, D).
    return out.reshape(B, S, D)


def reference(obs_history_account, weight, bias, gamma, beta):
    y = jnp.einsum("bsf,df->bsd", obs_history_account, weight,
                   precision=jax.lax.Precision.HIGHEST) + bias
    mean = jnp.mean(y, axis=-1, keepdims=True)
    var = jnp.mean((y - mean) ** 2, axis=-1, keepdims=True)
    return (y - mean) / jnp.sqrt(var + LN_EPS) * gamma + beta


if __name__ == "__main__":
    key = jax.random.PRNGKey(0)
    k_x, k_w, k_b, k_g, k_be, k_x2 = jax.random.split(key, 6)

    D = D_ACCOUNT_ENC

    # Deterministic synthetic parameters (shapes from nn.Linear(2, D) / nn.LayerNorm(D)).
    weight = jax.random.normal(k_w, (D, 2), dtype=jnp.float32) * (1.0 / jnp.sqrt(2.0))
    bias = jax.random.normal(k_b, (D,), dtype=jnp.float32) * 0.1
    gamma = 1.0 + 0.1 * jax.random.normal(k_g, (D,), dtype=jnp.float32)
    beta = 0.1 * jax.random.normal(k_be, (D,), dtype=jnp.float32)

    def check(x):
        out = jax.block_until_ready(account_encoding(x, weight, bias, gamma, beta))
        ref = reference(x, weight, bias, gamma, beta)
        assert out.shape == ref.shape
        err = jnp.max(jnp.abs(out - ref))
        assert jnp.allclose(out, ref, atol=1e-4, rtol=1e-4), \
            f"mismatch vs reference, max abs err {err}"

    # Main (lane-dense, MXU) path: B*S = 128 -> pack=16, L=512.
    check(jax.random.normal(k_x, (2, 64, 2), dtype=jnp.float32))
    # Small / fallback path matching the module's tiny-seq use: B*S = 16 -> pack=2, padded K.
    check(jax.random.normal(k_x2, (2, 8, 2), dtype=jnp.float32))

    print("KERNEL_OK")
</pallas_src>

<mosaic_0001>
module attributes {stable_mosaic.version = 11 : i64} {
  func.func @account_encoding_kernel(%arg0: i32, %arg1: memref<8x32xf32, #tpu.memory_space<vmem>>, %arg2: memref<32x512xf32, #tpu.memory_space<vmem>>, %arg3: memref<32x32xf32, #tpu.memory_space<vmem>>, %arg4: memref<32x16xf32, #tpu.memory_space<vmem>>, %arg5: memref<16x512xf32, #tpu.memory_space<vmem>>, %arg6: memref<2x32xf32, #tpu.memory_space<vmem>>, %arg7: memref<2x512xf32, #tpu.memory_space<vmem>>, %arg8: memref<8x512xf32, #tpu.memory_space<vmem>>) attributes {dimension_semantics = [#tpu.dimension_semantics<parallel>], iteration_bounds = array<i64: 1>, scalar_prefetch = 0 : i64, scratch_operands = 0 : i64, tpu.core_type = #tpu.core_type<tc>, window_params = [{transform_indices = @transform_0, window_bounds = array<i64: 8, 32>}, {pipeline_mode = #tpu.pipeline_mode<synchronous>, transform_indices = @transform_1, window_bounds = array<i64: 32, 512>}, {pipeline_mode = #tpu.pipeline_mode<synchronous>, transform_indices = @transform_2, window_bounds = array<i64: 32, 32>}, {pipeline_mode = #tpu.pipeline_mode<synchronous>, transform_indices = @transform_3, window_bounds = array<i64: 32, 16>}, {pipeline_mode = #tpu.pipeline_mode<synchronous>, transform_indices = @transform_4, window_bounds = array<i64: 16, 512>}, {pipeline_mode = #tpu.pipeline_mode<synchronous>, transform_indices = @transform_5, window_bounds = array<i64: 2, 32>}, {pipeline_mode = #tpu.pipeline_mode<synchronous>, transform_indices = @transform_6, window_bounds = array<i64: 2, 512>}, {transform_indices = @transform_7, window_bounds = array<i64: 8, 512>}]} {
    %c0 = arith.constant 0 : index
    %c0_0 = arith.constant 0 : index
    %0 = vector.load %arg1[%c0, %c0_0] : memref<8x32xf32, #tpu.memory_space<vmem>>, vector<8x32xf32>
    %c0_1 = arith.constant 0 : index
    %c0_2 = arith.constant 0 : index
    %1 = vector.load %arg2[%c0_1, %c0_2] : memref<32x512xf32, #tpu.memory_space<vmem>>, vector<32x512xf32>
    %cst = arith.constant dense<0.000000e+00> : vector<8x512xf32>
    %2 = tpu.matmul %0, %1, %cst {dimension_numbers = #tpu.dot_dimension_numbers<[1], [0], [0], [1], [0, 0, 1, 1], [], []>, precision = #tpu.contract_precision<fp32>} : vector<8x32xf32>, vector<32x512xf32>, vector<8x512xf32> -> vector<8x512xf32>
    %c0_3 = arith.constant 0 : index
    %c0_4 = arith.constant 0 : index
    %3 = vector.load %arg7[%c0_3, %c0_4] : memref<2x512xf32, #tpu.memory_space<vmem>>, vector<1x512xf32>
    %4 = vector.broadcast %3 : vector<1x512xf32> to vector<8x512xf32>
    %5 = arith.addf %2, %4 : vector<8x512xf32>
    %c0_5 = arith.constant 0 : index
    %c0_6 = arith.constant 0 : index
    %6 = vector.load %arg3[%c0_5, %c0_6] : memref<32x32xf32, #tpu.memory_space<vmem>>, vector<32x32xf32>
    %cst_7 = arith.constant dense<0.000000e+00> : vector<8x32xf32>
    %7 = tpu.matmul %0, %6, %cst_7 {dimension_numbers = #tpu.dot_dimension_numbers<[1], [0], [0], [1], [0, 0, 1, 1], [], []>, precision = #tpu.contract_precision<fp32>} : vector<8x32xf32>, vector<32x32xf32>, vector<8x32xf32> -> vector<8x32xf32>
    %c0_8 = arith.constant 0 : index
    %c0_9 = arith.constant 0 : index
    %8 = vector.load %arg6[%c0_8, %c0_9] : memref<2x32xf32, #tpu.memory_space<vmem>>, vector<1x32xf32>
    %9 = vector.broadcast %8 : vector<1x32xf32> to vector<8x32xf32>
    %10 = arith.addf %7, %9 : vector<8x32xf32>
    %11 = arith.mulf %0, %10 : vector<8x32xf32>
    %c1 = arith.constant 1 : index
    %c0_10 = arith.constant 0 : index
    %12 = vector.load %arg6[%c1, %c0_10] : memref<2x32xf32, #tpu.memory_space<vmem>>, vector<1x32xf32>
    %13 = vector.broadcast %12 : vector<1x32xf32> to vector<8x32xf32>
    %14 = arith.addf %11, %13 : vector<8x32xf32>
    %c0_11 = arith.constant 0 : index
    %c0_12 = arith.constant 0 : index
    %15 = vector.load %arg4[%c0_11, %c0_12] : memref<32x16xf32, #tpu.memory_space<vmem>>, vector<32x16xf32>
    %cst_13 = arith.constant dense<0.000000e+00> : vector<8x16xf32>
    %16 = tpu.matmul %14, %15, %cst_13 {dimension_numbers = #tpu.dot_dimension_numbers<[1], [0], [0], [1], [0, 0, 1, 1], [], []>, precision = #tpu.contract_precision<fp32>} : vector<8x32xf32>, vector<32x16xf32>, vector<8x16xf32> -> vector<8x16xf32>
    %cst_14 = arith.constant 0.000000e+00 : f32
    %17 = vector.broadcast %cst_14 : f32 to vector<8x16xf32>
    %18 = arith.maximumf %16, %17 : vector<8x16xf32>
    %cst_15 = arith.constant 9.99999974E-6 : f32
    %19 = vector.broadcast %cst_15 : f32 to vector<8x16xf32>
    %20 = arith.addf %18, %19 : vector<8x16xf32>
    %21 = math.rsqrt %20 : vector<8x16xf32>
    %c0_16 = arith.constant 0 : index
    %c0_17 = arith.constant 0 : index
    %22 = vector.load %arg5[%c0_16, %c0_17] : memref<16x512xf32, #tpu.memory_space<vmem>>, vector<16x512xf32>
    %cst_18 = arith.constant dense<0.000000e+00> : vector<8x512xf32>
    %23 = tpu.matmul %21, %22, %cst_18 {dimension_numbers = #tpu.dot_dimension_numbers<[1], [0], [0], [1], [0, 0, 1, 1], [], []>, precision = #tpu.contract_precision<fp32>} : vector<8x16xf32>, vector<16x512xf32>, vector<8x512xf32> -> vector<8x512xf32>
    %24 = arith.mulf %5, %23 : vector<8x512xf32>
    %c1_19 = arith.constant 1 : index
    %c0_20 = arith.constant 0 : index
    %25 = vector.load %arg7[%c1_19, %c0_20] : memref<2x512xf32, #tpu.memory_space<vmem>>, vector<1x512xf32>
    %26 = vector.broadcast %25 : vector<1x512xf32> to vector<8x512xf32>
    %27 = arith.addf %24, %26 : vector<8x512xf32>
    %c0_21 = arith.constant 0 : index
    %c0_22 = arith.constant 0 : index
    %28 = vector.load %arg8[%c0_21, %c0_22] : memref<8x512xf32, #tpu.memory_space<vmem>>, vector<8x512xf32>
    tpu.vector_store %arg8[%c0_21, %c0_22], %27 {strides = array<i32>} : memref<8x512xf32, #tpu.memory_space<vmem>>, vector<8x512xf32>,
    return
  }
  func.func @transform_0(%arg0: i32) -> (i32, i32) {
    %c0_i32 = arith.constant 0 : i32
    %c0_i32_0 = arith.constant 0 : i32
    return %arg0, %c0_i32 : i32, i32
  }
  func.func @transform_1(%arg0: i32) -> (i32, i32) {
    %c0_i32 = arith.constant 0 : i32
    %c0_i32_0 = arith.constant 0 : i32
    %c0_i32_1 = arith.constant 0 : i32
    return %c0_i32, %c0_i32_0 : i32, i32
  }
  func.func @transform_2(%arg0: i32) -> (i32, i32) {
    %c0_i32 = arith.constant 0 : i32
    %c0_i32_0 = arith.constant 0 : i32
    %c0_i32_1 = arith.constant 0 : i32
    return %c0_i32, %c0_i32_0 : i32, i32
  }
  func.func @transform_3(%arg0: i32) -> (i32, i32) {
    %c0_i32 = arith.constant 0 : i32
    %c0_i32_0 = arith.constant 0 : i32
    %c0_i32_1 = arith.constant 0 : i32
    return %c0_i32, %c0_i32_0 : i32, i32
  }
  func.func @transform_4(%arg0: i32) -> (i32, i32) {
    %c0_i32 = arith.constant 0 : i32
    %c0_i32_0 = arith.constant 0 : i32
    %c0_i32_1 = arith.constant 0 : i32
    return %c0_i32, %c0_i32_0 : i32, i32
  }
  func.func @transform_5(%arg0: i32) -> (i32, i32) {
    %c0_i32 = arith.constant 0 : i32
    %c0_i32_0 = arith.constant 0 : i32
    %c0_i32_1 = arith.constant 0 : i32
    return %c0_i32, %c0_i32_0 : i32, i32
  }
  func.func @transform_6(%arg0: i32) -> (i32, i32) {
    %c0_i32 = arith.constant 0 : i32
    %c0_i32_0 = arith.constant 0 : i32
    %c0_i32_1 = arith.constant 0 : i32
    return %c0_i32, %c0_i32_0 : i32, i32
  }
  func.func @transform_7(%arg0: i32) -> (i32, i32) {
    %c0_i32 = arith.constant 0 : i32
    %c0_i32_0 = arith.constant 0 : i32
    return %arg0, %c0_i32 : i32, i32
  }
}

</mosaic_0001>

<llo_original>
// kernel: tpu_custom_call.1
$region0: #{tpu_custom_call.1}
  #allocation0 [shape = 'u32[]', space=smem, size = 0x4, offset = 0x4, fixed_abs, tag = 'smem constant byte address 0x4 - core index']
  #allocation1 [shape = 'u32[144,128]{1,0:T(1,128)}', space=vmem, size = 0x12000, scoped, tag = 'internal scratch']
  %s0 = inlined_call_operand.vmem [shape: f32[8,32], index: 0, kind: input, shape index: {}]
  %s1 = inlined_call_operand.hbm [shape: f32[32,512], index: 1, kind: input, shape index: {}]
  %s2 = inlined_call_operand.vmem [shape: f32[32,32], index: 2, kind: input, shape index: {}]
  %s3 = inlined_call_operand.vmem [shape: f32[32,16], index: 3, kind: input, shape index: {}]
  %s4 = inlined_call_operand.hbm [shape: f32[16,512], index: 4, kind: input, shape index: {}]
  %s5 = inlined_call_operand.vmem [shape: f32[2,32], index: 5, kind: input, shape index: {}]
  %s6 = inlined_call_operand.vmem [shape: f32[2,512], index: 6, kind: input, shape index: {}]
  %s7 = inlined_call_operand.hbm [shape: f32[8,512], index: 7, kind: output, shape index: {}]
  %s8 = sld [smem:[#allocation0]]
  $region46: #{tpu_custom_call.1} parent=0
    _
  %s10 = ssub.s32 1, %s8
  %s11 = scalar_select 0, %s10, %s8
  $region1: #{tpu_custom_call.1} parent=0
    #allocation2 [shape = 'u8[65536]{0}', space=vmem, size = 0x10000, scoped, tag = 'input window, operand 1, single buffered']
    #allocation3 [shape = 's32[1]{0}', space=sflag, size = 0x4, scoped, tag = 'scoped memory for tpu_custom_call.1']
    #allocation4 [shape = 's32[1]{0}', space=sflag, size = 0x4, scoped, tag = 'scoped memory for tpu_custom_call.1']
    #allocation5 [shape = 'u8[32768]{0}', space=vmem, size = 0x8000, scoped, tag = 'input window, operand 4, single buffered']
    #allocation6 [shape = 's32[1]{0}', space=sflag, size = 0x4, scoped, tag = 'scoped memory for tpu_custom_call.1']
    #allocation7 [shape = 'u8[16384]{0}', space=vmem, size = 0x4000, scoped, tag = 'output window, operand 0, single buffered']
    %12 = vsyncpa [#allocation3], 0
    %13 = vsyncpa [#allocation6], 0
    %14 = vsyncpa [#allocation4], 0
    // Predicated region
    $region2: #{tpu_custom_call.1} parent=1 // pred_check
      _
    $region3: #{tpu_custom_call.1} parent=1 // pred_check_branch
      %16 = sbr.rel (0) target = $region5
    $region4: #{tpu_custom_call.1} parent=1 // pred_region
      _
    $region5: #{tpu_custom_call.1} parent=1 // pred_fallthru
      _
    // Predicated region
    $region6: #{tpu_custom_call.1} parent=1 // pred_check
      _
    $region7: #{tpu_custom_call.1} parent=1 // pred_check_branch
      %18 = sbr.rel (0) target = $region9
    $region8: #{tpu_custom_call.1} parent=1 // pred_region
      %s20 = ssub.s32 2048, 2048
      %21 = vsyncadd [#allocation3], %s20
      %s22 = sshll.u32 [#allocation2], 4
      %s23 = int_to_ptr.vmem [resolvable:$true] %s22
      %28 = dma.hbm_to_vmem [thread:$0]  %s1, 2048, %s23, [#allocation3], 512, 512, 32
    $region9: #{tpu_custom_call.1} parent=1 // pred_fallthru
      _
    // Predicated region
    $region10: #{tpu_custom_call.1} parent=1 // pred_check
      _
    $region11: #{tpu_custom_call.1} parent=1 // pred_check_branch
      %30 = sbr.rel (0) target = $region13
    $region12: #{tpu_custom_call.1} parent=1 // pred_region
      _
    $region13: #{tpu_custom_call.1} parent=1 // pred_fallthru
      _
    // Predicated region
    $region14: #{tpu_custom_call.1} parent=1 // pred_check
      _
    $region15: #{tpu_custom_call.1} parent=1 // pred_check_branch
      %32 = sbr.rel (0) target = $region17
    $region16: #{tpu_custom_call.1} parent=1 // pred_region
      _
    $region17: #{tpu_custom_call.1} parent=1 // pred_fallthru
      _
    // Predicated region
    $region18: #{tpu_custom_call.1} parent=1 // pred_check
      _
    $region19: #{tpu_custom_call.1} parent=1 // pred_check_branch
      %34 = sbr.rel (0) target = $region21
    $region20: #{tpu_custom_call.1} parent=1 // pred_region
      %s36 = ssub.s32 1024, 1024
      %37 = vsyncadd [#allocation6], %s36
      %s38 = sshll.u32 [#allocation5], 4
      %s39 = int_to_ptr.vmem [resolvable:$true] %s38
      %44 = dma.hbm_to_vmem [thread:$0]  %s4, 1024, %s39, [#allocation6], 512, 512, 32
    $region21: #{tpu_custom_call.1} parent=1 // pred_fallthru
      _
    // Predicated region
    $region22: #{tpu_custom_call.1} parent=1 // pred_check
      _
    $region23: #{tpu_custom_call.1} parent=1 // pred_check_branch
      %46 = sbr.rel (0) target = $region25
    $region24: #{tpu_custom_call.1} parent=1 // pred_region
      _
    $region25: #{tpu_custom_call.1} parent=1 // pred_fallthru
      _
    // Predicated region
    $region26: #{tpu_custom_call.1} parent=1 // pred_check
      _
    $region27: #{tpu_custom_call.1} parent=1 // pred_check_branch
      %48 = sbr.rel (0) target = $region29
    $region28: #{tpu_custom_call.1} parent=1 // pred_region
      _
    $region29: #{tpu_custom_call.1} parent=1 // pred_fallthru
      _
    // Predicated region
    $region30: #{tpu_custom_call.1} parent=1 // pred_check
      _
    $region31: #{tpu_custom_call.1} parent=1 // pred_check_branch
      %50 = sbr.rel (0) target = $region33
    $region32: #{tpu_custom_call.1} parent=1 // pred_region
      %51 = dma.done [#allocation3], 2048
    $region33: #{tpu_custom_call.1} parent=1 // pred_fallthru
      _
    // Predicated region
    $region34: #{tpu_custom_call.1} parent=1 // pred_check
      _
    $region35: #{tpu_custom_call.1} parent=1 // pred_check_branch
      %53 = sbr.rel (0) target = $region37
    $region36: #{tpu_custom_call.1} parent=1 // pred_region
      %54 = dma.done [#allocation6], 1024
    $region37: #{tpu_custom_call.1} parent=1 // pred_fallthru
      _
    %v55 = vld [vmem:[%s0] sm:$0xff]
    %v56 = vld [vmem:[#allocation2] sm:$0xff]
    %v57 = vld [vmem:[#allocation2 + $0x8] sm:$0xff]
    %v58 = vld [vmem:[#allocation2 + $0x10] sm:$0xff]
    %v59 = vld [vmem:[#allocation2 + $0x18] sm:$0xff]
    %v60 = vld [vmem:[#allocation2 + $0x20] sm:$0xff]
    %v61 = vld [vmem:[#allocation2 + $0x28] sm:$0xff]
    %v62 = vld [vmem:[#allocation2 + $0x30] sm:$0xff]
    %v63 = vld [vmem:[#allocation2 + $0x38] sm:$0xff]
    %v64 = vld [vmem:[#allocation2 + $0x40] sm:$0xff]
    %v65 = vld [vmem:[#allocation2 + $0x48] sm:$0xff]
    %v66 = vld [vmem:[#allocation2 + $0x50] sm:$0xff]
    %v67 = vld [vmem:[#allocation2 + $0x58] sm:$0xff]
    %v68 = vld [vmem:[#allocation2 + $0x60] sm:$0xff]
    %v69 = vld [vmem:[#allocation2 + $0x68] sm:$0xff]
    %v70 = vld [vmem:[#allocation2 + $0x70] sm:$0xff]
    %v71 = vld [vmem:[#allocation2 + $0x78] sm:$0xff]
    %v72 = vld [vmem:[%s6] ss:$2 sm:$0xf]
    %v74 = vlaneseq
    %v75 = vshrl.u32 %v74, 7
    %v76 = vsub.s32 0, %v75
    %v77 = vrot.slane %v72, %v76
    %v78 = vlaneseq
    %v79 = vshrl.u32 %v78, 7
    %v80 = vsub.s32 1, %v79
    %v81 = vrot.slane %v72, %v80
    %v82 = vlaneseq
    %v83 = vshrl.u32 %v82, 7
    %v84 = vsub.s32 2, %v83
    %v85 = vrot.slane %v72, %v84
    %v86 = vlaneseq
    %v87 = vshrl.u32 %v86, 7
    %v88 = vsub.s32 3, %v87
    %v89 = vrot.slane %v72, %v88
    %vm94 = vcmask 261120
    %v96 = vsel %vm94, %v55, 0
    %v98 = vand.u32 %v57, 4294901760
    %99 = vmatprep.subr.mxu0 %v98
    %v100 = vand.u32 %v56, 4294901760
    %101 = vmatpush1.msra.mxu0 %v100
    %v102 = vand.u32 %v61, 4294901760
    %103 = vmatprep.subr.mxu0 %v102
    %v104 = vand.u32 %v60, 4294901760
    %105 = vmatpush1.msra.mxu0 %v104
    %v106 = vand.u32 %v65, 4294901760
    %107 = vmatprep.subr.mxu0 %v106
    %v108 = vand.u32 %v64, 4294901760
    %109 = vmatpush1.msra.mxu0 %v108
    %v110 = vand.u32 %v69, 4294901760
    %111 = vmatprep.subr.mxu0 %v110
    %v112 = vand.u32 %v68, 4294901760
    %113 = vmatpush1.msra.mxu0 %v112
    %114 = vmatprep.subr.mxu0 0.0
    %115 = vmatpush1.msra.mxu0 0.0
    %116 = vmatprep.subr.mxu0 0.0
    %117 = vmatpush1.msra.mxu0 0.0
    %118 = vmatprep.subr.mxu0 0.0
    %119 = vmatpush1.msra.mxu0 0.0
    %120 = vmatprep.subr.mxu0 0.0
    %121 = vmatpush1.msra.mxu0 0.0
    %122 = vmatprep.subr.mxu0 0.0
    %123 = vmatpush1.msra.mxu0 0.0
    %124 = vmatprep.subr.mxu0 0.0
    %125 = vmatpush1.msra.mxu0 0.0
    %126 = vmatprep.subr.mxu0 0.0
    %127 = vmatpush1.msra.mxu0 0.0
    %128 = vmatprep.subr.mxu0 0.0
    %129 = vmatpush1.msra.mxu0 0.0
    %130 = vmatprep.subr.mxu0 0.0
    %131 = vmatpush1.msra.mxu0 0.0
    %132 = vmatprep.subr.mxu0 0.0
    %133 = vmatpush1.msra.mxu0 0.0
    %134 = vmatprep.subr.mxu0 0.0
    %135 = vmatpush1.msra.mxu0 0.0
    %136 = vmatprep.subr.mxu0 0.0
    %137 = vmatpush1.msra.mxu0 0.0
    %138 = vmatprep.subr.mxu0 0.0
    %139 = vmatpush1.msra.mxu0 0.0
    %140 = vmatprep.subr.mxu0 0.0
    %141 = vmatpush1.msra.mxu0 0.0
    %142 = vmatprep.subr.mxu0 0.0
    %143 = vmatpush1.msra.mxu0 0.0
    %144 = vmatprep.subr.mxu0 0.0
    %145 = vmatpush1.msra.mxu0 0.0
    %146 = vmatprep.subr.mxu0 0.0
    %147 = vmatpush1.msra.mxu0 0.0
    %148 = vmatprep.subr.mxu0 0.0
    %149 = vmatpush1.msra.mxu0 0.0
    %150 = vmatprep.subr.mxu0 0.0
    %151 = vmatpush1.msra.mxu0 0.0
    %152 = vmatprep.subr.mxu0 0.0
    %153 = vmatpush1.msra.mxu0 0.0
    %154 = vmatprep.subr.mxu0 0.0
    %155 = vmatpush1.msra.mxu0 0.0
    %156 = vmatprep.subr.mxu0 0.0
    %157 = vmatpush1.msra.mxu0 0.0
    %158 = vmatprep.subr.mxu0 0.0
    %159 = vmatpush1.msra.mxu0 0.0
    %160 = vmatprep.subr.mxu0 0.0
    %161 = vmatpush1.msra.mxu0 0.0
    %162 = vmatprep.subr.mxu0 0.0
    %163 = vmatpush1.msra.mxu0 0.0
    %164 = vmatprep.subr.mxu0 0.0
    %165 = vmatpush1.msra.mxu0 0.0
    %166 = vmatprep.subr.mxu0 0.0
    %167 = vmatpush1.msra.mxu0 0.0
    %168 = vmatprep.subr.mxu0 0.0
    %169 = vmatpush1.msra.mxu0 0.0
    %170 = vmatprep.mubr.f32.mxu0 0.0
    %v171 = vand.u32 %v96, 4294901760
    %v172 = vsub.f32 %v96, %v171
    %v173 = vand.u32 %v172, 4294901760
    %v174 = vsub.f32 %v172, %v173
    %v175 = vand.u32 %v174, 4294901760
    %176 = vmatmul.mubr.f32.gmra.mrb[0].mxu0 %v175
    %v177 = vpop.f32.mrb[0].mxu0
    %v178 = vadd.f32 %v77, %v177
    %v179 = vpop.f32.mrb[0].mxu0
    %v180 = vadd.f32 %v81, %v179
    %181 = vdwg.mxu0
    %v182 = vand.u32 %v57, 4294901760
    %v183 = vsub.f32 %v57, %v182
    %v184 = vand.u32 %v183, 4294901760
    %v185 = vsub.f32 %v183, %v184
    %v186 = vand.u32 %v185, 4294901760
    %187 = vmatprep.subr.mxu0 %v186
    %v188 = vand.u32 %v56, 4294901760
    %v189 = vsub.f32 %v56, %v188
    %v190 = vand.u32 %v189, 4294901760
    %v191 = vsub.f32 %v189, %v190
    %v192 = vand.u32 %v191, 4294901760
    %193 = vmatpush1.msra.mxu0 %v192
    %v194 = vand.u32 %v61, 4294901760
    %v195 = vsub.f32 %v61, %v194
    %v196 = vand.u32 %v195, 4294901760
    %v197 = vsub.f32 %v195, %v196
    %v198 = vand.u32 %v197, 4294901760
    %199 = vmatprep.subr.mxu0 %v198
    %v200 = vand.u32 %v60, 4294901760
    %v201 = vsub.f32 %v60, %v200
    %v202 = vand.u32 %v201, 4294901760
    %v203 = vsub.f32 %v201, %v202
    %v204 = vand.u32 %v203, 4294901760
    %205 = vmatpush1.msra.mxu0 %v204
    %v206 = vand.u32 %v65, 4294901760
    %v207 = vsub.f32 %v65, %v206
    %v208 = vand.u32 %v207, 4294901760
    %v209 = vsub.f32 %v207, %v208
    %v210 = vand.u32 %v209, 4294901760
    %211 = vmatprep.subr.mxu0 %v210
    %v212 = vand.u32 %v64, 4294901760
    %v213 = vsub.f32 %v64, %v212
    %v214 = vand.u32 %v213, 4294901760
    %v215 = vsub.f32 %v213, %v214
    %v216 = vand.u32 %v215, 4294901760
    %217 = vmatpush1.msra.mxu0 %v216
    %v218 = vand.u32 %v69, 4294901760
    %v219 = vsub.f32 %v69, %v218
    %v220 = vand.u32 %v219, 4294901760
    %v221 = vsub.f32 %v219, %v220
    %v222 = vand.u32 %v221, 4294901760
    %223 = vmatprep.subr.mxu0 %v222
    %v224 = vand.u32 %v68, 4294901760
    %v225 = vsub.f32 %v68, %v224
    %v226 = vand.u32 %v225, 4294901760
    %v227 = vsub.f32 %v225, %v226
    %v228 = vand.u32 %v227, 4294901760
    %229 = vmatpush1.msra.mxu0 %v228
    %230 = vmatprep.subr.mxu0 0.0
    %231 = vmatpush1.msra.mxu0 0.0
    %232 = vmatprep.subr.mxu0 0.0
    %233 = vmatpush1.msra.mxu0 0.0
    %234 = vmatprep.subr.mxu0 0.0
    %235 = vmatpush1.msra.mxu0 0.0
    %236 = vmatprep.subr.mxu0 0.0
    %237 = vmatpush1.msra.mxu0 0.0
    %238 = vmatprep.subr.mxu0 0.0
    %239 = vmatpush1.msra.mxu0 0.0
    %240 = vmatprep.subr.mxu0 0.0
    %241 = vmatpush1.msra.mxu0 0.0
    %242 = vmatprep.subr.mxu0 0.0
    %243 = vmatpush1.msra.mxu0 0.0
    %244 = vmatprep.subr.mxu0 0.0
    %245 = vmatpush1.msra.mxu0 0.0
    %246 = vmatprep.subr.mxu0 0.0
    %247 = vmatpush1.msra.mxu0 0.0
    %248 = vmatprep.subr.mxu0 0.0
    %249 = vmatpush1.msra.mxu0 0.0
    %250 = vmatprep.subr.mxu0 0.0
    %251 = vmatpush1.msra.mxu0 0.0
    %252 = vmatprep.subr.mxu0 0.0
    %253 = vmatpush1.msra.mxu0 0.0
    %254 = vmatprep.subr.mxu0 0.0
    %255 = vmatpush1.msra.mxu0 0.0
    %256 = vmatprep.subr.mxu0 0.0
    %257 = vmatpush1.msra.mxu0 0.0
    %258 = vmatprep.subr.mxu0 0.0
    %259 = vmatpush1.msra.mxu0 0.0
    %260 = vmatprep.subr.mxu0 0.0
    %261 = vmatpush1.msra.mxu0 0.0
    %262 = vmatprep.subr.mxu0 0.0
    %263 = vmatpush1.msra.mxu0 0.0
    %264 = vmatprep.subr.mxu0 0.0
    %265 = vmatpush1.msra.mxu0 0.0
    %266 = vmatprep.subr.mxu0 0.0
    %267 = vmatpush1.msra.mxu0 0.0
    %268 = vmatprep.subr.mxu0 0.0
    %269 = vmatpush1.msra.mxu0 0.0
    %270 = vmatprep.subr.mxu0 0.0
    %271 = vmatpush1.msra.mxu0 0.0
    %272 = vmatprep.subr.mxu0 0.0
    %273 = vmatpush1.msra.mxu0 0.0
    %274 = vmatprep.subr.mxu0 0.0
    %275 = vmatpush1.msra.mxu0 0.0
    %276 = vmatprep.subr.mxu0 0.0
    %277 = vmatpush1.msra.mxu0 0.0
    %278 = vmatprep.subr.mxu0 0.0
    %279 = vmatpush1.msra.mxu0 0.0
    %280 = vmatprep.subr.mxu0 0.0
    %281 = vmatpush1.msra.mxu0 0.0
    %282 = vmatprep.subr.mxu0 0.0
    %283 = vmatpush1.msra.mxu0 0.0
    %284 = vmatprep.subr.mxu0 0.0
    %285 = vmatpush1.msra.mxu0 0.0
    %286 = vmatprep.mubr.f32.mxu0 0.0
    %v287 = vand.u32 %v96, 4294901760
    %288 = vmatmul.mubr.f32.gmra.mrb[0].mxu0 %v287
    %v289 = vpop.f32.mrb[0].mxu0
    %v290 = vadd.f32 %v178, %v289
    %v291 = vpop.f32.mrb[0].mxu0
    %v292 = vadd.f32 %v180, %v291
    %293 = vdwg.mxu0
    %v294 = vand.u32 %v57, 4294901760
    %v295 = vsub.f32 %v57, %v294
    %296 = vmatprep.subr.mxu0 %v295
    %v297 = vand.u32 %v56, 4294901760
    %v298 = vsub.f32 %v56, %v297
    %299 = vmatpush1.msra.mxu0 %v298
    %v300 = vand.u32 %v61, 4294901760
    %v301 = vsub.f32 %v61, %v300
    %302 = vmatprep.subr.mxu0 %v301
    %v303 = vand.u32 %v60, 4294901760
    %v304 = vsub.f32 %v60, %v303
    %305 = vmatpush1.msra.mxu0 %v304
    %v306 = vand.u32 %v65, 4294901760
    %v307 = vsub.f32 %v65, %v306
    %308 = vmatprep.subr.mxu0 %v307
    %v309 = vand.u32 %v64, 4294901760
    %v310 = vsub.f32 %v64, %v309
    %311 = vmatpush1.msra.mxu0 %v310
    %v312 = vand.u32 %v69, 4294901760
    %v313 = vsub.f32 %v69, %v312
    %314 = vmatprep.subr.mxu0 %v313
    %v315 = vand.u32 %v68, 4294901760
    %v316 = vsub.f32 %v68, %v315
    %317 = vmatpush1.msra.mxu0 %v316
    %318 = vmatprep.subr.mxu0 0.0
    %319 = vmatpush1.msra.mxu0 0.0
    %320 = vmatprep.subr.mxu0 0.0
    %321 = vmatpush1.msra.mxu0 0.0
    %322 = vmatprep.subr.mxu0 0.0
    %323 = vmatpush1.msra.mxu0 0.0
    %324 = vmatprep.subr.mxu0 0.0
    %325 = vmatpush1.msra.mxu0 0.0
    %326 = vmatprep.subr.mxu0 0.0
    %327 = vmatpush1.msra.mxu0 0.0
    %328 = vmatprep.subr.mxu0 0.0
    %329 = vmatpush1.msra.mxu0 0.0
    %330 = vmatprep.subr.mxu0 0.0
    %331 = vmatpush1.msra.mxu0 0.0
    %332 = vmatprep.subr.mxu0 0.0
    %333 = vmatpush1.msra.mxu0 0.0
    %334 = vmatprep.subr.mxu0 0.0
    %335 = vmatpush1.msra.mxu0 0.0
    %336 = vmatprep.subr.mxu0 0.0
    %337 = vmatpush1.msra.mxu0 0.0
    %338 = vmatprep.subr.mxu0 0.0
    %339 = vmatpush1.msra.mxu0 0.0
    %340 = vmatprep.subr.mxu0 0.0
    %341 = vmatpush1.msra.mxu0 0.0
    %342 = vmatprep.subr.mxu0 0.0
    %343 = vmatpush1.msra.mxu0 0.0
    %344 = vmatprep.subr.mxu0 0.0
    %345 = vmatpush1.msra.mxu0 0.0
    %346 = vmatprep.subr.mxu0 0.0
    %347 = vmatpush1.msra.mxu0 0.0
    %348 = vmatprep.subr.mxu0 0.0
    %349 = vmatpush1.msra.mxu0 0.0
    %350 = vmatprep.subr.mxu0 0.0
    %351 = vmatpush1.msra.mxu0 0.0
    %352 = vmatprep.subr.mxu0 0.0
    %353 = vmatpush1.msra.mxu0 0.0
    %354 = vmatprep.subr.mxu0 0.0
    %355 = vmatpush1.msra.mxu0 0.0
    %356 = vmatprep.subr.mxu0 0.0
    %357 = vmatpush1.msra.mxu0 0.0
    %358 = vmatprep.subr.mxu0 0.0
    %359 = vmatpush1.msra.mxu0 0.0
    %360 = vmatprep.subr.mxu0 0.0
    %361 = vmatpush1.msra.mxu0 0.0
    %362 = vmatprep.subr.mxu0 0.0
    %363 = vmatpush1.msra.mxu0 0.0
    %364 = vmatprep.subr.mxu0 0.0
    %365 = vmatpush1.msra.mxu0 0.0
    %366 = vmatprep.subr.mxu0 0.0
    %367 = vmatpush1.msra.mxu0 0.0
    %368 = vmatprep.subr.mxu0 0.0
    %369 = vmatpush1.msra.mxu0 0.0
    %370 = vmatprep.subr.mxu0 0.0
    %371 = vmatpush1.msra.mxu0 0.0
    %372 = vmatprep.subr.mxu0 0.0
    %373 = vmatpush1.msra.mxu0 0.0
    %374 = vmatprep.mubr.f32.mxu0 0.0
    %v375 = vand.u32 %v96, 4294901760
    %v376 = vsub.f32 %v96, %v375
    %377 = vmatmul.mubr.f32.gmra.mrb[0].mxu0 %v376
    %v378 = vpop.f32.mrb[0].mxu0
    %v379 = vadd.f32 %v290, %v378
    %v380 = vpop.f32.mrb[0].mxu0
    %v381 = vadd.f32 %v292, %v380
    %382 = vdwg.mxu0
    %v383 = vand.u32 %v57, 4294901760
    %384 = vmatprep.subr.mxu0 %v383
    %v385 = vand.u32 %v56, 4294901760
    %386 = vmatpush1.msra.mxu0 %v385
    %v387 = vand.u32 %v61, 4294901760
    %388 = vmatprep.subr.mxu0 %v387
    %v389 = vand.u32 %v60, 4294901760
    %390 = vmatpush1.msra.mxu0 %v389
    %v391 = vand.u32 %v65, 4294901760
    %392 = vmatprep.subr.mxu0 %v391
    %v393 = vand.u32 %v64, 4294901760
    %394 = vmatpush1.msra.mxu0 %v393
    %v395 = vand.u32 %v69, 4294901760
    %396 = vmatprep.subr.mxu0 %v395
    %v397 = vand.u32 %v68, 4294901760
    %398 = vmatpush1.msra.mxu0 %v397
    %399 = vmatprep.subr.mxu0 0.0
    %400 = vmatpush1.msra.mxu0 0.0
    %401 = vmatprep.subr.mxu0 0.0
    %402 = vmatpush1.msra.mxu0 0.0
    %403 = vmatprep.subr.mxu0 0.0
    %404 = vmatpush1.msra.mxu0 0.0
    %405 = vmatprep.subr.mxu0 0.0
    %406 = vmatpush1.msra.mxu0 0.0
    %407 = vmatprep.subr.mxu0 0.0
    %408 = vmatpush1.msra.mxu0 0.0
    %409 = vmatprep.subr.mxu0 0.0
    %410 = vmatpush1.msra.mxu0 0.0
    %411 = vmatprep.subr.mxu0 0.0
    %412 = vmatpush1.msra.mxu0 0.0
    %413 = vmatprep.subr.mxu0 0.0
    %414 = vmatpush1.msra.mxu0 0.0
    %415 = vmatprep.subr.mxu0 0.0
    %416 = vmatpush1.msra.mxu0 0.0
    %417 = vmatprep.subr.mxu0 0.0
    %418 = vmatpush1.msra.mxu0 0.0
    %419 = vmatprep.subr.mxu0 0.0
    %420 = vmatpush1.msra.mxu0 0.0
    %421 = vmatprep.subr.mxu0 0.0
    %422 = vmatpush1.msra.mxu0 0.0
    %423 = vmatprep.subr.mxu0 0.0
    %424 = vmatpush1.msra.mxu0 0.0
    %425 = vmatprep.subr.mxu0 0.0
    %426 = vmatpush1.msra.mxu0 0.0
    %427 = vmatprep.subr.mxu0 0.0
    %428 = vmatpush1.msra.mxu0 0.0
    %429 = vmatprep.subr.mxu0 0.0
    %430 = vmatpush1.msra.mxu0 0.0
    %431 = vmatprep.subr.mxu0 0.0
    %432 = vmatpush1.msra.mxu0 0.0
    %433 = vmatprep.subr.mxu0 0.0
    %434 = vmatpush1.msra.mxu0 0.0
    %435 = vmatprep.subr.mxu0 0.0
    %436 = vmatpush1.msra.mxu0 0.0
    %437 = vmatprep.subr.mxu0 0.0
    %438 = vmatpush1.msra.mxu0 0.0
    %439 = vmatprep.subr.mxu0 0.0
    %440 = vmatpush1.msra.mxu0 0.0
    %441 = vmatprep.subr.mxu0 0.0
    %442 = vmatpush1.msra.mxu0 0.0
    %443 = vmatprep.subr.mxu0 0.0
    %444 = vmatpush1.msra.mxu0 0.0
    %445 = vmatprep.subr.mxu0 0.0
    %446 = vmatpush1.msra.mxu0 0.0
    %447 = vmatprep.subr.mxu0 0.0
    %448 = vmatpush1.msra.mxu0 0.0
    %449 = vmatprep.subr.mxu0 0.0
    %450 = vmatpush1.msra.mxu0 0.0
    %451 = vmatprep.subr.mxu0 0.0
    %452 = vmatpush1.msra.mxu0 0.0
    %453 = vmatprep.subr.mxu0 0.0
    %454 = vmatpush1.msra.mxu0 0.0
    %455 = vmatprep.mubr.f32.mxu0 0.0
    %v456 = vand.u32 %v96, 4294901760
    %v457 = vsub.f32 %v96, %v456
    %v458 = vand.u32 %v457, 4294901760
    %459 = vmatmul.mubr.f32.gmra.mrb[0].mxu0 %v458
    %v460 = vpop.f32.mrb[0].mxu0
    %v461 = vadd.f32 %v379, %v460
    %v462 = vpop.f32.mrb[0].mxu0
    %v463 = vadd.f32 %v381, %v462
    %464 = vdwg.mxu0
    %v465 = vand.u32 %v57, 4294901760
    %v466 = vsub.f32 %v57, %v465
    %v467 = vand.u32 %v466, 4294901760
    %468 = vmatprep.subr.mxu0 %v467
    %v469 = vand.u32 %v56, 4294901760
    %v470 = vsub.f32 %v56, %v469
    %v471 = vand.u32 %v470, 4294901760
    %472 = vmatpush1.msra.mxu0 %v471
    %v473 = vand.u32 %v61, 4294901760
    %v474 = vsub.f32 %v61, %v473
    %v475 = vand.u32 %v474, 4294901760
    %476 = vmatprep.subr.mxu0 %v475
    %v477 = vand.u32 %v60, 4294901760
    %v478 = vsub.f32 %v60, %v477
    %v479 = vand.u32 %v478, 4294901760
    %480 = vmatpush1.msra.mxu0 %v479
    %v481 = vand.u32 %v65, 4294901760
    %v482 = vsub.f32 %v65, %v481
    %v483 = vand.u32 %v482, 4294901760
    %484 = vmatprep.subr.mxu0 %v483
    %v485 = vand.u32 %v64, 4294901760
    %v486 = vsub.f32 %v64, %v485
    %v487 = vand.u32 %v486, 4294901760
    %488 = vmatpush1.msra.mxu0 %v487
    %v489 = vand.u32 %v69, 4294901760
    %v490 = vsub.f32 %v69, %v489
    %v491 = vand.u32 %v490, 4294901760
    %492 = vmatprep.subr.mxu0 %v491
    %v493 = vand.u32 %v68, 4294901760
    %v494 = vsub.f32 %v68, %v493
    %v495 = vand.u32 %v494, 4294901760
    %496 = vmatpush1.msra.mxu0 %v495
    %497 = vmatprep.subr.mxu0 0.0
    %498 = vmatpush1.msra.mxu0 0.0
    %499 = vmatprep.subr.mxu0 0.0
    %500 = vmatpush1.msra.mxu0 0.0
    %501 = vmatprep.subr.mxu0 0.0
    %502 = vmatpush1.msra.mxu0 0.0
    %503 = vmatprep.subr.mxu0 0.0
    %504 = vmatpush1.msra.mxu0 0.0
    %505 = vmatprep.subr.mxu0 0.0
    %506 = vmatpush1.msra.mxu0 0.0
    %507 = vmatprep.subr.mxu0 0.0
    %508 = vmatpush1.msra.mxu0 0.0
    %509 = vmatprep.subr.mxu0 0.0
    %510 = vmatpush1.msra.mxu0 0.0
    %511 = vmatprep.subr.mxu0 0.0
    %512 = vmatpush1.msra.mxu0 0.0
    %513 = vmatprep.subr.mxu0 0.0
    %514 = vmatpush1.msra.mxu0 0.0
    %515 = vmatprep.subr.mxu0 0.0
    %516 = vmatpush1.msra.mxu0 0.0
    %517 = vmatprep.subr.mxu0 0.0
    %518 = vmatpush1.msra.mxu0 0.0
    %519 = vmatprep.subr.mxu0 0.0
    %520 = vmatpush1.msra.mxu0 0.0
    %521 = vmatprep.subr.mxu0 0.0
    %522 = vmatpush1.msra.mxu0 0.0
    %523 = vmatprep.subr.mxu0 0.0
    %524 = vmatpush1.msra.mxu0 0.0
    %525 = vmatprep.subr.mxu0 0.0
    %526 = vmatpush1.msra.mxu0 0.0
    %527 = vmatprep.subr.mxu0 0.0
    %528 = vmatpush1.msra.mxu0 0.0
    %529 = vmatprep.subr.mxu0 0.0
    %530 = vmatpush1.msra.mxu0 0.0
    %531 = vmatprep.subr.mxu0 0.0
    %532 = vmatpush1.msra.mxu0 0.0
    %533 = vmatprep.subr.mxu0 0.0
    %534 = vmatpush1.msra.mxu0 0.0
    %535 = vmatprep.subr.mxu0 0.0
    %536 = vmatpush1.msra.mxu0 0.0
    %537 = vmatprep.subr.mxu0 0.0
    %538 = vmatpush1.msra.mxu0 0.0
    %539 = vmatprep.subr.mxu0 0.0
    %540 = vmatpush1.msra.mxu0 0.0
    %541 = vmatprep.subr.mxu0 0.0
    %542 = vmatpush1.msra.mxu0 0.0
    %543 = vmatprep.subr.mxu0 0.0
    %544 = vmatpush1.msra.mxu0 0.0
    %545 = vmatprep.subr.mxu0 0.0
    %546 = vmatpush1.msra.mxu0 0.0
    %547 = vmatprep.subr.mxu0 0.0
    %548 = vmatpush1.msra.mxu0 0.0
    %549 = vmatprep.subr.mxu0 0.0
    %550 = vmatpush1.msra.mxu0 0.0
    %551 = vmatprep.subr.mxu0 0.0
    %552 = vmatpush1.msra.mxu0 0.0
    %553 = vmatprep.mubr.f32.mxu0 0.0
    %v554 = vand.u32 %v96, 4294901760
    %555 = vmatmul.mubr.f32.gmra.mrb[0].mxu0 %v554
    %v556 = vpop.f32.mrb[0].mxu0
    %v557 = vadd.f32 %v461, %v556
    %v558 = vpop.f32.mrb[0].mxu0
    %v559 = vadd.f32 %v463, %v558
    %560 = vdwg.mxu0
    %v561 = vand.u32 %v57, 4294901760
    %562 = vmatprep.subr.mxu0 %v561
    %v563 = vand.u32 %v56, 4294901760
    %564 = vmatpush1.msra.mxu0 %v563
    %v565 = vand.u32 %v61, 4294901760
    %566 = vmatprep.subr.mxu0 %v565
    %v567 = vand.u32 %v60, 4294901760
    %568 = vmatpush1.msra.mxu0 %v567
    %v569 = vand.u32 %v65, 4294901760
    %570 = vmatprep.subr.mxu0 %v569
    %v571 = vand.u32 %v64, 4294901760
    %572 = vmatpush1.msra.mxu0 %v571
    %v573 = vand.u32 %v69, 4294901760
    %574 = vmatprep.subr.mxu0 %v573
    %v575 = vand.u32 %v68, 4294901760
    %576 = vmatpush1.msra.mxu0 %v575
    %577 = vmatprep.subr.mxu0 0.0
    %578 = vmatpush1.msra.mxu0 0.0
    %579 = vmatprep.subr.mxu0 0.0
    %580 = vmatpush1.msra.mxu0 0.0
    %581 = vmatprep.subr.mxu0 0.0
    %582 = vmatpush1.msra.mxu0 0.0
    %583 = vmatprep.subr.mxu0 0.0
    %584 = vmatpush1.msra.mxu0 0.0
    %585 = vmatprep.subr.mxu0 0.0
    %586 = vmatpush1.msra.mxu0 0.0
    %587 = vmatprep.subr.mxu0 0.0
    %588 = vmatpush1.msra.mxu0 0.0
    %589 = vmatprep.subr.mxu0 0.0
    %590 = vmatpush1.msra.mxu0 0.0
    %591 = vmatprep.subr.mxu0 0.0
    %592 = vmatpush1.msra.mxu0 0.0
    %593 = vmatprep.subr.mxu0 0.0
    %594 = vmatpush1.msra.mxu0 0.0
    %595 = vmatprep.subr.mxu0 0.0
    %596 = vmatpush1.msra.mxu0 0.0
    %597 = vmatprep.subr.mxu0 0.0
    %598 = vmatpush1.msra.mxu0 0.0
    %599 = vmatprep.subr.mxu0 0.0
    %600 = vmatpush1.msra.mxu0 0.0
    %601 = vmatprep.subr.mxu0 0.0
    %602 = vmatpush1.msra.mxu0 0.0
    %603 = vmatprep.subr.mxu0 0.0
    %604 = vmatpush1.msra.mxu0 0.0
    %605 = vmatprep.subr.mxu0 0.0
    %606 = vmatpush1.msra.mxu0 0.0
    %607 = vmatprep.subr.mxu0 0.0
    %608 = vmatpush1.msra.mxu0 0.0
    %609 = vmatprep.subr.mxu0 0.0
    %610 = vmatpush1.msra.mxu0 0.0
    %611 = vmatprep.subr.mxu0 0.0
    %612 = vmatpush1.msra.mxu0 0.0
    %613 = vmatprep.subr.mxu0 0.0
    %614 = vmatpush1.msra.mxu0 0.0
    %615 = vmatprep.subr.mxu0 0.0
    %616 = vmatpush1.msra.mxu0 0.0
    %617 = vmatprep.subr.mxu0 0.0
    %618 = vmatpush1.msra.mxu0 0.0
    %619 = vmatprep.subr.mxu0 0.0
    %620 = vmatpush1.msra.mxu0 0.0
    %621 = vmatprep.subr.mxu0 0.0
    %622 = vmatpush1.msra.mxu0 0.0
    %623 = vmatprep.subr.mxu0 0.0
    %624 = vmatpush1.msra.mxu0 0.0
    %625 = vmatprep.subr.mxu0 0.0
    %626 = vmatpush1.msra.mxu0 0.0
    %627 = vmatprep.subr.mxu0 0.0
    %628 = vmatpush1.msra.mxu0 0.0
    %629 = vmatprep.subr.mxu0 0.0
    %630 = vmatpush1.msra.mxu0 0.0
    %631 = vmatprep.subr.mxu0 0.0
    %632 = vmatpush1.msra.mxu0 0.0
    %633 = vmatprep.mubr.f32.mxu0 0.0
    %v634 = vand.u32 %v96, 4294901760
    %635 = vmatmul.mubr.f32.gmra.mrb[0].mxu0 %v634
    %v636 = vpop.f32.mrb[0].mxu0
    %v637 = vadd.f32 %v557, %v636
    %v638 = vpop.f32.mrb[0].mxu0
    %v639 = vadd.f32 %v559, %v638
    %640 = vdwg.mxu0
    %v641 = vand.u32 %v59, 4294901760
    %642 = vmatprep.subr.mxu0 %v641
    %v643 = vand.u32 %v58, 4294901760
    %644 = vmatpush1.msra.mxu0 %v643
    %v645 = vand.u32 %v63, 4294901760
    %646 = vmatprep.subr.mxu0 %v645
    %v647 = vand.u32 %v62, 4294901760
    %648 = vmatpush1.msra.mxu0 %v647
    %v649 = vand.u32 %v67, 4294901760
    %650 = vmatprep.subr.mxu0 %v649
    %v651 = vand.u32 %v66, 4294901760
    %652 = vmatpush1.msra.mxu0 %v651
    %v653 = vand.u32 %v71, 4294901760
    %654 = vmatprep.subr.mxu0 %v653
    %v655 = vand.u32 %v70, 4294901760
    %656 = vmatpush1.msra.mxu0 %v655
    %657 = vmatprep.subr.mxu0 0.0
    %658 = vmatpush1.msra.mxu0 0.0
    %659 = vmatprep.subr.mxu0 0.0
    %660 = vmatpush1.msra.mxu0 0.0
    %661 = vmatprep.subr.mxu0 0.0
    %662 = vmatpush1.msra.mxu0 0.0
    %663 = vmatprep.subr.mxu0 0.0
    %664 = vmatpush1.msra.mxu0 0.0
    %665 = vmatprep.subr.mxu0 0.0
    %666 = vmatpush1.msra.mxu0 0.0
    %667 = vmatprep.subr.mxu0 0.0
    %668 = vmatpush1.msra.mxu0 0.0
    %669 = vmatprep.subr.mxu0 0.0
    %670 = vmatpush1.msra.mxu0 0.0
    %671 = vmatprep.subr.mxu0 0.0
    %672 = vmatpush1.msra.mxu0 0.0
    %673 = vmatprep.subr.mxu0 0.0
    %674 = vmatpush1.msra.mxu0 0.0
    %675 = vmatprep.subr.mxu0 0.0
    %676 = vmatpush1.msra.mxu0 0.0
    %677 = vmatprep.subr.mxu0 0.0
    %678 = vmatpush1.msra.mxu0 0.0
    %679 = vmatprep.subr.mxu0 0.0
    %680 = vmatpush1.msra.mxu0 0.0
    %681 = vmatprep.subr.mxu0 0.0
    %682 = vmatpush1.msra.mxu0 0.0
    %683 = vmatprep.subr.mxu0 0.0
    %684 = vmatpush1.msra.mxu0 0.0
    %685 = vmatprep.subr.mxu0 0.0
    %686 = vmatpush1.msra.mxu0 0.0
    %687 = vmatprep.subr.mxu0 0.0
    %688 = vmatpush1.msra.mxu0 0.0
    %689 = vmatprep.subr.mxu0 0.0
    %690 = vmatpush1.msra.mxu0 0.0
    %691 = vmatprep.subr.mxu0 0.0
    %692 = vmatpush1.msra.mxu0 0.0
    %693 = vmatprep.subr.mxu0 0.0
    %694 = vmatpush1.msra.mxu0 0.0
    %695 = vmatprep.subr.mxu0 0.0
    %696 = vmatpush1.msra.mxu0 0.0
    %697 = vmatprep.subr.mxu0 0.0
    %698 = vmatpush1.msra.mxu0 0.0
    %699 = vmatprep.subr.mxu0 0.0
    %700 = vmatpush1.msra.mxu0 0.0
    %701 = vmatprep.subr.mxu0 0.0
    %702 = vmatpush1.msra.mxu0 0.0
    %703 = vmatprep.subr.mxu0 0.0
    %704 = vmatpush1.msra.mxu0 0.0
    %705 = vmatprep.subr.mxu0 0.0
    %706 = vmatpush1.msra.mxu0 0.0
    %707 = vmatprep.subr.mxu0 0.0
    %708 = vmatpush1.msra.mxu0 0.0
    %709 = vmatprep.subr.mxu0 0.0
    %710 = vmatpush1.msra.mxu0 0.0
    %711 = vmatprep.subr.mxu0 0.0
    %712 = vmatpush1.msra.mxu0 0.0
    %713 = vmatprep.mubr.f32.mxu0 0.0
    %v714 = vand.u32 %v96, 4294901760
    %v715 = vsub.f32 %v96, %v714
    %v716 = vand.u32 %v715, 4294901760
    %v717 = vsub.f32 %v715, %v716
    %v718 = vand.u32 %v717, 4294901760
    %719 = vmatmul.mubr.f32.gmra.mrb[0].mxu0 %v718
    %v720 = vpop.f32.mrb[0].mxu0
    %v721 = vadd.f32 %v85, %v720
    %v722 = vpop.f32.mrb[0].mxu0
    %v723 = vadd.f32 %v89, %v722
    %724 = vdwg.mxu0
    %v725 = vand.u32 %v59, 4294901760
    %v726 = vsub.f32 %v59, %v725
    %v727 = vand.u32 %v726, 4294901760
    %v728 = vsub.f32 %v726, %v727
    %v729 = vand.u32 %v728, 4294901760
    %730 = vmatprep.subr.mxu0 %v729
    %v731 = vand.u32 %v58, 4294901760
    %v732 = vsub.f32 %v58, %v731
    %v733 = vand.u32 %v732, 4294901760
    %v734 = vsub.f32 %v732, %v733
    %v735 = vand.u32 %v734, 4294901760
    %736 = vmatpush1.msra.mxu0 %v735
    %v737 = vand.u32 %v63, 4294901760
    %v738 = vsub.f32 %v63, %v737
    %v739 = vand.u32 %v738, 4294901760
    %v740 = vsub.f32 %v738, %v739
    %v741 = vand.u32 %v740, 4294901760
    %742 = vmatprep.subr.mxu0 %v741
    %v743 = vand.u32 %v62, 4294901760
    %v744 = vsub.f32 %v62, %v743
    %v745 = vand.u32 %v744, 4294901760
    %v746 = vsub.f32 %v744, %v745
    %v747 = vand.u32 %v746, 4294901760
    %748 = vmatpush1.msra.mxu0 %v747
    %v749 = vand.u32 %v67, 4294901760
    %v750 = vsub.f32 %v67, %v749
    %v751 = vand.u32 %v750, 4294901760
    %v752 = vsub.f32 %v750, %v751
    %v753 = vand.u32 %v752, 4294901760
    %754 = vmatprep.subr.mxu0 %v753
    %v755 = vand.u32 %v66, 4294901760
    %v756 = vsub.f32 %v66, %v755
    %v757 = vand.u32 %v756, 4294901760
    %v758 = vsub.f32 %v756, %v757
    %v759 = vand.u32 %v758, 4294901760
    %760 = vmatpush1.msra.mxu0 %v759
    %v761 = vand.u32 %v71, 4294901760
    %v762 = vsub.f32 %v71, %v761
    %v763 = vand.u32 %v762, 4294901760
    %v764 = vsub.f32 %v762, %v763
    %v765 = vand.u32 %v764, 4294901760
    %766 = vmatprep.subr.mxu0 %v765
    %v767 = vand.u32 %v70, 4294901760
    %v768 = vsub.f32 %v70, %v767
    %v769 = vand.u32 %v768, 4294901760
    %v770 = vsub.f32 %v768, %v769
    %v771 = vand.u32 %v770, 4294901760
    %772 = vmatpush1.msra.mxu0 %v771
    %773 = vmatprep.subr.mxu0 0.0
    %774 = vmatpush1.msra.mxu0 0.0
    %775 = vmatprep.subr.mxu0 0.0
    %776 = vmatpush1.msra.mxu0 0.0
    %777 = vmatprep.subr.mxu0 0.0
    %778 = vmatpush1.msra.mxu0 0.0
    %779 = vmatprep.subr.mxu0 0.0
    %780 = vmatpush1.msra.mxu0 0.0
    %781 = vmatprep.subr.mxu0 0.0
    %782 = vmatpush1.msra.mxu0 0.0
    %783 = vmatprep.subr.mxu0 0.0
    %784 = vmatpush1.msra.mxu0 0.0
    %785 = vmatprep.subr.mxu0 0.0
    %786 = vmatpush1.msra.mxu0 0.0
    %787 = vmatprep.subr.mxu0 0.0
    %788 = vmatpush1.msra.mxu0 0.0
    %789 = vmatprep.subr.mxu0 0.0
    %790 = vmatpush1.msra.mxu0 0.0
    %791 = vmatprep.subr.mxu0 0.0
    %792 = vmatpush1.msra.mxu0 0.0
    %793 = vmatprep.subr.mxu0 0.0
    %794 = vmatpush1.msra.mxu0 0.0
    %795 = vmatprep.subr.mxu0 0.0
    %796 = vmatpush1.msra.mxu0 0.0
    %797 = vmatprep.subr.mxu0 0.0
    %798 = vmatpush1.msra.mxu0 0.0
    %799 = vmatprep.subr.mxu0 0.0
    %800 = vmatpush1.msra.mxu0 0.0
    %801 = vmatprep.subr.mxu0 0.0
    %802 = vmatpush1.msra.mxu0 0.0
    %803 = vmatprep.subr.mxu0 0.0
    %804 = vmatpush1.msra.mxu0 0.0
    %805 = vmatprep.subr.mxu0 0.0
    %806 = vmatpush1.msra.mxu0 0.0
    %807 = vmatprep.subr.mxu0 0.0
    %808 = vmatpush1.msra.mxu0 0.0
    %809 = vmatprep.subr.mxu0 0.0
    %810 = vmatpush1.msra.mxu0 0.0
    %811 = vmatprep.subr.mxu0 0.0
    %812 = vmatpush1.msra.mxu0 0.0
    %813 = vmatprep.subr.mxu0 0.0
    %814 = vmatpush1.msra.mxu0 0.0
    %815 = vmatprep.subr.mxu0 0.0
    %816 = vmatpush1.msra.mxu0 0.0
    %817 = vmatprep.subr.mxu0 0.0
    %818 = vmatpush1.msra.mxu0 0.0
    %819 = vmatprep.subr.mxu0 0.0
    %820 = vmatpush1.msra.mxu0 0.0
    %821 = vmatprep.subr.mxu0 0.0
    %822 = vmatpush1.msra.mxu0 0.0
    %823 = vmatprep.subr.mxu0 0.0
    %824 = vmatpush1.msra.mxu0 0.0
    %825 = vmatprep.subr.mxu0 0.0
    %826 = vmatpush1.msra.mxu0 0.0
    %827 = vmatprep.subr.mxu0 0.0
    %828 = vmatpush1.msra.mxu0 0.0
    %829 = vmatprep.mubr.f32.mxu0 0.0
    %v830 = vand.u32 %v96, 4294901760
    %831 = vmatmul.mubr.f32.gmra.mrb[0].mxu0 %v830
    %v832 = vpop.f32.mrb[0].mxu0
    %v833 = vadd.f32 %v721, %v832
    %v834 = vpop.f32.mrb[0].mxu0
    %v835 = vadd.f32 %v723, %v834
    %836 = vdwg.mxu0
    %v837 = vand.u32 %v59, 4294901760
    %v838 = vsub.f32 %v59, %v837
    %839 = vmatprep.subr.mxu0 %v838
    %v840 = vand.u32 %v58, 4294901760
    %v841 = vsub.f32 %v58, %v840
    %842 = vmatpush1.msra.mxu0 %v841
    %v843 = vand.u32 %v63, 4294901760
    %v844 = vsub.f32 %v63, %v843
    %845 = vmatprep.subr.mxu0 %v844
    %v846 = vand.u32 %v62, 4294901760
    %v847 = vsub.f32 %v62, %v846
    %848 = vmatpush1.msra.mxu0 %v847
    %v849 = vand.u32 %v67, 4294901760
    %v850 = vsub.f32 %v67, %v849
    %851 = vmatprep.subr.mxu0 %v850
    %v852 = vand.u32 %v66, 4294901760
    %v853 = vsub.f32 %v66, %v852
    %854 = vmatpush1.msra.mxu0 %v853
    %v855 = vand.u32 %v71, 4294901760
    %v856 = vsub.f32 %v71, %v855
    %857 = vmatprep.subr.mxu0 %v856
    %v858 = vand.u32 %v70, 4294901760
    %v859 = vsub.f32 %v70, %v858
    %860 = vmatpush1.msra.mxu0 %v859
    %861 = vmatprep.subr.mxu0 0.0
    %862 = vmatpush1.msra.mxu0 0.0
    %863 = vmatprep.subr.mxu0 0.0
    %864 = vmatpush1.msra.mxu0 0.0
    %865 = vmatprep.subr.mxu0 0.0
    %866 = vmatpush1.msra.mxu0 0.0
    %867 = vmatprep.subr.mxu0 0.0
    %868 = vmatpush1.msra.mxu0 0.0
    %869 = vmatprep.subr.mxu0 0.0
    %870 = vmatpush1.msra.mxu0 0.0
    %871 = vmatprep.subr.mxu0 0.0
    %872 = vmatpush1.msra.mxu0 0.0
    %873 = vmatprep.subr.mxu0 0.0
    %874 = vmatpush1.msra.mxu0 0.0
    %875 = vmatprep.subr.mxu0 0.0
    %876 = vmatpush1.msra.mxu0 0.0
    %877 = vmatprep.subr.mxu0 0.0
    %878 = vmatpush1.msra.mxu0 0.0
    %879 = vmatprep.subr.mxu0 0.0
    %880 = vmatpush1.msra.mxu0 0.0
    %881 = vmatprep.subr.mxu0 0.0
    %882 = vmatpush1.msra.mxu0 0.0
    %883 = vmatprep.subr.mxu0 0.0
    %884 = vmatpush1.msra.mxu0 0.0
    %885 = vmatprep.subr.mxu0 0.0
    %886 = vmatpush1.msra.mxu0 0.0
    %887 = vmatprep.subr.mxu0 0.0
    %888 = vmatpush1.msra.mxu0 0.0
    %889 = vmatprep.subr.mxu0 0.0
    %890 = vmatpush1.msra.mxu0 0.0
    %891 = vmatprep.subr.mxu0 0.0
    %892 = vmatpush1.msra.mxu0 0.0
    %893 = vmatprep.subr.mxu0 0.0
    %894 = vmatpush1.msra.mxu0 0.0
    %895 = vmatprep.subr.mxu0 0.0
    %896 = vmatpush1.msra.mxu0 0.0
    %897 = vmatprep.subr.mxu0 0.0
    %898 = vmatpush1.msra.mxu0 0.0
    %899 = vmatprep.subr.mxu0 0.0
    %900 = vmatpush1.msra.mxu0 0.0
    %901 = vmatprep.subr.mxu0 0.0
    %902 = vmatpush1.msra.mxu0 0.0
    %903 = vmatprep.subr.mxu0 0.0
    %904 = vmatpush1.msra.mxu0 0.0
    %905 = vmatprep.subr.mxu0 0.0
    %906 = vmatpush1.msra.mxu0 0.0
    %907 = vmatprep.subr.mxu0 0.0
    %908 = vmatpush1.msra.mxu0 0.0
    %909 = vmatprep.subr.mxu0 0.0
    %910 = vmatpush1.msra.mxu0 0.0
    %911 = vmatprep.subr.mxu0 0.0
    %912 = vmatpush1.msra.mxu0 0.0
    %913 = vmatprep.subr.mxu0 0.0
    %914 = vmatpush1.msra.mxu0 0.0
    %915 = vmatprep.subr.mxu0 0.0
    %916 = vmatpush1.msra.mxu0 0.0
    %917 = vmatprep.mubr.f32.mxu0 0.0
    %v918 = vand.u32 %v96, 4294901760
    %v919 = vsub.f32 %v96, %v918
    %920 = vmatmul.mubr.f32.gmra.mrb[0].mxu0 %v919
    %v921 = vpop.f32.mrb[0].mxu0
    %v922 = vadd.f32 %v833, %v921
    %v923 = vpop.f32.mrb[0].mxu0
    %v924 = vadd.f32 %v835, %v923
    %925 = vdwg.mxu0
    %v926 = vand.u32 %v59, 4294901760
    %927 = vmatprep.subr.mxu0 %v926
    %v928 = vand.u32 %v58, 4294901760
    %929 = vmatpush1.msra.mxu0 %v928
    %v930 = vand.u32 %v63, 4294901760
    %931 = vmatprep.subr.mxu0 %v930
    %v932 = vand.u32 %v62, 4294901760
    %933 = vmatpush1.msra.mxu0 %v932
    %v934 = vand.u32 %v67, 4294901760
    %935 = vmatprep.subr.mxu0 %v934
    %v936 = vand.u32 %v66, 4294901760
    %937 = vmatpush1.msra.mxu0 %v936
    %v938 = vand.u32 %v71, 4294901760
    %939 = vmatprep.subr.mxu0 %v938
    %v940 = vand.u32 %v70, 4294901760
    %941 = vmatpush1.msra.mxu0 %v940
    %942 = vmatprep.subr.mxu0 0.0
    %943 = vmatpush1.msra.mxu0 0.0
    %944 = vmatprep.subr.mxu0 0.0
    %945 = vmatpush1.msra.mxu0 0.0
    %946 = vmatprep.subr.mxu0 0.0
    %947 = vmatpush1.msra.mxu0 0.0
    %948 = vmatprep.subr.mxu0 0.0
    %949 = vmatpush1.msra.mxu0 0.0
    %950 = vmatprep.subr.mxu0 0.0
    %951 = vmatpush1.msra.mxu0 0.0
    %952 = vmatprep.subr.mxu0 0.0
    %953 = vmatpush1.msra.mxu0 0.0
    %954 = vmatprep.subr.mxu0 0.0
    %955 = vmatpush1.msra.mxu0 0.0
    %956 = vmatprep.subr.mxu0 0.0
    %957 = vmatpush1.msra.mxu0 0.0
    %958 = vmatprep.subr.mxu0 0.0
    %959 = vmatpush1.msra.mxu0 0.0
    %960 = vmatprep.subr.mxu0 0.0
    %961 = vmatpush1.msra.mxu0 0.0
    %962 = vmatprep.subr.mxu0 0.0
    %963 = vmatpush1.msra.mxu0 0.0
    %964 = vmatprep.subr.mxu0 0.0
    %965 = vmatpush1.msra.mxu0 0.0
    %966 = vmatprep.subr.mxu0 0.0
    %967 = vmatpush1.msra.mxu0 0.0
    %968 = vmatprep.subr.mxu0 0.0
    %969 = vmatpush1.msra.mxu0 0.0
    %970 = vmatprep.subr.mxu0 0.0
    %971 = vmatpush1.msra.mxu0 0.0
    %972 = vmatprep.subr.mxu0 0.0
    %973 = vmatpush1.msra.mxu0 0.0
    %974 = vmatprep.subr.mxu0 0.0
    %975 = vmatpush1.msra.mxu0 0.0
    %976 = vmatprep.subr.mxu0 0.0
    %977 = vmatpush1.msra.mxu0 0.0
    %978 = vmatprep.subr.mxu0 0.0
    %979 = vmatpush1.msra.mxu0 0.0
    %980 = vmatprep.subr.mxu0 0.0
    %981 = vmatpush1.msra.mxu0 0.0
    %982 = vmatprep.subr.mxu0 0.0
    %983 = vmatpush1.msra.mxu0 0.0
    %984 = vmatprep.subr.mxu0 0.0
    %985 = vmatpush1.msra.mxu0 0.0
    %986 = vmatprep.subr.mxu0 0.0
    %987 = vmatpush1.msra.mxu0 0.0
    %988 = vmatprep.subr.mxu0 0.0
    %989 = vmatpush1.msra.mxu0 0.0
    %990 = vmatprep.subr.mxu0 0.0
    %991 = vmatpush1.msra.mxu0 0.0
    %992 = vmatprep.subr.mxu0 0.0
    %993 = vmatpush1.msra.mxu0 0.0
    %994 = vmatprep.subr.mxu0 0.0
    %995 = vmatpush1.msra.mxu0 0.0
    %996 = vmatprep.subr.mxu0 0.0
    %997 = vmatpush1.msra.mxu0 0.0
    %998 = vmatprep.mubr.f32.mxu0 0.0
    %v999 = vand.u32 %v96, 4294901760
    %v1000 = vsub.f32 %v96, %v999
    %v1001 = vand.u32 %v1000, 4294901760
    %1002 = vmatmul.mubr.f32.gmra.mrb[0].mxu0 %v1001
    %v1003 = vpop.f32.mrb[0].mxu0
    %v1004 = vadd.f32 %v922, %v1003
    %v1005 = vpop.f32.mrb[0].mxu0
    %v1006 = vadd.f32 %v924, %v1005
    %1007 = vdwg.mxu0
    %v1008 = vand.u32 %v59, 4294901760
    %v1009 = vsub.f32 %v59, %v1008
    %v1010 = vand.u32 %v1009, 4294901760
    %1011 = vmatprep.subr.mxu0 %v1010
    %v1012 = vand.u32 %v58, 4294901760
    %v1013 = vsub.f32 %v58, %v1012
    %v1014 = vand.u32 %v1013, 4294901760
    %1015 = vmatpush1.msra.mxu0 %v1014
    %v1016 = vand.u32 %v63, 4294901760
    %v1017 = vsub.f32 %v63, %v1016
    %v1018 = vand.u32 %v1017, 4294901760
    %1019 = vmatprep.subr.mxu0 %v1018
    %v1020 = vand.u32 %v62, 4294901760
    %v1021 = vsub.f32 %v62, %v1020
    %v1022 = vand.u32 %v1021, 4294901760
    %1023 = vmatpush1.msra.mxu0 %v1022
    %v1024 = vand.u32 %v67, 4294901760
    %v1025 = vsub.f32 %v67, %v1024
    %v1026 = vand.u32 %v1025, 4294901760
    %1027 = vmatprep.subr.mxu0 %v1026
    %v1028 = vand.u32 %v66, 4294901760
    %v1029 = vsub.f32 %v66, %v1028
    %v1030 = vand.u32 %v1029, 4294901760
    %1031 = vmatpush1.msra.mxu0 %v1030
    %v1032 = vand.u32 %v71, 4294901760
    %v1033 = vsub.f32 %v71, %v1032
    %v1034 = vand.u32 %v1033, 4294901760
    %1035 = vmatprep.subr.mxu0 %v1034
    %v1036 = vand.u32 %v70, 4294901760
    %v1037 = vsub.f32 %v70, %v1036
    %v1038 = vand.u32 %v1037, 4294901760
    %1039 = vmatpush1.msra.mxu0 %v1038
    %1040 = vmatprep.subr.mxu0 0.0
    %1041 = vmatpush1.msra.mxu0 0.0
    %1042 = vmatprep.subr.mxu0 0.0
    %1043 = vmatpush1.msra.mxu0 0.0
    %1044 = vmatprep.subr.mxu0 0.0
    %1045 = vmatpush1.msra.mxu0 0.0
    %1046 = vmatprep.subr.mxu0 0.0
    %1047 = vmatpush1.msra.mxu0 0.0
    %1048 = vmatprep.subr.mxu0 0.0
    %1049 = vmatpush1.msra.mxu0 0.0
    %1050 = vmatprep.subr.mxu0 0.0
    %1051 = vmatpush1.msra.mxu0 0.0
    %1052 = vmatprep.subr.mxu0 0.0
    %1053 = vmatpush1.msra.mxu0 0.0
    %1054 = vmatprep.subr.mxu0 0.0
    %1055 = vmatpush1.msra.mxu0 0.0
    %1056 = vmatprep.subr.mxu0 0.0
    %1057 = vmatpush1.msra.mxu0 0.0
    %1058 = vmatprep.subr.mxu0 0.0
    %1059 = vmatpush1.msra.mxu0 0.0
    %1060 = vmatprep.subr.mxu0 0.0
    %1061 = vmatpush1.msra.mxu0 0.0
    %1062 = vmatprep.subr.mxu0 0.0
    %1063 = vmatpush1.msra.mxu0 0.0
    %1064 = vmatprep.subr.mxu0 0.0
    %1065 = vmatpush1.msra.mxu0 0.0
    %1066 = vmatprep.subr.mxu0 0.0
    %1067 = vmatpush1.msra.mxu0 0.0
    %1068 = vmatprep.subr.mxu0 0.0
    %1069 = vmatpush1.msra.mxu0 0.0
    %1070 = vmatprep.subr.mxu0 0.0
    %1071 = vmatpush1.msra.mxu0 0.0
    %1072 = vmatprep.subr.mxu0 0.0
    %1073 = vmatpush1.msra.mxu0 0.0
    %1074 = vmatprep.subr.mxu0 0.0
    %1075 = vmatpush1.msra.mxu0 0.0
    %1076 = vmatprep.subr.mxu0 0.0
    %1077 = vmatpush1.msra.mxu0 0.0
    %1078 = vmatprep.subr.mxu0 0.0
    %1079 = vmatpush1.msra.mxu0 0.0
    %1080 = vmatprep.subr.mxu0 0.0
    %1081 = vmatpush1.msra.mxu0 0.0
    %1082 = vmatprep.subr.mxu0 0.0
    %1083 = vmatpush1.msra.mxu0 0.0
    %1084 = vmatprep.subr.mxu0 0.0
    %1085 = vmatpush1.msra.mxu0 0.0
    %1086 = vmatprep.subr.mxu0 0.0
    %1087 = vmatpush1.msra.mxu0 0.0
    %1088 = vmatprep.subr.mxu0 0.0
    %1089 = vmatpush1.msra.mxu0 0.0
    %1090 = vmatprep.subr.mxu0 0.0
    %1091 = vmatpush1.msra.mxu0 0.0
    %1092 = vmatprep.subr.mxu0 0.0
    %1093 = vmatpush1.msra.mxu0 0.0
    %1094 = vmatprep.subr.mxu0 0.0
    %1095 = vmatpush1.msra.mxu0 0.0
    %1096 = vmatprep.mubr.f32.mxu0 0.0
    %v1097 = vand.u32 %v96, 4294901760
    %1098 = vmatmul.mubr.f32.gmra.mrb[0].mxu0 %v1097
    %v1099 = vpop.f32.mrb[0].mxu0
    %v1100 = vadd.f32 %v1004, %v1099
    %v1101 = vpop.f32.mrb[0].mxu0
    %v1102 = vadd.f32 %v1006, %v1101
    %1103 = vdwg.mxu0
    %v1104 = vand.u32 %v59, 4294901760
    %1105 = vmatprep.subr.mxu0 %v1104
    %v1106 = vand.u32 %v58, 4294901760
    %1107 = vmatpush1.msra.mxu0 %v1106
    %v1108 = vand.u32 %v63, 4294901760
    %1109 = vmatprep.subr.mxu0 %v1108
    %v1110 = vand.u32 %v62, 4294901760
    %1111 = vmatpush1.msra.mxu0 %v1110
    %v1112 = vand.u32 %v67, 4294901760
    %1113 = vmatprep.subr.mxu0 %v1112
    %v1114 = vand.u32 %v66, 4294901760
    %1115 = vmatpush1.msra.mxu0 %v1114
    %v1116 = vand.u32 %v71, 4294901760
    %1117 = vmatprep.subr.mxu0 %v1116
    %v1118 = vand.u32 %v70, 4294901760
    %1119 = vmatpush1.msra.mxu0 %v1118
    %1120 = vmatprep.subr.mxu0 0.0
    %1121 = vmatpush1.msra.mxu0 0.0
    %1122 = vmatprep.subr.mxu0 0.0
    %1123 = vmatpush1.msra.mxu0 0.0
    %1124 = vmatprep.subr.mxu0 0.0
    %1125 = vmatpush1.msra.mxu0 0.0
    %1126 = vmatprep.subr.mxu0 0.0
    %1127 = vmatpush1.msra.mxu0 0.0
    %1128 = vmatprep.subr.mxu0 0.0
    %1129 = vmatpush1.msra.mxu0 0.0
    %1130 = vmatprep.subr.mxu0 0.0
    %1131 = vmatpush1.msra.mxu0 0.0
    %1132 = vmatprep.subr.mxu0 0.0
    %1133 = vmatpush1.msra.mxu0 0.0
    %1134 = vmatprep.subr.mxu0 0.0
    %1135 = vmatpush1.msra.mxu0 0.0
    %1136 = vmatprep.subr.mxu0 0.0
    %1137 = vmatpush1.msra.mxu0 0.0
    %1138 = vmatprep.subr.mxu0 0.0
    %1139 = vmatpush1.msra.mxu0 0.0
    %1140 = vmatprep.subr.mxu0 0.0
    %1141 = vmatpush1.msra.mxu0 0.0
    %1142 = vmatprep.subr.mxu0 0.0
    %1143 = vmatpush1.msra.mxu0 0.0
    %1144 = vmatprep.subr.mxu0 0.0
    %1145 = vmatpush1.msra.mxu0 0.0
    %1146 = vmatprep.subr.mxu0 0.0
    %1147 = vmatpush1.msra.mxu0 0.0
    %1148 = vmatprep.subr.mxu0 0.0
    %1149 = vmatpush1.msra.mxu0 0.0
    %1150 = vmatprep.subr.mxu0 0.0
    %1151 = vmatpush1.msra.mxu0 0.0
    %1152 = vmatprep.subr.mxu0 0.0
    %1153 = vmatpush1.msra.mxu0 0.0
    %1154 = vmatprep.subr.mxu0 0.0
    %1155 = vmatpush1.msra.mxu0 0.0
    %1156 = vmatprep.subr.mxu0 0.0
    %1157 = vmatpush1.msra.mxu0 0.0
    %1158 = vmatprep.subr.mxu0 0.0
    %1159 = vmatpush1.msra.mxu0 0.0
    %1160 = vmatprep.subr.mxu0 0.0
    %1161 = vmatpush1.msra.mxu0 0.0
    %1162 = vmatprep.subr.mxu0 0.0
    %1163 = vmatpush1.msra.mxu0 0.0
    %1164 = vmatprep.subr.mxu0 0.0
    %1165 = vmatpush1.msra.mxu0 0.0
    %1166 = vmatprep.subr.mxu0 0.0
    %1167 = vmatpush1.msra.mxu0 0.0
    %1168 = vmatprep.subr.mxu0 0.0
    %1169 = vmatpush1.msra.mxu0 0.0
    %1170 = vmatprep.subr.mxu0 0.0
    %1171 = vmatpush1.msra.mxu0 0.0
    %1172 = vmatprep.subr.mxu0 0.0
    %1173 = vmatpush1.msra.mxu0 0.0
    %1174 = vmatprep.subr.mxu0 0.0
    %1175 = vmatpush1.msra.mxu0 0.0
    %1176 = vmatprep.mubr.f32.mxu0 0.0
    %v1177 = vand.u32 %v96, 4294901760
    %1178 = vmatmul.mubr.f32.gmra.mrb[0].mxu0 %v1177
    %v1179 = vpop.f32.mrb[0].mxu0
    %v1180 = vadd.f32 %v1100, %v1179
    %v1181 = vpop.f32.mrb[0].mxu0
    %v1182 = vadd.f32 %v1102, %v1181
    %1183 = vdwg.mxu0
    %v1184 = vld [vmem:[%s2] sm:$0xff]
    %v1185 = vld [vmem:[%s2 + $0x8] sm:$0xff]
    %v1186 = vld [vmem:[%s2 + $0x10] sm:$0xff]
    %v1187 = vld [vmem:[%s2 + $0x18] sm:$0xff]
    %v1188 = vld [vmem:[%s5] sm:$0x1]
    %v1189 = vlaneseq
    %v1190 = vshrl.u32 %v1189, 7
    %v1191 = vsub.s32 0, %v1190
    %v1192 = vrot.slane %v1188, %v1191
    %1193 = vmatprep.subr.mxu0 0.0
    %v1194 = vand.u32 %v1184, 4294901760
    %1195 = vmatpush1.msra.mxu0 %v1194
    %1196 = vmatprep.subr.mxu0 0.0
    %v1197 = vand.u32 %v1185, 4294901760
    %1198 = vmatpush1.msra.mxu0 %v1197
    %1199 = vmatprep.subr.mxu0 0.0
    %v1200 = vand.u32 %v1186, 4294901760
    %1201 = vmatpush1.msra.mxu0 %v1200
    %1202 = vmatprep.subr.mxu0 0.0
    %v1203 = vand.u32 %v1187, 4294901760
    %1204 = vmatpush1.msra.mxu0 %v1203
    %1205 = vmatprep.subr.mxu0 0.0
    %1206 = vmatpush1.msra.mxu0 0.0
    %1207 = vmatprep.subr.mxu0 0.0
    %1208 = vmatpush1.msra.mxu0 0.0
    %1209 = vmatprep.subr.mxu0 0.0
    %1210 = vmatpush1.msra.mxu0 0.0
    %1211 = vmatprep.subr.mxu0 0.0
    %1212 = vmatpush1.msra.mxu0 0.0
    %1213 = vmatprep.subr.mxu0 0.0
    %1214 = vmatpush1.msra.mxu0 0.0
    %1215 = vmatprep.subr.mxu0 0.0
    %1216 = vmatpush1.msra.mxu0 0.0
    %1217 = vmatprep.subr.mxu0 0.0
    %1218 = vmatpush1.msra.mxu0 0.0
    %1219 = vmatprep.subr.mxu0 0.0
    %1220 = vmatpush1.msra.mxu0 0.0
    %1221 = vmatprep.subr.mxu0 0.0
    %1222 = vmatpush1.msra.mxu0 0.0
    %1223 = vmatprep.subr.mxu0 0.0
    %1224 = vmatpush1.msra.mxu0 0.0
    %1225 = vmatprep.subr.mxu0 0.0
    %1226 = vmatpush1.msra.mxu0 0.0
    %1227 = vmatprep.subr.mxu0 0.0
    %1228 = vmatpush1.msra.mxu0 0.0
    %1229 = vmatprep.subr.mxu0 0.0
    %1230 = vmatpush1.msra.mxu0 0.0
    %1231 = vmatprep.subr.mxu0 0.0
    %1232 = vmatpush1.msra.mxu0 0.0
    %1233 = vmatprep.subr.mxu0 0.0
    %1234 = vmatpush1.msra.mxu0 0.0
    %1235 = vmatprep.subr.mxu0 0.0
    %1236 = vmatpush1.msra.mxu0 0.0
    %1237 = vmatprep.subr.mxu0 0.0
    %1238 = vmatpush1.msra.mxu0 0.0
    %1239 = vmatprep.subr.mxu0 0.0
    %1240 = vmatpush1.msra.mxu0 0.0
    %1241 = vmatprep.subr.mxu0 0.0
    %1242 = vmatpush1.msra.mxu0 0.0
    %1243 = vmatprep.subr.mxu0 0.0
    %1244 = vmatpush1.msra.mxu0 0.0
    %1245 = vmatprep.subr.mxu0 0.0
    %1246 = vmatpush1.msra.mxu0 0.0
    %1247 = vmatprep.subr.mxu0 0.0
    %1248 = vmatpush1.msra.mxu0 0.0
    %1249 = vmatprep.subr.mxu0 0.0
    %1250 = vmatpush1.msra.mxu0 0.0
    %1251 = vmatprep.subr.mxu0 0.0
    %1252 = vmatpush1.msra.mxu0 0.0
    %1253 = vmatprep.subr.mxu0 0.0
    %1254 = vmatpush1.msra.mxu0 0.0
    %1255 = vmatprep.subr.mxu0 0.0
    %1256 = vmatpush1.msra.mxu0 0.0
    %1257 = vmatprep.subr.mxu0 0.0
    %1258 = vmatpush1.msra.mxu0 0.0
    %1259 = vmatprep.subr.mxu0 0.0
    %1260 = vmatpush1.msra.mxu0 0.0
    %1261 = vmatprep.mubr.f32.mxu0 0.0
    %v1262 = vand.u32 %v96, 4294901760
    %v1263 = vsub.f32 %v96, %v1262
    %v1264 = vand.u32 %v1263, 4294901760
    %v1265 = vsub.f32 %v1263, %v1264
    %v1266 = vand.u32 %v1265, 4294901760
    %1267 = vmatmul.mubr.f32.gmra.mrb[0].mxu0 %v1266
    %v1268 = vpop.f32.mrb[0].mxu0
    %v1269 = vadd.f32 %v1192, %v1268
    %v1270 = vpop.f32.mrb[0].mxu0
    %1271 = vdwg.mxu0
    %1272 = vmatprep.subr.mxu0 0.0
    %v1273 = vand.u32 %v1184, 4294901760
    %v1274 = vsub.f32 %v1184, %v1273
    %v1275 = vand.u32 %v1274, 4294901760
    %v1276 = vsub.f32 %v1274, %v1275
    %v1277 = vand.u32 %v1276, 4294901760
    %1278 = vmatpush1.msra.mxu0 %v1277
    %1279 = vmatprep.subr.mxu0 0.0
    %v1280 = vand.u32 %v1185, 4294901760
    %v1281 = vsub.f32 %v1185, %v1280
    %v1282 = vand.u32 %v1281, 4294901760
    %v1283 = vsub.f32 %v1281, %v1282
    %v1284 = vand.u32 %v1283, 4294901760
    %1285 = vmatpush1.msra.mxu0 %v1284
    %1286 = vmatprep.subr.mxu0 0.0
    %v1287 = vand.u32 %v1186, 4294901760
    %v1288 = vsub.f32 %v1186, %v1287
    %v1289 = vand.u32 %v1288, 4294901760
    %v1290 = vsub.f32 %v1288, %v1289
    %v1291 = vand.u32 %v1290, 4294901760
    %1292 = vmatpush1.msra.mxu0 %v1291
    %1293 = vmatprep.subr.mxu0 0.0
    %v1294 = vand.u32 %v1187, 4294901760
    %v1295 = vsub.f32 %v1187, %v1294
    %v1296 = vand.u32 %v1295, 4294901760
    %v1297 = vsub.f32 %v1295, %v1296
    %v1298 = vand.u32 %v1297, 4294901760
    %1299 = vmatpush1.msra.mxu0 %v1298
    %1300 = vmatprep.subr.mxu0 0.0
    %1301 = vmatpush1.msra.mxu0 0.0
    %1302 = vmatprep.subr.mxu0 0.0
    %1303 = vmatpush1.msra.mxu0 0.0
    %1304 = vmatprep.subr.mxu0 0.0
    %1305 = vmatpush1.msra.mxu0 0.0
    %1306 = vmatprep.subr.mxu0 0.0
    %1307 = vmatpush1.msra.mxu0 0.0
    %1308 = vmatprep.subr.mxu0 0.0
    %1309 = vmatpush1.msra.mxu0 0.0
    %1310 = vmatprep.subr.mxu0 0.0
    %1311 = vmatpush1.msra.mxu0 0.0
    %1312 = vmatprep.subr.mxu0 0.0
    %1313 = vmatpush1.msra.mxu0 0.0
    %1314 = vmatprep.subr.mxu0 0.0
    %1315 = vmatpush1.msra.mxu0 0.0
    %1316 = vmatprep.subr.mxu0 0.0
    %1317 = vmatpush1.msra.mxu0 0.0
    %1318 = vmatprep.subr.mxu0 0.0
    %1319 = vmatpush1.msra.mxu0 0.0
    %1320 = vmatprep.subr.mxu0 0.0
    %1321 = vmatpush1.msra.mxu0 0.0
    %1322 = vmatprep.subr.mxu0 0.0
    %1323 = vmatpush1.msra.mxu0 0.0
    %1324 = vmatprep.subr.mxu0 0.0
    %1325 = vmatpush1.msra.mxu0 0.0
    %1326 = vmatprep.subr.mxu0 0.0
    %1327 = vmatpush1.msra.mxu0 0.0
    %1328 = vmatprep.subr.mxu0 0.0
    %1329 = vmatpush1.msra.mxu0 0.0
    %1330 = vmatprep.subr.mxu0 0.0
    %1331 = vmatpush1.msra.mxu0 0.0
    %1332 = vmatprep.subr.mxu0 0.0
    %1333 = vmatpush1.msra.mxu0 0.0
    %1334 = vmatprep.subr.mxu0 0.0
    %1335 = vmatpush1.msra.mxu0 0.0
    %1336 = vmatprep.subr.mxu0 0.0
    %1337 = vmatpush1.msra.mxu0 0.0
    %1338 = vmatprep.subr.mxu0 0.0
    %1339 = vmatpush1.msra.mxu0 0.0
    %1340 = vmatprep.subr.mxu0 0.0
    %1341 = vmatpush1.msra.mxu0 0.0
    %1342 = vmatprep.subr.mxu0 0.0
    %1343 = vmatpush1.msra.mxu0 0.0
    %1344 = vmatprep.subr.mxu0 0.0
    %1345 = vmatpush1.msra.mxu0 0.0
    %1346 = vmatprep.subr.mxu0 0.0
    %1347 = vmatpush1.msra.mxu0 0.0
    %1348 = vmatprep.subr.mxu0 0.0
    %1349 = vmatpush1.msra.mxu0 0.0
    %1350 = vmatprep.subr.mxu0 0.0
    %1351 = vmatpush1.msra.mxu0 0.0
    %1352 = vmatprep.subr.mxu0 0.0
    %1353 = vmatpush1.msra.mxu0 0.0
    %1354 = vmatprep.subr.mxu0 0.0
    %1355 = vmatpush1.msra.mxu0 0.0
    %1356 = vmatprep.mubr.f32.mxu0 0.0
    %v1357 = vand.u32 %v96, 4294901760
    %1358 = vmatmul.mubr.f32.gmra.mrb[0].mxu0 %v1357
    %v1359 = vpop.f32.mrb[0].mxu0
    %v1360 = vadd.f32 %v1269, %v1359
    %v1361 = vpop.f32.mrb[0].mxu0
    %1362 = vdwg.mxu0
    %1363 = vmatprep.subr.mxu0 0.0
    %v1364 = vand.u32 %v1184, 4294901760
    %v1365 = vsub.f32 %v1184, %v1364
    %1366 = vmatpush1.msra.mxu0 %v1365
    %1367 = vmatprep.subr.mxu0 0.0
    %v1368 = vand.u32 %v1185, 4294901760
    %v1369 = vsub.f32 %v1185, %v1368
    %1370 = vmatpush1.msra.mxu0 %v1369
    %1371 = vmatprep.subr.mxu0 0.0
    %v1372 = vand.u32 %v1186, 4294901760
    %v1373 = vsub.f32 %v1186, %v1372
    %1374 = vmatpush1.msra.mxu0 %v1373
    %1375 = vmatprep.subr.mxu0 0.0
    %v1376 = vand.u32 %v1187, 4294901760
    %v1377 = vsub.f32 %v1187, %v1376
    %1378 = vmatpush1.msra.mxu0 %v1377
    %1379 = vmatprep.subr.mxu0 0.0
    %1380 = vmatpush1.msra.mxu0 0.0
    %1381 = vmatprep.subr.mxu0 0.0
    %1382 = vmatpush1.msra.mxu0 0.0
    %1383 = vmatprep.subr.mxu0 0.0
    %1384 = vmatpush1.msra.mxu0 0.0
    %1385 = vmatprep.subr.mxu0 0.0
    %1386 = vmatpush1.msra.mxu0 0.0
    %1387 = vmatprep.subr.mxu0 0.0
    %1388 = vmatpush1.msra.mxu0 0.0
    %1389 = vmatprep.subr.mxu0 0.0
    %1390 = vmatpush1.msra.mxu0 0.0
    %1391 = vmatprep.subr.mxu0 0.0
    %1392 = vmatpush1.msra.mxu0 0.0
    %1393 = vmatprep.subr.mxu0 0.0
    %1394 = vmatpush1.msra.mxu0 0.0
    %1395 = vmatprep.subr.mxu0 0.0
    %1396 = vmatpush1.msra.mxu0 0.0
    %1397 = vmatprep.subr.mxu0 0.0
    %1398 = vmatpush1.msra.mxu0 0.0
    %1399 = vmatprep.subr.mxu0 0.0
    %1400 = vmatpush1.msra.mxu0 0.0
    %1401 = vmatprep.subr.mxu0 0.0
    %1402 = vmatpush1.msra.mxu0 0.0
    %1403 = vmatprep.subr.mxu0 0.0
    %1404 = vmatpush1.msra.mxu0 0.0
    %1405 = vmatprep.subr.mxu0 0.0
    %1406 = vmatpush1.msra.mxu0 0.0
    %1407 = vmatprep.subr.mxu0 0.0
    %1408 = vmatpush1.msra.mxu0 0.0
    %1409 = vmatprep.subr.mxu0 0.0
    %1410 = vmatpush1.msra.mxu0 0.0
    %1411 = vmatprep.subr.mxu0 0.0
    %1412 = vmatpush1.msra.mxu0 0.0
    %1413 = vmatprep.subr.mxu0 0.0
    %1414 = vmatpush1.msra.mxu0 0.0
    %1415 = vmatprep.subr.mxu0 0.0
    %1416 = vmatpush1.msra.mxu0 0.0
    %1417 = vmatprep.subr.mxu0 0.0
    %1418 = vmatpush1.msra.mxu0 0.0
    %1419 = vmatprep.subr.mxu0 0.0
    %1420 = vmatpush1.msra.mxu0 0.0
    %1421 = vmatprep.subr.mxu0 0.0
    %1422 = vmatpush1.msra.mxu0 0.0
    %1423 = vmatprep.subr.mxu0 0.0
    %1424 = vmatpush1.msra.mxu0 0.0
    %1425 = vmatprep.subr.mxu0 0.0
    %1426 = vmatpush1.msra.mxu0 0.0
    %1427 = vmatprep.subr.mxu0 0.0
    %1428 = vmatpush1.msra.mxu0 0.0
    %1429 = vmatprep.subr.mxu0 0.0
    %1430 = vmatpush1.msra.mxu0 0.0
    %1431 = vmatprep.subr.mxu0 0.0
    %1432 = vmatpush1.msra.mxu0 0.0
    %1433 = vmatprep.subr.mxu0 0.0
    %1434 = vmatpush1.msra.mxu0 0.0
    %1435 = vmatprep.mubr.f32.mxu0 0.0
    %v1436 = vand.u32 %v96, 4294901760
    %v1437 = vsub.f32 %v96, %v1436
    %1438 = vmatmul.mubr.f32.gmra.mrb[0].mxu0 %v1437
    %v1439 = vpop.f32.mrb[0].mxu0
    %v1440 = vadd.f32 %v1360, %v1439
    %v1441 = vpop.f32.mrb[0].mxu0
    %1442 = vdwg.mxu0
    %1443 = vmatprep.subr.mxu0 0.0
    %v1444 = vand.u32 %v1184, 4294901760
    %1445 = vmatpush1.msra.mxu0 %v1444
    %1446 = vmatprep.subr.mxu0 0.0
    %v1447 = vand.u32 %v1185, 4294901760
    %1448 = vmatpush1.msra.mxu0 %v1447
    %1449 = vmatprep.subr.mxu0 0.0
    %v1450 = vand.u32 %v1186, 4294901760
    %1451 = vmatpush1.msra.mxu0 %v1450
    %1452 = vmatprep.subr.mxu0 0.0
    %v1453 = vand.u32 %v1187, 4294901760
    %1454 = vmatpush1.msra.mxu0 %v1453
    %1455 = vmatprep.subr.mxu0 0.0
    %1456 = vmatpush1.msra.mxu0 0.0
    %1457 = vmatprep.subr.mxu0 0.0
    %1458 = vmatpush1.msra.mxu0 0.0
    %1459 = vmatprep.subr.mxu0 0.0
    %1460 = vmatpush1.msra.mxu0 0.0
    %1461 = vmatprep.subr.mxu0 0.0
    %1462 = vmatpush1.msra.mxu0 0.0
    %1463 = vmatprep.subr.mxu0 0.0
    %1464 = vmatpush1.msra.mxu0 0.0
    %1465 = vmatprep.subr.mxu0 0.0
    %1466 = vmatpush1.msra.mxu0 0.0
    %1467 = vmatprep.subr.mxu0 0.0
    %1468 = vmatpush1.msra.mxu0 0.0
    %1469 = vmatprep.subr.mxu0 0.0
    %1470 = vmatpush1.msra.mxu0 0.0
    %1471 = vmatprep.subr.mxu0 0.0
    %1472 = vmatpush1.msra.mxu0 0.0
    %1473 = vmatprep.subr.mxu0 0.0
    %1474 = vmatpush1.msra.mxu0 0.0
    %1475 = vmatprep.subr.mxu0 0.0
    %1476 = vmatpush1.msra.mxu0 0.0
    %1477 = vmatprep.subr.mxu0 0.0
    %1478 = vmatpush1.msra.mxu0 0.0
    %1479 = vmatprep.subr.mxu0 0.0
    %1480 = vmatpush1.msra.mxu0 0.0
    %1481 = vmatprep.subr.mxu0 0.0
    %1482 = vmatpush1.msra.mxu0 0.0
    %1483 = vmatprep.subr.mxu0 0.0
    %1484 = vmatpush1.msra.mxu0 0.0
    %1485 = vmatprep.subr.mxu0 0.0
    %1486 = vmatpush1.msra.mxu0 0.0
    %1487 = vmatprep.subr.mxu0 0.0
    %1488 = vmatpush1.msra.mxu0 0.0
    %1489 = vmatprep.subr.mxu0 0.0
    %1490 = vmatpush1.msra.mxu0 0.0
    %1491 = vmatprep.subr.mxu0 0.0
    %1492 = vmatpush1.msra.mxu0 0.0
    %1493 = vmatprep.subr.mxu0 0.0
    %1494 = vmatpush1.msra.mxu0 0.0
    %1495 = vmatprep.subr.mxu0 0.0
    %1496 = vmatpush1.msra.mxu0 0.0
    %1497 = vmatprep.subr.mxu0 0.0
    %1498 = vmatpush1.msra.mxu0 0.0
    %1499 = vmatprep.subr.mxu0 0.0
    %1500 = vmatpush1.msra.mxu0 0.0
    %1501 = vmatprep.subr.mxu0 0.0
    %1502 = vmatpush1.msra.mxu0 0.0
    %1503 = vmatprep.subr.mxu0 0.0
    %1504 = vmatpush1.msra.mxu0 0.0
    %1505 = vmatprep.subr.mxu0 0.0
    %1506 = vmatpush1.msra.mxu0 0.0
    %1507 = vmatprep.subr.mxu0 0.0
    %1508 = vmatpush1.msra.mxu0 0.0
    %1509 = vmatprep.subr.mxu0 0.0
    %1510 = vmatpush1.msra.mxu0 0.0
    %1511 = vmatprep.mubr.f32.mxu0 0.0
    %v1512 = vand.u32 %v96, 4294901760
    %v1513 = vsub.f32 %v96, %v1512
    %v1514 = vand.u32 %v1513, 4294901760
    %1515 = vmatmul.mubr.f32.gmra.mrb[0].mxu0 %v1514
    %v1516 = vpop.f32.mrb[0].mxu0
    %v1517 = vadd.f32 %v1440, %v1516
    %v1518 = vpop.f32.mrb[0].mxu0
    %1519 = vdwg.mxu0
    %1520 = vmatprep.subr.mxu0 0.0
    %v1521 = vand.u32 %v1184, 4294901760
    %v1522 = vsub.f32 %v1184, %v1521
    %v1523 = vand.u32 %v1522, 4294901760
    %1524 = vmatpush1.msra.mxu0 %v1523
    %1525 = vmatprep.subr.mxu0 0.0
    %v1526 = vand.u32 %v1185, 4294901760
    %v1527 = vsub.f32 %v1185, %v1526
    %v1528 = vand.u32 %v1527, 4294901760
    %1529 = vmatpush1.msra.mxu0 %v1528
    %1530 = vmatprep.subr.mxu0 0.0
    %v1531 = vand.u32 %v1186, 4294901760
    %v1532 = vsub.f32 %v1186, %v1531
    %v1533 = vand.u32 %v1532, 4294901760
    %1534 = vmatpush1.msra.mxu0 %v1533
    %1535 = vmatprep.subr.mxu0 0.0
    %v1536 = vand.u32 %v1187, 4294901760
    %v1537 = vsub.f32 %v1187, %v1536
    %v1538 = vand.u32 %v1537, 4294901760
    %1539 = vmatpush1.msra.mxu0 %v1538
    %1540 = vmatprep.subr.mxu0 0.0
    %1541 = vmatpush1.msra.mxu0 0.0
    %1542 = vmatprep.subr.mxu0 0.0
    %1543 = vmatpush1.msra.mxu0 0.0
    %1544 = vmatprep.subr.mxu0 0.0
    %1545 = vmatpush1.msra.mxu0 0.0
    %1546 = vmatprep.subr.mxu0 0.0
    %1547 = vmatpush1.msra.mxu0 0.0
    %1548 = vmatprep.subr.mxu0 0.0
    %1549 = vmatpush1.msra.mxu0 0.0
    %1550 = vmatprep.subr.mxu0 0.0
    %1551 = vmatpush1.msra.mxu0 0.0
    %1552 = vmatprep.subr.mxu0 0.0
    %1553 = vmatpush1.msra.mxu0 0.0
    %1554 = vmatprep.subr.mxu0 0.0
    %1555 = vmatpush1.msra.mxu0 0.0
    %1556 = vmatprep.subr.mxu0 0.0
    %1557 = vmatpush1.msra.mxu0 0.0
    %1558 = vmatprep.subr.mxu0 0.0
    %1559 = vmatpush1.msra.mxu0 0.0
    %1560 = vmatprep.subr.mxu0 0.0
    %1561 = vmatpush1.msra.mxu0 0.0
    %1562 = vmatprep.subr.mxu0 0.0
    %1563 = vmatpush1.msra.mxu0 0.0
    %1564 = vmatprep.subr.mxu0 0.0
    %1565 = vmatpush1.msra.mxu0 0.0
    %1566 = vmatprep.subr.mxu0 0.0
    %1567 = vmatpush1.msra.mxu0 0.0
    %1568 = vmatprep.subr.mxu0 0.0
    %1569 = vmatpush1.msra.mxu0 0.0
    %1570 = vmatprep.subr.mxu0 0.0
    %1571 = vmatpush1.msra.mxu0 0.0
    %1572 = vmatprep.subr.mxu0 0.0
    %1573 = vmatpush1.msra.mxu0 0.0
    %1574 = vmatprep.subr.mxu0 0.0
    %1575 = vmatpush1.msra.mxu0 0.0
    %1576 = vmatprep.subr.mxu0 0.0
    %1577 = vmatpush1.msra.mxu0 0.0
    %1578 = vmatprep.subr.mxu0 0.0
    %1579 = vmatpush1.msra.mxu0 0.0
    %1580 = vmatprep.subr.mxu0 0.0
    %1581 = vmatpush1.msra.mxu0 0.0
    %1582 = vmatprep.subr.mxu0 0.0
    %1583 = vmatpush1.msra.mxu0 0.0
    %1584 = vmatprep.subr.mxu0 0.0
    %1585 = vmatpush1.msra.mxu0 0.0
    %1586 = vmatprep.subr.mxu0 0.0
    %1587 = vmatpush1.msra.mxu0 0.0
    %1588 = vmatprep.subr.mxu0 0.0
    %1589 = vmatpush1.msra.mxu0 0.0
    %1590 = vmatprep.subr.mxu0 0.0
    %1591 = vmatpush1.msra.mxu0 0.0
    %1592 = vmatprep.subr.mxu0 0.0
    %1593 = vmatpush1.msra.mxu0 0.0
    %1594 = vmatprep.subr.mxu0 0.0
    %1595 = vmatpush1.msra.mxu0 0.0
    %1596 = vmatprep.mubr.f32.mxu0 0.0
    %v1597 = vand.u32 %v96, 4294901760
    %1598 = vmatmul.mubr.f32.gmra.mrb[0].mxu0 %v1597
    %v1599 = vpop.f32.mrb[0].mxu0
    %v1600 = vadd.f32 %v1517, %v1599
    %v1601 = vpop.f32.mrb[0].mxu0
    %1602 = vdwg.mxu0
    %1603 = vmatprep.subr.mxu0 0.0
    %v1604 = vand.u32 %v1184, 4294901760
    %1605 = vmatpush1.msra.mxu0 %v1604
    %1606 = vmatprep.subr.mxu0 0.0
    %v1607 = vand.u32 %v1185, 4294901760
    %1608 = vmatpush1.msra.mxu0 %v1607
    %1609 = vmatprep.subr.mxu0 0.0
    %v1610 = vand.u32 %v1186, 4294901760
    %1611 = vmatpush1.msra.mxu0 %v1610
    %1612 = vmatprep.subr.mxu0 0.0
    %v1613 = vand.u32 %v1187, 4294901760
    %1614 = vmatpush1.msra.mxu0 %v1613
    %1615 = vmatprep.subr.mxu0 0.0
    %1616 = vmatpush1.msra.mxu0 0.0
    %1617 = vmatprep.subr.mxu0 0.0
    %1618 = vmatpush1.msra.mxu0 0.0
    %1619 = vmatprep.subr.mxu0 0.0
    %1620 = vmatpush1.msra.mxu0 0.0
    %1621 = vmatprep.subr.mxu0 0.0
    %1622 = vmatpush1.msra.mxu0 0.0
    %1623 = vmatprep.subr.mxu0 0.0
    %1624 = vmatpush1.msra.mxu0 0.0
    %1625 = vmatprep.subr.mxu0 0.0
    %1626 = vmatpush1.msra.mxu0 0.0
    %1627 = vmatprep.subr.mxu0 0.0
    %1628 = vmatpush1.msra.mxu0 0.0
    %1629 = vmatprep.subr.mxu0 0.0
    %1630 = vmatpush1.msra.mxu0 0.0
    %1631 = vmatprep.subr.mxu0 0.0
    %1632 = vmatpush1.msra.mxu0 0.0
    %1633 = vmatprep.subr.mxu0 0.0
    %1634 = vmatpush1.msra.mxu0 0.0
    %1635 = vmatprep.subr.mxu0 0.0
    %1636 = vmatpush1.msra.mxu0 0.0
    %1637 = vmatprep.subr.mxu0 0.0
    %1638 = vmatpush1.msra.mxu0 0.0
    %1639 = vmatprep.subr.mxu0 0.0
    %1640 = vmatpush1.msra.mxu0 0.0
    %1641 = vmatprep.subr.mxu0 0.0
    %1642 = vmatpush1.msra.mxu0 0.0
    %1643 = vmatprep.subr.mxu0 0.0
    %1644 = vmatpush1.msra.mxu0 0.0
    %1645 = vmatprep.subr.mxu0 0.0
    %1646 = vmatpush1.msra.mxu0 0.0
    %1647 = vmatprep.subr.mxu0 0.0
    %1648 = vmatpush1.msra.mxu0 0.0
    %1649 = vmatprep.subr.mxu0 0.0
    %1650 = vmatpush1.msra.mxu0 0.0
    %1651 = vmatprep.subr.mxu0 0.0
    %1652 = vmatpush1.msra.mxu0 0.0
    %1653 = vmatprep.subr.mxu0 0.0
    %1654 = vmatpush1.msra.mxu0 0.0
    %1655 = vmatprep.subr.mxu0 0.0
    %1656 = vmatpush1.msra.mxu0 0.0
    %1657 = vmatprep.subr.mxu0 0.0
    %1658 = vmatpush1.msra.mxu0 0.0
    %1659 = vmatprep.subr.mxu0 0.0
    %1660 = vmatpush1.msra.mxu0 0.0
    %1661 = vmatprep.subr.mxu0 0.0
    %1662 = vmatpush1.msra.mxu0 0.0
    %1663 = vmatprep.subr.mxu0 0.0
    %1664 = vmatpush1.msra.mxu0 0.0
    %1665 = vmatprep.subr.mxu0 0.0
    %1666 = vmatpush1.msra.mxu0 0.0
    %1667 = vmatprep.subr.mxu0 0.0
    %1668 = vmatpush1.msra.mxu0 0.0
    %1669 = vmatprep.subr.mxu0 0.0
    %1670 = vmatpush1.msra.mxu0 0.0
    %1671 = vmatprep.mubr.f32.mxu0 0.0
    %v1672 = vand.u32 %v96, 4294901760
    %1673 = vmatmul.mubr.f32.gmra.mrb[0].mxu0 %v1672
    %v1674 = vpop.f32.mrb[0].mxu0
    %v1675 = vadd.f32 %v1600, %v1674
    %v1676 = vpop.f32.mrb[0].mxu0
    %1677 = vdwg.mxu0
    %v1678 = vmul.f32 %v55, %v1675
    %v1679 = vld [vmem:[%s5 + $0x1] sm:$0x1]
    %v1680 = vlaneseq
    %v1681 = vshrl.u32 %v1680, 7
    %v1682 = vsub.s32 0, %v1681
    %v1683 = vrot.slane %v1679, %v1682
    %v1684 = vadd.f32 %v1678, %v1683
    %v1685 = vld [vmem:[%s3] sm:$0xff]
    %v1686 = vld [vmem:[%s3 + $0x8] sm:$0xff]
    %v1687 = vld [vmem:[%s3 + $0x10] sm:$0xff]
    %v1688 = vld [vmem:[%s3 + $0x18] sm:$0xff]
    %v1690 = vsel %vm94, %v1684, 0
    %1692 = vmatprep.subr.mxu0 0.0
    %v1693 = vand.u32 %v1685, 4294901760
    %1694 = vmatpush1.msra.mxu0 %v1693
    %1695 = vmatprep.subr.mxu0 0.0
    %v1696 = vand.u32 %v1686, 4294901760
    %1697 = vmatpush1.msra.mxu0 %v1696
    %1698 = vmatprep.subr.mxu0 0.0
    %v1699 = vand.u32 %v1687, 4294901760
    %1700 = vmatpush1.msra.mxu0 %v1699
    %1701 = vmatprep.subr.mxu0 0.0
    %v1702 = vand.u32 %v1688, 4294901760
    %1703 = vmatpush1.msra.mxu0 %v1702
    %1704 = vmatprep.subr.mxu0 0.0
    %1705 = vmatpush1.msra.mxu0 0.0
    %1706 = vmatprep.subr.mxu0 0.0
    %1707 = vmatpush1.msra.mxu0 0.0
    %1708 = vmatprep.subr.mxu0 0.0
    %1709 = vmatpush1.msra.mxu0 0.0
    %1710 = vmatprep.subr.mxu0 0.0
    %1711 = vmatpush1.msra.mxu0 0.0
    %1712 = vmatprep.subr.mxu0 0.0
    %1713 = vmatpush1.msra.mxu0 0.0
    %1714 = vmatprep.subr.mxu0 0.0
    %1715 = vmatpush1.msra.mxu0 0.0
    %1716 = vmatprep.subr.mxu0 0.0
    %1717 = vmatpush1.msra.mxu0 0.0
    %1718 = vmatprep.subr.mxu0 0.0
    %1719 = vmatpush1.msra.mxu0 0.0
    %1720 = vmatprep.subr.mxu0 0.0
    %1721 = vmatpush1.msra.mxu0 0.0
    %1722 = vmatprep.subr.mxu0 0.0
    %1723 = vmatpush1.msra.mxu0 0.0
    %1724 = vmatprep.subr.mxu0 0.0
    %1725 = vmatpush1.msra.mxu0 0.0
    %1726 = vmatprep.subr.mxu0 0.0
    %1727 = vmatpush1.msra.mxu0 0.0
    %1728 = vmatprep.subr.mxu0 0.0
    %1729 = vmatpush1.msra.mxu0 0.0
    %1730 = vmatprep.subr.mxu0 0.0
    %1731 = vmatpush1.msra.mxu0 0.0
    %1732 = vmatprep.subr.mxu0 0.0
    %1733 = vmatpush1.msra.mxu0 0.0
    %1734 = vmatprep.subr.mxu0 0.0
    %1735 = vmatpush1.msra.mxu0 0.0
    %1736 = vmatprep.subr.mxu0 0.0
    %1737 = vmatpush1.msra.mxu0 0.0
    %1738 = vmatprep.subr.mxu0 0.0
    %1739 = vmatpush1.msra.mxu0 0.0
    %1740 = vmatprep.subr.mxu0 0.0
    %1741 = vmatpush1.msra.mxu0 0.0
    %1742 = vmatprep.subr.mxu0 0.0
    %1743 = vmatpush1.msra.mxu0 0.0
    %1744 = vmatprep.subr.mxu0 0.0
    %1745 = vmatpush1.msra.mxu0 0.0
    %1746 = vmatprep.subr.mxu0 0.0
    %1747 = vmatpush1.msra.mxu0 0.0
    %1748 = vmatprep.subr.mxu0 0.0
    %1749 = vmatpush1.msra.mxu0 0.0
    %1750 = vmatprep.subr.mxu0 0.0
    %1751 = vmatpush1.msra.mxu0 0.0
    %1752 = vmatprep.subr.mxu0 0.0
    %1753 = vmatpush1.msra.mxu0 0.0
    %1754 = vmatprep.subr.mxu0 0.0
    %1755 = vmatpush1.msra.mxu0 0.0
    %1756 = vmatprep.subr.mxu0 0.0
    %1757 = vmatpush1.msra.mxu0 0.0
    %1758 = vmatprep.subr.mxu0 0.0
    %1759 = vmatpush1.msra.mxu0 0.0
    %1760 = vmatprep.mubr.f32.mxu0 0.0
    %v1761 = vand.u32 %v1690, 4294901760
    %v1762 = vsub.f32 %v1690, %v1761
    %v1763 = vand.u32 %v1762, 4294901760
    %v1764 = vsub.f32 %v1762, %v1763
    %v1765 = vand.u32 %v1764, 4294901760
    %1766 = vmatmul.mubr.f32.gmra.mrb[0].mxu0 %v1765
    %v1767 = vpop.f32.mrb[0].mxu0
    %v1768 = vadd.f32 0.0, %v1767
    %v1769 = vpop.f32.mrb[0].mxu0
    %1770 = vdwg.mxu0
    %1771 = vmatprep.subr.mxu0 0.0
    %v1772 = vand.u32 %v1685, 4294901760
    %v1773 = vsub.f32 %v1685, %v1772
    %v1774 = vand.u32 %v1773, 4294901760
    %v1775 = vsub.f32 %v1773, %v1774
    %v1776 = vand.u32 %v1775, 4294901760
    %1777 = vmatpush1.msra.mxu0 %v1776
    %1778 = vmatprep.subr.mxu0 0.0
    %v1779 = vand.u32 %v1686, 4294901760
    %v1780 = vsub.f32 %v1686, %v1779
    %v1781 = vand.u32 %v1780, 4294901760
    %v1782 = vsub.f32 %v1780, %v1781
    %v1783 = vand.u32 %v1782, 4294901760
    %1784 = vmatpush1.msra.mxu0 %v1783
    %1785 = vmatprep.subr.mxu0 0.0
    %v1786 = vand.u32 %v1687, 4294901760
    %v1787 = vsub.f32 %v1687, %v1786
    %v1788 = vand.u32 %v1787, 4294901760
    %v1789 = vsub.f32 %v1787, %v1788
    %v1790 = vand.u32 %v1789, 4294901760
    %1791 = vmatpush1.msra.mxu0 %v1790
    %1792 = vmatprep.subr.mxu0 0.0
    %v1793 = vand.u32 %v1688, 4294901760
    %v1794 = vsub.f32 %v1688, %v1793
    %v1795 = vand.u32 %v1794, 4294901760
    %v1796 = vsub.f32 %v1794, %v1795
    %v1797 = vand.u32 %v1796, 4294901760
    %1798 = vmatpush1.msra.mxu0 %v1797
    %1799 = vmatprep.subr.mxu0 0.0
    %1800 = vmatpush1.msra.mxu0 0.0
    %1801 = vmatprep.subr.mxu0 0.0
    %1802 = vmatpush1.msra.mxu0 0.0
    %1803 = vmatprep.subr.mxu0 0.0
    %1804 = vmatpush1.msra.mxu0 0.0
    %1805 = vmatprep.subr.mxu0 0.0
    %1806 = vmatpush1.msra.mxu0 0.0
    %1807 = vmatprep.subr.mxu0 0.0
    %1808 = vmatpush1.msra.mxu0 0.0
    %1809 = vmatprep.subr.mxu0 0.0
    %1810 = vmatpush1.msra.mxu0 0.0
    %1811 = vmatprep.subr.mxu0 0.0
    %1812 = vmatpush1.msra.mxu0 0.0
    %1813 = vmatprep.subr.mxu0 0.0
    %1814 = vmatpush1.msra.mxu0 0.0
    %1815 = vmatprep.subr.mxu0 0.0
    %1816 = vmatpush1.msra.mxu0 0.0
    %1817 = vmatprep.subr.mxu0 0.0
    %1818 = vmatpush1.msra.mxu0 0.0
    %1819 = vmatprep.subr.mxu0 0.0
    %1820 = vmatpush1.msra.mxu0 0.0
    %1821 = vmatprep.subr.mxu0 0.0
    %1822 = vmatpush1.msra.mxu0 0.0
    %1823 = vmatprep.subr.mxu0 0.0
    %1824 = vmatpush1.msra.mxu0 0.0
    %1825 = vmatprep.subr.mxu0 0.0
    %1826 = vmatpush1.msra.mxu0 0.0
    %1827 = vmatprep.subr.mxu0 0.0
    %1828 = vmatpush1.msra.mxu0 0.0
    %1829 = vmatprep.subr.mxu0 0.0
    %1830 = vmatpush1.msra.mxu0 0.0
    %1831 = vmatprep.subr.mxu0 0.0
    %1832 = vmatpush1.msra.mxu0 0.0
    %1833 = vmatprep.subr.mxu0 0.0
    %1834 = vmatpush1.msra.mxu0 0.0
    %1835 = vmatprep.subr.mxu0 0.0
    %1836 = vmatpush1.msra.mxu0 0.0
    %1837 = vmatprep.subr.mxu0 0.0
    %1838 = vmatpush1.msra.mxu0 0.0
    %1839 = vmatprep.subr.mxu0 0.0
    %1840 = vmatpush1.msra.mxu0 0.0
    %1841 = vmatprep.subr.mxu0 0.0
    %1842 = vmatpush1.msra.mxu0 0.0
    %1843 = vmatprep.subr.mxu0 0.0
    %1844 = vmatpush1.msra.mxu0 0.0
    %1845 = vmatprep.subr.mxu0 0.0
    %1846 = vmatpush1.msra.mxu0 0.0
    %1847 = vmatprep.subr.mxu0 0.0
    %1848 = vmatpush1.msra.mxu0 0.0
    %1849 = vmatprep.subr.mxu0 0.0
    %1850 = vmatpush1.msra.mxu0 0.0
    %1851 = vmatprep.subr.mxu0 0.0
    %1852 = vmatpush1.msra.mxu0 0.0
    %1853 = vmatprep.subr.mxu0 0.0
    %1854 = vmatpush1.msra.mxu0 0.0
    %1855 = vmatprep.mubr.f32.mxu0 0.0
    %v1856 = vand.u32 %v1690, 4294901760
    %1857 = vmatmul.mubr.f32.gmra.mrb[0].mxu0 %v1856
    %v1858 = vpop.f32.mrb[0].mxu0
    %v1859 = vadd.f32 %v1768, %v1858
    %v1860 = vpop.f32.mrb[0].mxu0
    %1861 = vdwg.mxu0
    %1862 = vmatprep.subr.mxu0 0.0
    %v1863 = vand.u32 %v1685, 4294901760
    %v1864 = vsub.f32 %v1685, %v1863
    %1865 = vmatpush1.msra.mxu0 %v1864
    %1866 = vmatprep.subr.mxu0 0.0
    %v1867 = vand.u32 %v1686, 4294901760
    %v1868 = vsub.f32 %v1686, %v1867
    %1869 = vmatpush1.msra.mxu0 %v1868
    %1870 = vmatprep.subr.mxu0 0.0
    %v1871 = vand.u32 %v1687, 4294901760
    %v1872 = vsub.f32 %v1687, %v1871
    %1873 = vmatpush1.msra.mxu0 %v1872
    %1874 = vmatprep.subr.mxu0 0.0
    %v1875 = vand.u32 %v1688, 4294901760
    %v1876 = vsub.f32 %v1688, %v1875
    %1877 = vmatpush1.msra.mxu0 %v1876
    %1878 = vmatprep.subr.mxu0 0.0
    %1879 = vmatpush1.msra.mxu0 0.0
    %1880 = vmatprep.subr.mxu0 0.0
    %1881 = vmatpush1.msra.mxu0 0.0
    %1882 = vmatprep.subr.mxu0 0.0
    %1883 = vmatpush1.msra.mxu0 0.0
    %1884 = vmatprep.subr.mxu0 0.0
    %1885 = vmatpush1.msra.mxu0 0.0
    %1886 = vmatprep.subr.mxu0 0.0
    %1887 = vmatpush1.msra.mxu0 0.0
    %1888 = vmatprep.subr.mxu0 0.0
    %1889 = vmatpush1.msra.mxu0 0.0
    %1890 = vmatprep.subr.mxu0 0.0
    %1891 = vmatpush1.msra.mxu0 0.0
    %1892 = vmatprep.subr.mxu0 0.0
    %1893 = vmatpush1.msra.mxu0 0.0
    %1894 = vmatprep.subr.mxu0 0.0
    %1895 = vmatpush1.msra.mxu0 0.0
    %1896 = vmatprep.subr.mxu0 0.0
    %1897 = vmatpush1.msra.mxu0 0.0
    %1898 = vmatprep.subr.mxu0 0.0
    %1899 = vmatpush1.msra.mxu0 0.0
    %1900 = vmatprep.subr.mxu0 0.0
    %1901 = vmatpush1.msra.mxu0 0.0
    %1902 = vmatprep.subr.mxu0 0.0
    %1903 = vmatpush1.msra.mxu0 0.0
    %1904 = vmatprep.subr.mxu0 0.0
    %1905 = vmatpush1.msra.mxu0 0.0
    %1906 = vmatprep.subr.mxu0 0.0
    %1907 = vmatpush1.msra.mxu0 0.0
    %1908 = vmatprep.subr.mxu0 0.0
    %1909 = vmatpush1.msra.mxu0 0.0
    %1910 = vmatprep.subr.mxu0 0.0
    %1911 = vmatpush1.msra.mxu0 0.0
    %1912 = vmatprep.subr.mxu0 0.0
    %1913 = vmatpush1.msra.mxu0 0.0
    %1914 = vmatprep.subr.mxu0 0.0
    %1915 = vmatpush1.msra.mxu0 0.0
    %1916 = vmatprep.subr.mxu0 0.0
    %1917 = vmatpush1.msra.mxu0 0.0
    %1918 = vmatprep.subr.mxu0 0.0
    %1919 = vmatpush1.msra.mxu0 0.0
    %1920 = vmatprep.subr.mxu0 0.0
    %1921 = vmatpush1.msra.mxu0 0.0
    %1922 = vmatprep.subr.mxu0 0.0
    %1923 = vmatpush1.msra.mxu0 0.0
    %1924 = vmatprep.subr.mxu0 0.0
    %1925 = vmatpush1.msra.mxu0 0.0
    %1926 = vmatprep.subr.mxu0 0.0
    %1927 = vmatpush1.msra.mxu0 0.0
    %1928 = vmatprep.subr.mxu0 0.0
    %1929 = vmatpush1.msra.mxu0 0.0
    %1930 = vmatprep.subr.mxu0 0.0
    %1931 = vmatpush1.msra.mxu0 0.0
    %1932 = vmatprep.subr.mxu0 0.0
    %1933 = vmatpush1.msra.mxu0 0.0
    %1934 = vmatprep.mubr.f32.mxu0 0.0
    %v1935 = vand.u32 %v1690, 4294901760
    %v1936 = vsub.f32 %v1690, %v1935
    %1937 = vmatmul.mubr.f32.gmra.mrb[0].mxu0 %v1936
    %v1938 = vpop.f32.mrb[0].mxu0
    %v1939 = vadd.f32 %v1859, %v1938
    %v1940 = vpop.f32.mrb[0].mxu0
    %1941 = vdwg.mxu0
    %1942 = vmatprep.subr.mxu0 0.0
    %v1943 = vand.u32 %v1685, 4294901760
    %1944 = vmatpush1.msra.mxu0 %v1943
    %1945 = vmatprep.subr.mxu0 0.0
    %v1946 = vand.u32 %v1686, 4294901760
    %1947 = vmatpush1.msra.mxu0 %v1946
    %1948 = vmatprep.subr.mxu0 0.0
    %v1949 = vand.u32 %v1687, 4294901760
    %1950 = vmatpush1.msra.mxu0 %v1949
    %1951 = vmatprep.subr.mxu0 0.0
    %v1952 = vand.u32 %v1688, 4294901760
    %1953 = vmatpush1.msra.mxu0 %v1952
    %1954 = vmatprep.subr.mxu0 0.0
    %1955 = vmatpush1.msra.mxu0 0.0
    %1956 = vmatprep.subr.mxu0 0.0
    %1957 = vmatpush1.msra.mxu0 0.0
    %1958 = vmatprep.subr.mxu0 0.0
    %1959 = vmatpush1.msra.mxu0 0.0
    %1960 = vmatprep.subr.mxu0 0.0
    %1961 = vmatpush1.msra.mxu0 0.0
    %1962 = vmatprep.subr.mxu0 0.0
    %1963 = vmatpush1.msra.mxu0 0.0
    %1964 = vmatprep.subr.mxu0 0.0
    %1965 = vmatpush1.msra.mxu0 0.0
    %1966 = vmatprep.subr.mxu0 0.0
    %1967 = vmatpush1.msra.mxu0 0.0
    %1968 = vmatprep.subr.mxu0 0.0
    %1969 = vmatpush1.msra.mxu0 0.0
    %1970 = vmatprep.subr.mxu0 0.0
    %1971 = vmatpush1.msra.mxu0 0.0
    %1972 = vmatprep.subr.mxu0 0.0
    %1973 = vmatpush1.msra.mxu0 0.0
    %1974 = vmatprep.subr.mxu0 0.0
    %1975 = vmatpush1.msra.mxu0 0.0
    %1976 = vmatprep.subr.mxu0 0.0
    %1977 = vmatpush1.msra.mxu0 0.0
    %1978 = vmatprep.subr.mxu0 0.0
    %1979 = vmatpush1.msra.mxu0 0.0
    %1980 = vmatprep.subr.mxu0 0.0
    %1981 = vmatpush1.msra.mxu0 0.0
    %1982 = vmatprep.subr.mxu0 0.0
    %1983 = vmatpush1.msra.mxu0 0.0
    %1984 = vmatprep.subr.mxu0 0.0
    %1985 = vmatpush1.msra.mxu0 0.0
    %1986 = vmatprep.subr.mxu0 0.0
    %1987 = vmatpush1.msra.mxu0 0.0
    %1988 = vmatprep.subr.mxu0 0.0
    %1989 = vmatpush1.msra.mxu0 0.0
    %1990 = vmatprep.subr.mxu0 0.0
    %1991 = vmatpush1.msra.mxu0 0.0
    %1992 = vmatprep.subr.mxu0 0.0
    %1993 = vmatpush1.msra.mxu0 0.0
    %1994 = vmatprep.subr.mxu0 0.0
    %1995 = vmatpush1.msra.mxu0 0.0
    %1996 = vmatprep.subr.mxu0 0.0
    %1997 = vmatpush1.msra.mxu0 0.0
    %1998 = vmatprep.subr.mxu0 0.0
    %1999 = vmatpush1.msra.mxu0 0.0
    %2000 = vmatprep.subr.mxu0 0.0
    %2001 = vmatpush1.msra.mxu0 0.0
    %2002 = vmatprep.subr.mxu0 0.0
    %2003 = vmatpush1.msra.mxu0 0.0
    %2004 = vmatprep.subr.mxu0 0.0
    %2005 = vmatpush1.msra.mxu0 0.0
    %2006 = vmatprep.subr.mxu0 0.0
    %2007 = vmatpush1.msra.mxu0 0.0
    %2008 = vmatprep.subr.mxu0 0.0
    %2009 = vmatpush1.msra.mxu0 0.0
    %2010 = vmatprep.mubr.f32.mxu0 0.0
    %v2011 = vand.u32 %v1690, 4294901760
    %v2012 = vsub.f32 %v1690, %v2011
    %v2013 = vand.u32 %v2012, 4294901760
    %2014 = vmatmul.mubr.f32.gmra.mrb[0].mxu0 %v2013
    %v2015 = vpop.f32.mrb[0].mxu0
    %v2016 = vadd.f32 %v1939, %v2015
    %v2017 = vpop.f32.mrb[0].mxu0
    %2018 = vdwg.mxu0
    %2019 = vmatprep.subr.mxu0 0.0
    %v2020 = vand.u32 %v1685, 4294901760
    %v2021 = vsub.f32 %v1685, %v2020
    %v2022 = vand.u32 %v2021, 4294901760
    %2023 = vmatpush1.msra.mxu0 %v2022
    %2024 = vmatprep.subr.mxu0 0.0
    %v2025 = vand.u32 %v1686, 4294901760
    %v2026 = vsub.f32 %v1686, %v2025
    %v2027 = vand.u32 %v2026, 4294901760
    %2028 = vmatpush1.msra.mxu0 %v2027
    %2029 = vmatprep.subr.mxu0 0.0
    %v2030 = vand.u32 %v1687, 4294901760
    %v2031 = vsub.f32 %v1687, %v2030
    %v2032 = vand.u32 %v2031, 4294901760
    %2033 = vmatpush1.msra.mxu0 %v2032
    %2034 = vmatprep.subr.mxu0 0.0
    %v2035 = vand.u32 %v1688, 4294901760
    %v2036 = vsub.f32 %v1688, %v2035
    %v2037 = vand.u32 %v2036, 4294901760
    %2038 = vmatpush1.msra.mxu0 %v2037
    %2039 = vmatprep.subr.mxu0 0.0
    %2040 = vmatpush1.msra.mxu0 0.0
    %2041 = vmatprep.subr.mxu0 0.0
    %2042 = vmatpush1.msra.mxu0 0.0
    %2043 = vmatprep.subr.mxu0 0.0
    %2044 = vmatpush1.msra.mxu0 0.0
    %2045 = vmatprep.subr.mxu0 0.0
    %2046 = vmatpush1.msra.mxu0 0.0
    %2047 = vmatprep.subr.mxu0 0.0
    %2048 = vmatpush1.msra.mxu0 0.0
    %2049 = vmatprep.subr.mxu0 0.0
    %2050 = vmatpush1.msra.mxu0 0.0
    %2051 = vmatprep.subr.mxu0 0.0
    %2052 = vmatpush1.msra.mxu0 0.0
    %2053 = vmatprep.subr.mxu0 0.0
    %2054 = vmatpush1.msra.mxu0 0.0
    %2055 = vmatprep.subr.mxu0 0.0
    %2056 = vmatpush1.msra.mxu0 0.0
    %2057 = vmatprep.subr.mxu0 0.0
    %2058 = vmatpush1.msra.mxu0 0.0
    %2059 = vmatprep.subr.mxu0 0.0
    %2060 = vmatpush1.msra.mxu0 0.0
    %2061 = vmatprep.subr.mxu0 0.0
    %2062 = vmatpush1.msra.mxu0 0.0
    %2063 = vmatprep.subr.mxu0 0.0
    %2064 = vmatpush1.msra.mxu0 0.0
    %2065 = vmatprep.subr.mxu0 0.0
    %2066 = vmatpush1.msra.mxu0 0.0
    %2067 = vmatprep.subr.mxu0 0.0
    %2068 = vmatpush1.msra.mxu0 0.0
    %2069 = vmatprep.subr.mxu0 0.0
    %2070 = vmatpush1.msra.mxu0 0.0
    %2071 = vmatprep.subr.mxu0 0.0
    %2072 = vmatpush1.msra.mxu0 0.0
    %2073 = vmatprep.subr.mxu0 0.0
    %2074 = vmatpush1.msra.mxu0 0.0
    %2075 = vmatprep.subr.mxu0 0.0
    %2076 = vmatpush1.msra.mxu0 0.0
    %2077 = vmatprep.subr.mxu0 0.0
    %2078 = vmatpush1.msra.mxu0 0.0
    %2079 = vmatprep.subr.mxu0 0.0
    %2080 = vmatpush1.msra.mxu0 0.0
    %2081 = vmatprep.subr.mxu0 0.0
    %2082 = vmatpush1.msra.mxu0 0.0
    %2083 = vmatprep.subr.mxu0 0.0
    %2084 = vmatpush1.msra.mxu0 0.0
    %2085 = vmatprep.subr.mxu0 0.0
    %2086 = vmatpush1.msra.mxu0 0.0
    %2087 = vmatprep.subr.mxu0 0.0
    %2088 = vmatpush1.msra.mxu0 0.0
    %2089 = vmatprep.subr.mxu0 0.0
    %2090 = vmatpush1.msra.mxu0 0.0
    %2091 = vmatprep.subr.mxu0 0.0
    %2092 = vmatpush1.msra.mxu0 0.0
    %2093 = vmatprep.subr.mxu0 0.0
    %2094 = vmatpush1.msra.mxu0 0.0
    %2095 = vmatprep.mubr.f32.mxu0 0.0
    %v2096 = vand.u32 %v1690, 4294901760
    %2097 = vmatmul.mubr.f32.gmra.mrb[0].mxu0 %v2096
    %v2098 = vpop.f32.mrb[0].mxu0
    %v2099 = vadd.f32 %v2016, %v2098
    %v2100 = vpop.f32.mrb[0].mxu0
    %2101 = vdwg.mxu0
    %2102 = vmatprep.subr.mxu0 0.0
    %v2103 = vand.u32 %v1685, 4294901760
    %2104 = vmatpush1.msra.mxu0 %v2103
    %2105 = vmatprep.subr.mxu0 0.0
    %v2106 = vand.u32 %v1686, 4294901760
    %2107 = vmatpush1.msra.mxu0 %v2106
    %2108 = vmatprep.subr.mxu0 0.0
    %v2109 = vand.u32 %v1687, 4294901760
    %2110 = vmatpush1.msra.mxu0 %v2109
    %2111 = vmatprep.subr.mxu0 0.0
    %v2112 = vand.u32 %v1688, 4294901760
    %2113 = vmatpush1.msra.mxu0 %v2112
    %2114 = vmatprep.subr.mxu0 0.0
    %2115 = vmatpush1.msra.mxu0 0.0
    %2116 = vmatprep.subr.mxu0 0.0
    %2117 = vmatpush1.msra.mxu0 0.0
    %2118 = vmatprep.subr.mxu0 0.0
    %2119 = vmatpush1.msra.mxu0 0.0
    %2120 = vmatprep.subr.mxu0 0.0
    %2121 = vmatpush1.msra.mxu0 0.0
    %2122 = vmatprep.subr.mxu0 0.0
    %2123 = vmatpush1.msra.mxu0 0.0
    %2124 = vmatprep.subr.mxu0 0.0
    %2125 = vmatpush1.msra.mxu0 0.0
    %2126 = vmatprep.subr.mxu0 0.0
    %2127 = vmatpush1.msra.mxu0 0.0
    %2128 = vmatprep.subr.mxu0 0.0
    %2129 = vmatpush1.msra.mxu0 0.0
    %2130 = vmatprep.subr.mxu0 0.0
    %2131 = vmatpush1.msra.mxu0 0.0
    %2132 = vmatprep.subr.mxu0 0.0
    %2133 = vmatpush1.msra.mxu0 0.0
    %2134 = vmatprep.subr.mxu0 0.0
    %2135 = vmatpush1.msra.mxu0 0.0
    %2136 = vmatprep.subr.mxu0 0.0
    %2137 = vmatpush1.msra.mxu0 0.0
    %2138 = vmatprep.subr.mxu0 0.0
    %2139 = vmatpush1.msra.mxu0 0.0
    %2140 = vmatprep.subr.mxu0 0.0
    %2141 = vmatpush1.msra.mxu0 0.0
    %2142 = vmatprep.subr.mxu0 0.0
    %2143 = vmatpush1.msra.mxu0 0.0
    %2144 = vmatprep.subr.mxu0 0.0
    %2145 = vmatpush1.msra.mxu0 0.0
    %2146 = vmatprep.subr.mxu0 0.0
    %2147 = vmatpush1.msra.mxu0 0.0
    %2148 = vmatprep.subr.mxu0 0.0
    %2149 = vmatpush1.msra.mxu0 0.0
    %2150 = vmatprep.subr.mxu0 0.0
    %2151 = vmatpush1.msra.mxu0 0.0
    %2152 = vmatprep.subr.mxu0 0.0
    %2153 = vmatpush1.msra.mxu0 0.0
    %2154 = vmatprep.subr.mxu0 0.0
    %2155 = vmatpush1.msra.mxu0 0.0
    %2156 = vmatprep.subr.mxu0 0.0
    %2157 = vmatpush1.msra.mxu0 0.0
    %2158 = vmatprep.subr.mxu0 0.0
    %2159 = vmatpush1.msra.mxu0 0.0
    %2160 = vmatprep.subr.mxu0 0.0
    %2161 = vmatpush1.msra.mxu0 0.0
    %2162 = vmatprep.subr.mxu0 0.0
    %2163 = vmatpush1.msra.mxu0 0.0
    %2164 = vmatprep.subr.mxu0 0.0
    %2165 = vmatpush1.msra.mxu0 0.0
    %2166 = vmatprep.subr.mxu0 0.0
    %2167 = vmatpush1.msra.mxu0 0.0
    %2168 = vmatprep.subr.mxu0 0.0
    %2169 = vmatpush1.msra.mxu0 0.0
    %2170 = vmatprep.mubr.f32.mxu0 0.0
    %v2171 = vand.u32 %v1690, 4294901760
    %2172 = vmatmul.mubr.f32.gmra.mrb[0].mxu0 %v2171
    %v2173 = vpop.f32.mrb[0].mxu0
    %v2174 = vadd.f32 %v2099, %v2173
    %v2175 = vpop.f32.mrb[0].mxu0
    %2176 = vdwg.mxu0
    %v2177 = vmax.f32 %v2174, 0.0
    %v2178 = vadd.f32 %v2177, 1e-05
    %v2179 = vrsqrt.pop %v2178
    %v2180 = vld [vmem:[#allocation5] sm:$0xff]
    %v2181 = vld [vmem:[#allocation5 + $0x8] sm:$0xff]
    %v2182 = vld [vmem:[#allocation5 + $0x10] sm:$0xff]
    %v2183 = vld [vmem:[#allocation5 + $0x18] sm:$0xff]
    %v2184 = vld [vmem:[#allocation5 + $0x20] sm:$0xff]
    %v2185 = vld [vmem:[#allocation5 + $0x28] sm:$0xff]
    %v2186 = vld [vmem:[#allocation5 + $0x30] sm:$0xff]
    %v2187 = vld [vmem:[#allocation5 + $0x38] sm:$0xff]
    %vm2188 = vcmask 130048
    %v2190 = vsel %vm2188, %v2179, 0
    %v2192 = vand.u32 %v2181, 4294901760
    %2193 = vmatprep.subr.mxu0 %v2192
    %v2194 = vand.u32 %v2180, 4294901760
    %2195 = vmatpush1.msra.mxu0 %v2194
    %v2196 = vand.u32 %v2185, 4294901760
    %2197 = vmatprep.subr.mxu0 %v2196
    %v2198 = vand.u32 %v2184, 4294901760
    %2199 = vmatpush1.msra.mxu0 %v2198
    %2200 = vmatprep.subr.mxu0 0.0
    %2201 = vmatpush1.msra.mxu0 0.0
    %2202 = vmatprep.subr.mxu0 0.0
    %2203 = vmatpush1.msra.mxu0 0.0
    %2204 = vmatprep.subr.mxu0 0.0
    %2205 = vmatpush1.msra.mxu0 0.0
    %2206 = vmatprep.subr.mxu0 0.0
    %2207 = vmatpush1.msra.mxu0 0.0
    %2208 = vmatprep.subr.mxu0 0.0
    %2209 = vmatpush1.msra.mxu0 0.0
    %2210 = vmatprep.subr.mxu0 0.0
    %2211 = vmatpush1.msra.mxu0 0.0
    %2212 = vmatprep.subr.mxu0 0.0
    %2213 = vmatpush1.msra.mxu0 0.0
    %2214 = vmatprep.subr.mxu0 0.0
    %2215 = vmatpush1.msra.mxu0 0.0
    %2216 = vmatprep.subr.mxu0 0.0
    %2217 = vmatpush1.msra.mxu0 0.0
    %2218 = vmatprep.subr.mxu0 0.0
    %2219 = vmatpush1.msra.mxu0 0.0
    %2220 = vmatprep.subr.mxu0 0.0
    %2221 = vmatpush1.msra.mxu0 0.0
    %2222 = vmatprep.subr.mxu0 0.0
    %2223 = vmatpush1.msra.mxu0 0.0
    %2224 = vmatprep.subr.mxu0 0.0
    %2225 = vmatpush1.msra.mxu0 0.0
    %2226 = vmatprep.subr.mxu0 0.0
    %2227 = vmatpush1.msra.mxu0 0.0
    %2228 = vmatprep.subr.mxu0 0.0
    %2229 = vmatpush1.msra.mxu0 0.0
    %2230 = vmatprep.subr.mxu0 0.0
    %2231 = vmatpush1.msra.mxu0 0.0
    %2232 = vmatprep.subr.mxu0 0.0
    %2233 = vmatpush1.msra.mxu0 0.0
    %2234 = vmatprep.subr.mxu0 0.0
    %2235 = vmatpush1.msra.mxu0 0.0
    %2236 = vmatprep.subr.mxu0 0.0
    %2237 = vmatpush1.msra.mxu0 0.0
    %2238 = vmatprep.subr.mxu0 0.0
    %2239 = vmatpush1.msra.mxu0 0.0
    %2240 = vmatprep.subr.mxu0 0.0
    %2241 = vmatpush1.msra.mxu0 0.0
    %2242 = vmatprep.subr.mxu0 0.0
    %2243 = vmatpush1.msra.mxu0 0.0
    %2244 = vmatprep.subr.mxu0 0.0
    %2245 = vmatpush1.msra.mxu0 0.0
    %2246 = vmatprep.subr.mxu0 0.0
    %2247 = vmatpush1.msra.mxu0 0.0
    %2248 = vmatprep.subr.mxu0 0.0
    %2249 = vmatpush1.msra.mxu0 0.0
    %2250 = vmatprep.subr.mxu0 0.0
    %2251 = vmatpush1.msra.mxu0 0.0
    %2252 = vmatprep.subr.mxu0 0.0
    %2253 = vmatpush1.msra.mxu0 0.0
    %2254 = vmatprep.subr.mxu0 0.0
    %2255 = vmatpush1.msra.mxu0 0.0
    %2256 = vmatprep.subr.mxu0 0.0
    %2257 = vmatpush1.msra.mxu0 0.0
    %2258 = vmatprep.subr.mxu0 0.0
    %2259 = vmatpush1.msra.mxu0 0.0
    %2260 = vmatprep.mubr.f32.mxu0 0.0
    %v2261 = vand.u32 %v2190, 4294901760
    %v2262 = vsub.f32 %v2190, %v2261
    %v2263 = vand.u32 %v2262, 4294901760
    %v2264 = vsub.f32 %v2262, %v2263
    %v2265 = vand.u32 %v2264, 4294901760
    %2266 = vmatmul.mubr.f32.gmra.mrb[0].mxu0 %v2265
    %v2267 = vpop.f32.mrb[0].mxu0
    %v2268 = vadd.f32 0.0, %v2267
    %v2269 = vpop.f32.mrb[0].mxu0
    %v2270 = vadd.f32 0.0, %v2269
    %2271 = vdwg.mxu0
    %v2272 = vand.u32 %v2181, 4294901760
    %v2273 = vsub.f32 %v2181, %v2272
    %v2274 = vand.u32 %v2273, 4294901760
    %v2275 = vsub.f32 %v2273, %v2274
    %v2276 = vand.u32 %v2275, 4294901760
    %2277 = vmatprep.subr.mxu0 %v2276
    %v2278 = vand.u32 %v2180, 4294901760
    %v2279 = vsub.f32 %v2180, %v2278
    %v2280 = vand.u32 %v2279, 4294901760
    %v2281 = vsub.f32 %v2279, %v2280
    %v2282 = vand.u32 %v2281, 4294901760
    %2283 = vmatpush1.msra.mxu0 %v2282
    %v2284 = vand.u32 %v2185, 4294901760
    %v2285 = vsub.f32 %v2185, %v2284
    %v2286 = vand.u32 %v2285, 4294901760
    %v2287 = vsub.f32 %v2285, %v2286
    %v2288 = vand.u32 %v2287, 4294901760
    %2289 = vmatprep.subr.mxu0 %v2288
    %v2290 = vand.u32 %v2184, 4294901760
    %v2291 = vsub.f32 %v2184, %v2290
    %v2292 = vand.u32 %v2291, 4294901760
    %v2293 = vsub.f32 %v2291, %v2292
    %v2294 = vand.u32 %v2293, 4294901760
    %2295 = vmatpush1.msra.mxu0 %v2294
    %2296 = vmatprep.subr.mxu0 0.0
    %2297 = vmatpush1.msra.mxu0 0.0
    %2298 = vmatprep.subr.mxu0 0.0
    %2299 = vmatpush1.msra.mxu0 0.0
    %2300 = vmatprep.subr.mxu0 0.0
    %2301 = vmatpush1.msra.mxu0 0.0
    %2302 = vmatprep.subr.mxu0 0.0
    %2303 = vmatpush1.msra.mxu0 0.0
    %2304 = vmatprep.subr.mxu0 0.0
    %2305 = vmatpush1.msra.mxu0 0.0
    %2306 = vmatprep.subr.mxu0 0.0
    %2307 = vmatpush1.msra.mxu0 0.0
    %2308 = vmatprep.subr.mxu0 0.0
    %2309 = vmatpush1.msra.mxu0 0.0
    %2310 = vmatprep.subr.mxu0 0.0
    %2311 = vmatpush1.msra.mxu0 0.0
    %2312 = vmatprep.subr.mxu0 0.0
    %2313 = vmatpush1.msra.mxu0 0.0
    %2314 = vmatprep.subr.mxu0 0.0
    %2315 = vmatpush1.msra.mxu0 0.0
    %2316 = vmatprep.subr.mxu0 0.0
    %2317 = vmatpush1.msra.mxu0 0.0
    %2318 = vmatprep.subr.mxu0 0.0
    %2319 = vmatpush1.msra.mxu0 0.0
    %2320 = vmatprep.subr.mxu0 0.0
    %2321 = vmatpush1.msra.mxu0 0.0
    %2322 = vmatprep.subr.mxu0 0.0
    %2323 = vmatpush1.msra.mxu0 0.0
    %2324 = vmatprep.subr.mxu0 0.0
    %2325 = vmatpush1.msra.mxu0 0.0
    %2326 = vmatprep.subr.mxu0 0.0
    %2327 = vmatpush1.msra.mxu0 0.0
    %2328 = vmatprep.subr.mxu0 0.0
    %2329 = vmatpush1.msra.mxu0 0.0
    %2330 = vmatprep.subr.mxu0 0.0
    %2331 = vmatpush1.msra.mxu0 0.0
    %2332 = vmatprep.subr.mxu0 0.0
    %2333 = vmatpush1.msra.mxu0 0.0
    %2334 = vmatprep.subr.mxu0 0.0
    %2335 = vmatpush1.msra.mxu0 0.0
    %2336 = vmatprep.subr.mxu0 0.0
    %2337 = vmatpush1.msra.mxu0 0.0
    %2338 = vmatprep.subr.mxu0 0.0
    %2339 = vmatpush1.msra.mxu0 0.0
    %2340 = vmatprep.subr.mxu0 0.0
    %2341 = vmatpush1.msra.mxu0 0.0
    %2342 = vmatprep.subr.mxu0 0.0
    %2343 = vmatpush1.msra.mxu0 0.0
    %2344 = vmatprep.subr.mxu0 0.0
    %2345 = vmatpush1.msra.mxu0 0.0
    %2346 = vmatprep.subr.mxu0 0.0
    %2347 = vmatpush1.msra.mxu0 0.0
    %2348 = vmatprep.subr.mxu0 0.0
    %2349 = vmatpush1.msra.mxu0 0.0
    %2350 = vmatprep.subr.mxu0 0.0
    %2351 = vmatpush1.msra.mxu0 0.0
    %2352 = vmatprep.subr.mxu0 0.0
    %2353 = vmatpush1.msra.mxu0 0.0
    %2354 = vmatprep.subr.mxu0 0.0
    %2355 = vmatpush1.msra.mxu0 0.0
    %2356 = vmatprep.mubr.f32.mxu0 0.0
    %v2357 = vand.u32 %v2190, 4294901760
    %2358 = vmatmul.mubr.f32.gmra.mrb[0].mxu0 %v2357
    %v2359 = vpop.f32.mrb[0].mxu0
    %v2360 = vadd.f32 %v2268, %v2359
    %v2361 = vpop.f32.mrb[0].mxu0
    %v2362 = vadd.f32 %v2270, %v2361
    %2363 = vdwg.mxu0
    %v2364 = vand.u32 %v2181, 4294901760
    %v2365 = vsub.f32 %v2181, %v2364
    %2366 = vmatprep.subr.mxu0 %v2365
    %v2367 = vand.u32 %v2180, 4294901760
    %v2368 = vsub.f32 %v2180, %v2367
    %2369 = vmatpush1.msra.mxu0 %v2368
    %v2370 = vand.u32 %v2185, 4294901760
    %v2371 = vsub.f32 %v2185, %v2370
    %2372 = vmatprep.subr.mxu0 %v2371
    %v2373 = vand.u32 %v2184, 4294901760
    %v2374 = vsub.f32 %v2184, %v2373
    %2375 = vmatpush1.msra.mxu0 %v2374
    %2376 = vmatprep.subr.mxu0 0.0
    %2377 = vmatpush1.msra.mxu0 0.0
    %2378 = vmatprep.subr.mxu0 0.0
    %2379 = vmatpush1.msra.mxu0 0.0
    %2380 = vmatprep.subr.mxu0 0.0
    %2381 = vmatpush1.msra.mxu0 0.0
    %2382 = vmatprep.subr.mxu0 0.0
    %2383 = vmatpush1.msra.mxu0 0.0
    %2384 = vmatprep.subr.mxu0 0.0
    %2385 = vmatpush1.msra.mxu0 0.0
    %2386 = vmatprep.subr.mxu0 0.0
    %2387 = vmatpush1.msra.mxu0 0.0
    %2388 = vmatprep.subr.mxu0 0.0
    %2389 = vmatpush1.msra.mxu0 0.0
    %2390 = vmatprep.subr.mxu0 0.0
    %2391 = vmatpush1.msra.mxu0 0.0
    %2392 = vmatprep.subr.mxu0 0.0
    %2393 = vmatpush1.msra.mxu0 0.0
    %2394 = vmatprep.subr.mxu0 0.0
    %2395 = vmatpush1.msra.mxu0 0.0
    %2396 = vmatprep.subr.mxu0 0.0
    %2397 = vmatpush1.msra.mxu0 0.0
    %2398 = vmatprep.subr.mxu0 0.0
    %2399 = vmatpush1.msra.mxu0 0.0
    %2400 = vmatprep.subr.mxu0 0.0
    %2401 = vmatpush1.msra.mxu0 0.0
    %2402 = vmatprep.subr.mxu0 0.0
    %2403 = vmatpush1.msra.mxu0 0.0
    %2404 = vmatprep.subr.mxu0 0.0
    %2405 = vmatpush1.msra.mxu0 0.0
    %2406 = vmatprep.subr.mxu0 0.0
    %2407 = vmatpush1.msra.mxu0 0.0
    %2408 = vmatprep.subr.mxu0 0.0
    %2409 = vmatpush1.msra.mxu0 0.0
    %2410 = vmatprep.subr.mxu0 0.0
    %2411 = vmatpush1.msra.mxu0 0.0
    %2412 = vmatprep.subr.mxu0 0.0
    %2413 = vmatpush1.msra.mxu0 0.0
    %2414 = vmatprep.subr.mxu0 0.0
    %2415 = vmatpush1.msra.mxu0 0.0
    %2416 = vmatprep.subr.mxu0 0.0
    %2417 = vmatpush1.msra.mxu0 0.0
    %2418 = vmatprep.subr.mxu0 0.0
    %2419 = vmatpush1.msra.mxu0 0.0
    %2420 = vmatprep.subr.mxu0 0.0
    %2421 = vmatpush1.msra.mxu0 0.0
    %2422 = vmatprep.subr.mxu0 0.0
    %2423 = vmatpush1.msra.mxu0 0.0
    %2424 = vmatprep.subr.mxu0 0.0
    %2425 = vmatpush1.msra.mxu0 0.0
    %2426 = vmatprep.subr.mxu0 0.0
    %2427 = vmatpush1.msra.mxu0 0.0
    %2428 = vmatprep.subr.mxu0 0.0
    %2429 = vmatpush1.msra.mxu0 0.0
    %2430 = vmatprep.subr.mxu0 0.0
    %2431 = vmatpush1.msra.mxu0 0.0
    %2432 = vmatprep.subr.mxu0 0.0
    %2433 = vmatpush1.msra.mxu0 0.0
    %2434 = vmatprep.subr.mxu0 0.0
    %2435 = vmatpush1.msra.mxu0 0.0
    %2436 = vmatprep.mubr.f32.mxu0 0.0
    %v2437 = vand.u32 %v2190, 4294901760
    %v2438 = vsub.f32 %v2190, %v2437
    %2439 = vmatmul.mubr.f32.gmra.mrb[0].mxu0 %v2438
    %v2440 = vpop.f32.mrb[0].mxu0
    %v2441 = vadd.f32 %v2360, %v2440
    %v2442 = vpop.f32.mrb[0].mxu0
    %v2443 = vadd.f32 %v2362, %v2442
    %2444 = vdwg.mxu0
    %v2445 = vand.u32 %v2181, 4294901760
    %2446 = vmatprep.subr.mxu0 %v2445
    %v2447 = vand.u32 %v2180, 4294901760
    %2448 = vmatpush1.msra.mxu0 %v2447
    %v2449 = vand.u32 %v2185, 4294901760
    %2450 = vmatprep.subr.mxu0 %v2449
    %v2451 = vand.u32 %v2184, 4294901760
    %2452 = vmatpush1.msra.mxu0 %v2451
    %2453 = vmatprep.subr.mxu0 0.0
    %2454 = vmatpush1.msra.mxu0 0.0
    %2455 = vmatprep.subr.mxu0 0.0
    %2456 = vmatpush1.msra.mxu0 0.0
    %2457 = vmatprep.subr.mxu0 0.0
    %2458 = vmatpush1.msra.mxu0 0.0
    %2459 = vmatprep.subr.mxu0 0.0
    %2460 = vmatpush1.msra.mxu0 0.0
    %2461 = vmatprep.subr.mxu0 0.0
    %2462 = vmatpush1.msra.mxu0 0.0
    %2463 = vmatprep.subr.mxu0 0.0
    %2464 = vmatpush1.msra.mxu0 0.0
    %2465 = vmatprep.subr.mxu0 0.0
    %2466 = vmatpush1.msra.mxu0 0.0
    %2467 = vmatprep.subr.mxu0 0.0
    %2468 = vmatpush1.msra.mxu0 0.0
    %2469 = vmatprep.subr.mxu0 0.0
    %2470 = vmatpush1.msra.mxu0 0.0
    %2471 = vmatprep.subr.mxu0 0.0
    %2472 = vmatpush1.msra.mxu0 0.0
    %2473 = vmatprep.subr.mxu0 0.0
    %2474 = vmatpush1.msra.mxu0 0.0
    %2475 = vmatprep.subr.mxu0 0.0
    %2476 = vmatpush1.msra.mxu0 0.0
    %2477 = vmatprep.subr.mxu0 0.0
    %2478 = vmatpush1.msra.mxu0 0.0
    %2479 = vmatprep.subr.mxu0 0.0
    %2480 = vmatpush1.msra.mxu0 0.0
    %2481 = vmatprep.subr.mxu0 0.0
    %2482 = vmatpush1.msra.mxu0 0.0
    %2483 = vmatprep.subr.mxu0 0.0
    %2484 = vmatpush1.msra.mxu0 0.0
    %2485 = vmatprep.subr.mxu0 0.0
    %2486 = vmatpush1.msra.mxu0 0.0
    %2487 = vmatprep.subr.mxu0 0.0
    %2488 = vmatpush1.msra.mxu0 0.0
    %2489 = vmatprep.subr.mxu0 0.0
    %2490 = vmatpush1.msra.mxu0 0.0
    %2491 = vmatprep.subr.mxu0 0.0
    %2492 = vmatpush1.msra.mxu0 0.0
    %2493 = vmatprep.subr.mxu0 0.0
    %2494 = vmatpush1.msra.mxu0 0.0
    %2495 = vmatprep.subr.mxu0 0.0
    %2496 = vmatpush1.msra.mxu0 0.0
    %2497 = vmatprep.subr.mxu0 0.0
    %2498 = vmatpush1.msra.mxu0 0.0
    %2499 = vmatprep.subr.mxu0 0.0
    %2500 = vmatpush1.msra.mxu0 0.0
    %2501 = vmatprep.subr.mxu0 0.0
    %2502 = vmatpush1.msra.mxu0 0.0
    %2503 = vmatprep.subr.mxu0 0.0
    %2504 = vmatpush1.msra.mxu0 0.0
    %2505 = vmatprep.subr.mxu0 0.0
    %2506 = vmatpush1.msra.mxu0 0.0
    %2507 = vmatprep.subr.mxu0 0.0
    %2508 = vmatpush1.msra.mxu0 0.0
    %2509 = vmatprep.subr.mxu0 0.0
    %2510 = vmatpush1.msra.mxu0 0.0
    %2511 = vmatprep.subr.mxu0 0.0
    %2512 = vmatpush1.msra.mxu0 0.0
    %2513 = vmatprep.mubr.f32.mxu0 0.0
    %v2514 = vand.u32 %v2190, 4294901760
    %v2515 = vsub.f32 %v2190, %v2514
    %v2516 = vand.u32 %v2515, 4294901760
    %2517 = vmatmul.mubr.f32.gmra.mrb[0].mxu0 %v2516
    %v2518 = vpop.f32.mrb[0].mxu0
    %v2519 = vadd.f32 %v2441, %v2518
    %v2520 = vpop.f32.mrb[0].mxu0
    %v2521 = vadd.f32 %v2443, %v2520
    %2522 = vdwg.mxu0
    %v2523 = vand.u32 %v2181, 4294901760
    %v2524 = vsub.f32 %v2181, %v2523
    %v2525 = vand.u32 %v2524, 4294901760
    %2526 = vmatprep.subr.mxu0 %v2525
    %v2527 = vand.u32 %v2180, 4294901760
    %v2528 = vsub.f32 %v2180, %v2527
    %v2529 = vand.u32 %v2528, 4294901760
    %2530 = vmatpush1.msra.mxu0 %v2529
    %v2531 = vand.u32 %v2185, 4294901760
    %v2532 = vsub.f32 %v2185, %v2531
    %v2533 = vand.u32 %v2532, 4294901760
    %2534 = vmatprep.subr.mxu0 %v2533
    %v2535 = vand.u32 %v2184, 4294901760
    %v2536 = vsub.f32 %v2184, %v2535
    %v2537 = vand.u32 %v2536, 4294901760
    %2538 = vmatpush1.msra.mxu0 %v2537
    %2539 = vmatprep.subr.mxu0 0.0
    %2540 = vmatpush1.msra.mxu0 0.0
    %2541 = vmatprep.subr.mxu0 0.0
    %2542 = vmatpush1.msra.mxu0 0.0
    %2543 = vmatprep.subr.mxu0 0.0
    %2544 = vmatpush1.msra.mxu0 0.0
    %2545 = vmatprep.subr.mxu0 0.0
    %2546 = vmatpush1.msra.mxu0 0.0
    %2547 = vmatprep.subr.mxu0 0.0
    %2548 = vmatpush1.msra.mxu0 0.0
    %2549 = vmatprep.subr.mxu0 0.0
    %2550 = vmatpush1.msra.mxu0 0.0
    %2551 = vmatprep.subr.mxu0 0.0
    %2552 = vmatpush1.msra.mxu0 0.0
    %2553 = vmatprep.subr.mxu0 0.0
    %2554 = vmatpush1.msra.mxu0 0.0
    %2555 = vmatprep.subr.mxu0 0.0
    %2556 = vmatpush1.msra.mxu0 0.0
    %2557 = vmatprep.subr.mxu0 0.0
    %2558 = vmatpush1.msra.mxu0 0.0
    %2559 = vmatprep.subr.mxu0 0.0
    %2560 = vmatpush1.msra.mxu0 0.0
    %2561 = vmatprep.subr.mxu0 0.0
    %2562 = vmatpush1.msra.mxu0 0.0
    %2563 = vmatprep.subr.mxu0 0.0
    %2564 = vmatpush1.msra.mxu0 0.0
    %2565 = vmatprep.subr.mxu0 0.0
    %2566 = vmatpush1.msra.mxu0 0.0
    %2567 = vmatprep.subr.mxu0 0.0
    %2568 = vmatpush1.msra.mxu0 0.0
    %2569 = vmatprep.subr.mxu0 0.0
    %2570 = vmatpush1.msra.mxu0 0.0
    %2571 = vmatprep.subr.mxu0 0.0
    %2572 = vmatpush1.msra.mxu0 0.0
    %2573 = vmatprep.subr.mxu0 0.0
    %2574 = vmatpush1.msra.mxu0 0.0
    %2575 = vmatprep.subr.mxu0 0.0
    %2576 = vmatpush1.msra.mxu0 0.0
    %2577 = vmatprep.subr.mxu0 0.0
    %2578 = vmatpush1.msra.mxu0 0.0
    %2579 = vmatprep.subr.mxu0 0.0
    %2580 = vmatpush1.msra.mxu0 0.0
    %2581 = vmatprep.subr.mxu0 0.0
    %2582 = vmatpush1.msra.mxu0 0.0
    %2583 = vmatprep.subr.mxu0 0.0
    %2584 = vmatpush1.msra.mxu0 0.0
    %2585 = vmatprep.subr.mxu0 0.0
    %2586 = vmatpush1.msra.mxu0 0.0
    %2587 = vmatprep.subr.mxu0 0.0
    %2588 = vmatpush1.msra.mxu0 0.0
    %2589 = vmatprep.subr.mxu0 0.0
    %2590 = vmatpush1.msra.mxu0 0.0
    %2591 = vmatprep.subr.mxu0 0.0
    %2592 = vmatpush1.msra.mxu0 0.0
    %2593 = vmatprep.subr.mxu0 0.0
    %2594 = vmatpush1.msra.mxu0 0.0
    %2595 = vmatprep.subr.mxu0 0.0
    %2596 = vmatpush1.msra.mxu0 0.0
    %2597 = vmatprep.subr.mxu0 0.0
    %2598 = vmatpush1.msra.mxu0 0.0
    %2599 = vmatprep.mubr.f32.mxu0 0.0
    %v2600 = vand.u32 %v2190, 4294901760
    %2601 = vmatmul.mubr.f32.gmra.mrb[0].mxu0 %v2600
    %v2602 = vpop.f32.mrb[0].mxu0
    %v2603 = vadd.f32 %v2519, %v2602
    %v2604 = vpop.f32.mrb[0].mxu0
    %v2605 = vadd.f32 %v2521, %v2604
    %2606 = vdwg.mxu0
    %v2607 = vand.u32 %v2181, 4294901760
    %2608 = vmatprep.subr.mxu0 %v2607
    %v2609 = vand.u32 %v2180, 4294901760
    %2610 = vmatpush1.msra.mxu0 %v2609
    %v2611 = vand.u32 %v2185, 4294901760
    %2612 = vmatprep.subr.mxu0 %v2611
    %v2613 = vand.u32 %v2184, 4294901760
    %2614 = vmatpush1.msra.mxu0 %v2613
    %2615 = vmatprep.subr.mxu0 0.0
    %2616 = vmatpush1.msra.mxu0 0.0
    %2617 = vmatprep.subr.mxu0 0.0
    %2618 = vmatpush1.msra.mxu0 0.0
    %2619 = vmatprep.subr.mxu0 0.0
    %2620 = vmatpush1.msra.mxu0 0.0
    %2621 = vmatprep.subr.mxu0 0.0
    %2622 = vmatpush1.msra.mxu0 0.0
    %2623 = vmatprep.subr.mxu0 0.0
    %2624 = vmatpush1.msra.mxu0 0.0
    %2625 = vmatprep.subr.mxu0 0.0
    %2626 = vmatpush1.msra.mxu0 0.0
    %2627 = vmatprep.subr.mxu0 0.0
    %2628 = vmatpush1.msra.mxu0 0.0
    %2629 = vmatprep.subr.mxu0 0.0
    %2630 = vmatpush1.msra.mxu0 0.0
    %2631 = vmatprep.subr.mxu0 0.0
    %2632 = vmatpush1.msra.mxu0 0.0
    %2633 = vmatprep.subr.mxu0 0.0
    %2634 = vmatpush1.msra.mxu0 0.0
    %2635 = vmatprep.subr.mxu0 0.0
    %2636 = vmatpush1.msra.mxu0 0.0
    %2637 = vmatprep.subr.mxu0 0.0
    %2638 = vmatpush1.msra.mxu0 0.0
    %2639 = vmatprep.subr.mxu0 0.0
    %2640 = vmatpush1.msra.mxu0 0.0
    %2641 = vmatprep.subr.mxu0 0.0
    %2642 = vmatpush1.msra.mxu0 0.0
    %2643 = vmatprep.subr.mxu0 0.0
    %2644 = vmatpush1.msra.mxu0 0.0
    %2645 = vmatprep.subr.mxu0 0.0
    %2646 = vmatpush1.msra.mxu0 0.0
    %2647 = vmatprep.subr.mxu0 0.0
    %2648 = vmatpush1.msra.mxu0 0.0
    %2649 = vmatprep.subr.mxu0 0.0
    %2650 = vmatpush1.msra.mxu0 0.0
    %2651 = vmatprep.subr.mxu0 0.0
    %2652 = vmatpush1.msra.mxu0 0.0
    %2653 = vmatprep.subr.mxu0 0.0
    %2654 = vmatpush1.msra.mxu0 0.0
    %2655 = vmatprep.subr.mxu0 0.0
    %2656 = vmatpush1.msra.mxu0 0.0
    %2657 = vmatprep.subr.mxu0 0.0
    %2658 = vmatpush1.msra.mxu0 0.0
    %2659 = vmatprep.subr.mxu0 0.0
    %2660 = vmatpush1.msra.mxu0 0.0
    %2661 = vmatprep.subr.mxu0 0.0
    %2662 = vmatpush1.msra.mxu0 0.0
    %2663 = vmatprep.subr.mxu0 0.0
    %2664 = vmatpush1.msra.mxu0 0.0
    %2665 = vmatprep.subr.mxu0 0.0
    %2666 = vmatpush1.msra.mxu0 0.0
    %2667 = vmatprep.subr.mxu0 0.0
    %2668 = vmatpush1.msra.mxu0 0.0
    %2669 = vmatprep.subr.mxu0 0.0
    %2670 = vmatpush1.msra.mxu0 0.0
    %2671 = vmatprep.subr.mxu0 0.0
    %2672 = vmatpush1.msra.mxu0 0.0
    %2673 = vmatprep.subr.mxu0 0.0
    %2674 = vmatpush1.msra.mxu0 0.0
    %2675 = vmatprep.mubr.f32.mxu0 0.0
    %v2676 = vand.u32 %v2190, 4294901760
    %2677 = vmatmul.mubr.f32.gmra.mrb[0].mxu0 %v2676
    %v2678 = vpop.f32.mrb[0].mxu0
    %v2679 = vadd.f32 %v2603, %v2678
    %v2680 = vpop.f32.mrb[0].mxu0
    %v2681 = vadd.f32 %v2605, %v2680
    %2682 = vdwg.mxu0
    %v2683 = vand.u32 %v2183, 4294901760
    %2684 = vmatprep.subr.mxu0 %v2683
    %v2685 = vand.u32 %v2182, 4294901760
    %2686 = vmatpush1.msra.mxu0 %v2685
    %v2687 = vand.u32 %v2187, 4294901760
    %2688 = vmatprep.subr.mxu0 %v2687
    %v2689 = vand.u32 %v2186, 4294901760
    %2690 = vmatpush1.msra.mxu0 %v2689
    %2691 = vmatprep.subr.mxu0 0.0
    %2692 = vmatpush1.msra.mxu0 0.0
    %2693 = vmatprep.subr.mxu0 0.0
    %2694 = vmatpush1.msra.mxu0 0.0
    %2695 = vmatprep.subr.mxu0 0.0
    %2696 = vmatpush1.msra.mxu0 0.0
    %2697 = vmatprep.subr.mxu0 0.0
    %2698 = vmatpush1.msra.mxu0 0.0
    %2699 = vmatprep.subr.mxu0 0.0
    %2700 = vmatpush1.msra.mxu0 0.0
    %2701 = vmatprep.subr.mxu0 0.0
    %2702 = vmatpush1.msra.mxu0 0.0
    %2703 = vmatprep.subr.mxu0 0.0
    %2704 = vmatpush1.msra.mxu0 0.0
    %2705 = vmatprep.subr.mxu0 0.0
    %2706 = vmatpush1.msra.mxu0 0.0
    %2707 = vmatprep.subr.mxu0 0.0
    %2708 = vmatpush1.msra.mxu0 0.0
    %2709 = vmatprep.subr.mxu0 0.0
    %2710 = vmatpush1.msra.mxu0 0.0
    %2711 = vmatprep.subr.mxu0 0.0
    %2712 = vmatpush1.msra.mxu0 0.0
    %2713 = vmatprep.subr.mxu0 0.0
    %2714 = vmatpush1.msra.mxu0 0.0
    %2715 = vmatprep.subr.mxu0 0.0
    %2716 = vmatpush1.msra.mxu0 0.0
    %2717 = vmatprep.subr.mxu0 0.0
    %2718 = vmatpush1.msra.mxu0 0.0
    %2719 = vmatprep.subr.mxu0 0.0
    %2720 = vmatpush1.msra.mxu0 0.0
    %2721 = vmatprep.subr.mxu0 0.0
    %2722 = vmatpush1.msra.mxu0 0.0
    %2723 = vmatprep.subr.mxu0 0.0
    %2724 = vmatpush1.msra.mxu0 0.0
    %2725 = vmatprep.subr.mxu0 0.0
    %2726 = vmatpush1.msra.mxu0 0.0
    %2727 = vmatprep.subr.mxu0 0.0
    %2728 = vmatpush1.msra.mxu0 0.0
    %2729 = vmatprep.subr.mxu0 0.0
    %2730 = vmatpush1.msra.mxu0 0.0
    %2731 = vmatprep.subr.mxu0 0.0
    %2732 = vmatpush1.msra.mxu0 0.0
    %2733 = vmatprep.subr.mxu0 0.0
    %2734 = vmatpush1.msra.mxu0 0.0
    %2735 = vmatprep.subr.mxu0 0.0
    %2736 = vmatpush1.msra.mxu0 0.0
    %2737 = vmatprep.subr.mxu0 0.0
    %2738 = vmatpush1.msra.mxu0 0.0
    %2739 = vmatprep.subr.mxu0 0.0
    %2740 = vmatpush1.msra.mxu0 0.0
    %2741 = vmatprep.subr.mxu0 0.0
    %2742 = vmatpush1.msra.mxu0 0.0
    %2743 = vmatprep.subr.mxu0 0.0
    %2744 = vmatpush1.msra.mxu0 0.0
    %2745 = vmatprep.subr.mxu0 0.0
    %2746 = vmatpush1.msra.mxu0 0.0
    %2747 = vmatprep.subr.mxu0 0.0
    %2748 = vmatpush1.msra.mxu0 0.0
    %2749 = vmatprep.subr.mxu0 0.0
    %2750 = vmatpush1.msra.mxu0 0.0
    %2751 = vmatprep.mubr.f32.mxu0 0.0
    %v2752 = vand.u32 %v2190, 4294901760
    %v2753 = vsub.f32 %v2190, %v2752
    %v2754 = vand.u32 %v2753, 4294901760
    %v2755 = vsub.f32 %v2753, %v2754
    %v2756 = vand.u32 %v2755, 4294901760
    %2757 = vmatmul.mubr.f32.gmra.mrb[0].mxu0 %v2756
    %v2758 = vpop.f32.mrb[0].mxu0
    %v2759 = vadd.f32 0.0, %v2758
    %v2760 = vpop.f32.mrb[0].mxu0
    %v2761 = vadd.f32 0.0, %v2760
    %2762 = vdwg.mxu0
    %v2763 = vand.u32 %v2183, 4294901760
    %v2764 = vsub.f32 %v2183, %v2763
    %v2765 = vand.u32 %v2764, 4294901760
    %v2766 = vsub.f32 %v2764, %v2765
    %v2767 = vand.u32 %v2766, 4294901760
    %2768 = vmatprep.subr.mxu0 %v2767
    %v2769 = vand.u32 %v2182, 4294901760
    %v2770 = vsub.f32 %v2182, %v2769
    %v2771 = vand.u32 %v2770, 4294901760
    %v2772 = vsub.f32 %v2770, %v2771
    %v2773 = vand.u32 %v2772, 4294901760
    %2774 = vmatpush1.msra.mxu0 %v2773
    %v2775 = vand.u32 %v2187, 4294901760
    %v2776 = vsub.f32 %v2187, %v2775
    %v2777 = vand.u32 %v2776, 4294901760
    %v2778 = vsub.f32 %v2776, %v2777
    %v2779 = vand.u32 %v2778, 4294901760
    %2780 = vmatprep.subr.mxu0 %v2779
    %v2781 = vand.u32 %v2186, 4294901760
    %v2782 = vsub.f32 %v2186, %v2781
    %v2783 = vand.u32 %v2782, 4294901760
    %v2784 = vsub.f32 %v2782, %v2783
    %v2785 = vand.u32 %v2784, 4294901760
    %2786 = vmatpush1.msra.mxu0 %v2785
    %2787 = vmatprep.subr.mxu0 0.0
    %2788 = vmatpush1.msra.mxu0 0.0
    %2789 = vmatprep.subr.mxu0 0.0
    %2790 = vmatpush1.msra.mxu0 0.0
    %2791 = vmatprep.subr.mxu0 0.0
    %2792 = vmatpush1.msra.mxu0 0.0
    %2793 = vmatprep.subr.mxu0 0.0
    %2794 = vmatpush1.msra.mxu0 0.0
    %2795 = vmatprep.subr.mxu0 0.0
    %2796 = vmatpush1.msra.mxu0 0.0
    %2797 = vmatprep.subr.mxu0 0.0
    %2798 = vmatpush1.msra.mxu0 0.0
    %2799 = vmatprep.subr.mxu0 0.0
    %2800 = vmatpush1.msra.mxu0 0.0
    %2801 = vmatprep.subr.mxu0 0.0
    %2802 = vmatpush1.msra.mxu0 0.0
    %2803 = vmatprep.subr.mxu0 0.0
    %2804 = vmatpush1.msra.mxu0 0.0
    %2805 = vmatprep.subr.mxu0 0.0
    %2806 = vmatpush1.msra.mxu0 0.0
    %2807 = vmatprep.subr.mxu0 0.0
    %2808 = vmatpush1.msra.mxu0 0.0
    %2809 = vmatprep.subr.mxu0 0.0
    %2810 = vmatpush1.msra.mxu0 0.0
    %2811 = vmatprep.subr.mxu0 0.0
    %2812 = vmatpush1.msra.mxu0 0.0
    %2813 = vmatprep.subr.mxu0 0.0
    %2814 = vmatpush1.msra.mxu0 0.0
    %2815 = vmatprep.subr.mxu0 0.0
    %2816 = vmatpush1.msra.mxu0 0.0
    %2817 = vmatprep.subr.mxu0 0.0
    %2818 = vmatpush1.msra.mxu0 0.0
    %2819 = vmatprep.subr.mxu0 0.0
    %2820 = vmatpush1.msra.mxu0 0.0
    %2821 = vmatprep.subr.mxu0 0.0
    %2822 = vmatpush1.msra.mxu0 0.0
    %2823 = vmatprep.subr.mxu0 0.0
    %2824 = vmatpush1.msra.mxu0 0.0
    %2825 = vmatprep.subr.mxu0 0.0
    %2826 = vmatpush1.msra.mxu0 0.0
    %2827 = vmatprep.subr.mxu0 0.0
    %2828 = vmatpush1.msra.mxu0 0.0
    %2829 = vmatprep.subr.mxu0 0.0
    %2830 = vmatpush1.msra.mxu0 0.0
    %2831 = vmatprep.subr.mxu0 0.0
    %2832 = vmatpush1.msra.mxu0 0.0
    %2833 = vmatprep.subr.mxu0 0.0
    %2834 = vmatpush1.msra.mxu0 0.0
    %2835 = vmatprep.subr.mxu0 0.0
    %2836 = vmatpush1.msra.mxu0 0.0
    %2837 = vmatprep.subr.mxu0 0.0
    %2838 = vmatpush1.msra.mxu0 0.0
    %2839 = vmatprep.subr.mxu0 0.0
    %2840 = vmatpush1.msra.mxu0 0.0
    %2841 = vmatprep.subr.mxu0 0.0
    %2842 = vmatpush1.msra.mxu0 0.0
    %2843 = vmatprep.subr.mxu0 0.0
    %2844 = vmatpush1.msra.mxu0 0.0
    %2845 = vmatprep.subr.mxu0 0.0
    %2846 = vmatpush1.msra.mxu0 0.0
    %2847 = vmatprep.mubr.f32.mxu0 0.0
    %v2848 = vand.u32 %v2190, 4294901760
    %2849 = vmatmul.mubr.f32.gmra.mrb[0].mxu0 %v2848
    %v2850 = vpop.f32.mrb[0].mxu0
    %v2851 = vadd.f32 %v2759, %v2850
    %v2852 = vpop.f32.mrb[0].mxu0
    %v2853 = vadd.f32 %v2761, %v2852
    %2854 = vdwg.mxu0
    %v2855 = vand.u32 %v2183, 4294901760
    %v2856 = vsub.f32 %v2183, %v2855
    %2857 = vmatprep.subr.mxu0 %v2856
    %v2858 = vand.u32 %v2182, 4294901760
    %v2859 = vsub.f32 %v2182, %v2858
    %2860 = vmatpush1.msra.mxu0 %v2859
    %v2861 = vand.u32 %v2187, 4294901760
    %v2862 = vsub.f32 %v2187, %v2861
    %2863 = vmatprep.subr.mxu0 %v2862
    %v2864 = vand.u32 %v2186, 4294901760
    %v2865 = vsub.f32 %v2186, %v2864
    %2866 = vmatpush1.msra.mxu0 %v2865
    %2867 = vmatprep.subr.mxu0 0.0
    %2868 = vmatpush1.msra.mxu0 0.0
    %2869 = vmatprep.subr.mxu0 0.0
    %2870 = vmatpush1.msra.mxu0 0.0
    %2871 = vmatprep.subr.mxu0 0.0
    %2872 = vmatpush1.msra.mxu0 0.0
    %2873 = vmatprep.subr.mxu0 0.0
    %2874 = vmatpush1.msra.mxu0 0.0
    %2875 = vmatprep.subr.mxu0 0.0
    %2876 = vmatpush1.msra.mxu0 0.0
    %2877 = vmatprep.subr.mxu0 0.0
    %2878 = vmatpush1.msra.mxu0 0.0
    %2879 = vmatprep.subr.mxu0 0.0
    %2880 = vmatpush1.msra.mxu0 0.0
    %2881 = vmatprep.subr.mxu0 0.0
    %2882 = vmatpush1.msra.mxu0 0.0
    %2883 = vmatprep.subr.mxu0 0.0
    %2884 = vmatpush1.msra.mxu0 0.0
    %2885 = vmatprep.subr.mxu0 0.0
    %2886 = vmatpush1.msra.mxu0 0.0
    %2887 = vmatprep.subr.mxu0 0.0
    %2888 = vmatpush1.msra.mxu0 0.0
    %2889 = vmatprep.subr.mxu0 0.0
    %2890 = vmatpush1.msra.mxu0 0.0
    %2891 = vmatprep.subr.mxu0 0.0
    %2892 = vmatpush1.msra.mxu0 0.0
    %2893 = vmatprep.subr.mxu0 0.0
    %2894 = vmatpush1.msra.mxu0 0.0
    %2895 = vmatprep.subr.mxu0 0.0
    %2896 = vmatpush1.msra.mxu0 0.0
    %2897 = vmatprep.subr.mxu0 0.0
    %2898 = vmatpush1.msra.mxu0 0.0
    %2899 = vmatprep.subr.mxu0 0.0
    %2900 = vmatpush1.msra.mxu0 0.0
    %2901 = vmatprep.subr.mxu0 0.0
    %2902 = vmatpush1.msra.mxu0 0.0
    %2903 = vmatprep.subr.mxu0 0.0
    %2904 = vmatpush1.msra.mxu0 0.0
    %2905 = vmatprep.subr.mxu0 0.0
    %2906 = vmatpush1.msra.mxu0 0.0
    %2907 = vmatprep.subr.mxu0 0.0
    %2908 = vmatpush1.msra.mxu0 0.0
    %2909 = vmatprep.subr.mxu0 0.0
    %2910 = vmatpush1.msra.mxu0 0.0
    %2911 = vmatprep.subr.mxu0 0.0
    %2912 = vmatpush1.msra.mxu0 0.0
    %2913 = vmatprep.subr.mxu0 0.0
    %2914 = vmatpush1.msra.mxu0 0.0
    %2915 = vmatprep.subr.mxu0 0.0
    %2916 = vmatpush1.msra.mxu0 0.0
    %2917 = vmatprep.subr.mxu0 0.0
    %2918 = vmatpush1.msra.mxu0 0.0
    %2919 = vmatprep.subr.mxu0 0.0
    %2920 = vmatpush1.msra.mxu0 0.0
    %2921 = vmatprep.subr.mxu0 0.0
    %2922 = vmatpush1.msra.mxu0 0.0
    %2923 = vmatprep.subr.mxu0 0.0
    %2924 = vmatpush1.msra.mxu0 0.0
    %2925 = vmatprep.subr.mxu0 0.0
    %2926 = vmatpush1.msra.mxu0 0.0
    %2927 = vmatprep.mubr.f32.mxu0 0.0
    %v2928 = vand.u32 %v2190, 4294901760
    %v2929 = vsub.f32 %v2190, %v2928
    %2930 = vmatmul.mubr.f32.gmra.mrb[0].mxu0 %v2929
    %v2931 = vpop.f32.mrb[0].mxu0
    %v2932 = vadd.f32 %v2851, %v2931
    %v2933 = vpop.f32.mrb[0].mxu0
    %v2934 = vadd.f32 %v2853, %v2933
    %2935 = vdwg.mxu0
    %v2936 = vand.u32 %v2183, 4294901760
    %2937 = vmatprep.subr.mxu0 %v2936
    %v2938 = vand.u32 %v2182, 4294901760
    %2939 = vmatpush1.msra.mxu0 %v2938
    %v2940 = vand.u32 %v2187, 4294901760
    %2941 = vmatprep.subr.mxu0 %v2940
    %v2942 = vand.u32 %v2186, 4294901760
    %2943 = vmatpush1.msra.mxu0 %v2942
    %2944 = vmatprep.subr.mxu0 0.0
    %2945 = vmatpush1.msra.mxu0 0.0
    %2946 = vmatprep.subr.mxu0 0.0
    %2947 = vmatpush1.msra.mxu0 0.0
    %2948 = vmatprep.subr.mxu0 0.0
    %2949 = vmatpush1.msra.mxu0 0.0
    %2950 = vmatprep.subr.mxu0 0.0
    %2951 = vmatpush1.msra.mxu0 0.0
    %2952 = vmatprep.subr.mxu0 0.0
    %2953 = vmatpush1.msra.mxu0 0.0
    %2954 = vmatprep.subr.mxu0 0.0
    %2955 = vmatpush1.msra.mxu0 0.0
    %2956 = vmatprep.subr.mxu0 0.0
    %2957 = vmatpush1.msra.mxu0 0.0
    %2958 = vmatprep.subr.mxu0 0.0
    %2959 = vmatpush1.msra.mxu0 0.0
    %2960 = vmatprep.subr.mxu0 0.0
    %2961 = vmatpush1.msra.mxu0 0.0
    %2962 = vmatprep.subr.mxu0 0.0
    %2963 = vmatpush1.msra.mxu0 0.0
    %2964 = vmatprep.subr.mxu0 0.0
    %2965 = vmatpush1.msra.mxu0 0.0
    %2966 = vmatprep.subr.mxu0 0.0
    %2967 = vmatpush1.msra.mxu0 0.0
    %2968 = vmatprep.subr.mxu0 0.0
    %2969 = vmatpush1.msra.mxu0 0.0
    %2970 = vmatprep.subr.mxu0 0.0
    %2971 = vmatpush1.msra.mxu0 0.0
    %2972 = vmatprep.subr.mxu0 0.0
    %2973 = vmatpush1.msra.mxu0 0.0
    %2974 = vmatprep.subr.mxu0 0.0
    %2975 = vmatpush1.msra.mxu0 0.0
    %2976 = vmatprep.subr.mxu0 0.0
    %2977 = vmatpush1.msra.mxu0 0.0
    %2978 = vmatprep.subr.mxu0 0.0
    %2979 = vmatpush1.msra.mxu0 0.0
    %2980 = vmatprep.subr.mxu0 0.0
    %2981 = vmatpush1.msra.mxu0 0.0
    %2982 = vmatprep.subr.mxu0 0.0
    %2983 = vmatpush1.msra.mxu0 0.0
    %2984 = vmatprep.subr.mxu0 0.0
    %2985 = vmatpush1.msra.mxu0 0.0
    %2986 = vmatprep.subr.mxu0 0.0
    %2987 = vmatpush1.msra.mxu0 0.0
    %2988 = vmatprep.subr.mxu0 0.0
    %2989 = vmatpush1.msra.mxu0 0.0
    %2990 = vmatprep.subr.mxu0 0.0
    %2991 = vmatpush1.msra.mxu0 0.0
    %2992 = vmatprep.subr.mxu0 0.0
    %2993 = vmatpush1.msra.mxu0 0.0
    %2994 = vmatprep.subr.mxu0 0.0
    %2995 = vmatpush1.msra.mxu0 0.0
    %2996 = vmatprep.subr.mxu0 0.0
    %2997 = vmatpush1.msra.mxu0 0.0
    %2998 = vmatprep.subr.mxu0 0.0
    %2999 = vmatpush1.msra.mxu0 0.0
    %3000 = vmatprep.subr.mxu0 0.0
    %3001 = vmatpush1.msra.mxu0 0.0
    %3002 = vmatprep.subr.mxu0 0.0
    %3003 = vmatpush1.msra.mxu0 0.0
    %3004 = vmatprep.mubr.f32.mxu0 0.0
    %v3005 = vand.u32 %v2190, 4294901760
    %v3006 = vsub.f32 %v2190, %v3005
    %v3007 = vand.u32 %v3006, 4294901760
    %3008 = vmatmul.mubr.f32.gmra.mrb[0].mxu0 %v3007
    %v3009 = vpop.f32.mrb[0].mxu0
    %v3010 = vadd.f32 %v2932, %v3009
    %v3011 = vpop.f32.mrb[0].mxu0
    %v3012 = vadd.f32 %v2934, %v3011
    %3013 = vdwg.mxu0
    %v3014 = vand.u32 %v2183, 4294901760
    %v3015 = vsub.f32 %v2183, %v3014
    %v3016 = vand.u32 %v3015, 4294901760
    %3017 = vmatprep.subr.mxu0 %v3016
    %v3018 = vand.u32 %v2182, 4294901760
    %v3019 = vsub.f32 %v2182, %v3018
    %v3020 = vand.u32 %v3019, 4294901760
    %3021 = vmatpush1.msra.mxu0 %v3020
    %v3022 = vand.u32 %v2187, 4294901760
    %v3023 = vsub.f32 %v2187, %v3022
    %v3024 = vand.u32 %v3023, 4294901760
    %3025 = vmatprep.subr.mxu0 %v3024
    %v3026 = vand.u32 %v2186, 4294901760
    %v3027 = vsub.f32 %v2186, %v3026
    %v3028 = vand.u32 %v3027, 4294901760
    %3029 = vmatpush1.msra.mxu0 %v3028
    %3030 = vmatprep.subr.mxu0 0.0
    %3031 = vmatpush1.msra.mxu0 0.0
    %3032 = vmatprep.subr.mxu0 0.0
    %3033 = vmatpush1.msra.mxu0 0.0
    %3034 = vmatprep.subr.mxu0 0.0
    %3035 = vmatpush1.msra.mxu0 0.0
    %3036 = vmatprep.subr.mxu0 0.0
    %3037 = vmatpush1.msra.mxu0 0.0
    %3038 = vmatprep.subr.mxu0 0.0
    %3039 = vmatpush1.msra.mxu0 0.0
    %3040 = vmatprep.subr.mxu0 0.0
    %3041 = vmatpush1.msra.mxu0 0.0
    %3042 = vmatprep.subr.mxu0 0.0
    %3043 = vmatpush1.msra.mxu0 0.0
    %3044 = vmatprep.subr.mxu0 0.0
    %3045 = vmatpush1.msra.mxu0 0.0
    %3046 = vmatprep.subr.mxu0 0.0
    %3047 = vmatpush1.msra.mxu0 0.0
    %3048 = vmatprep.subr.mxu0 0.0
    %3049 = vmatpush1.msra.mxu0 0.0
    %3050 = vmatprep.subr.mxu0 0.0
    %3051 = vmatpush1.msra.mxu0 0.0
    %3052 = vmatprep.subr.mxu0 0.0
    %3053 = vmatpush1.msra.mxu0 0.0
    %3054 = vmatprep.subr.mxu0 0.0
    %3055 = vmatpush1.msra.mxu0 0.0
    %3056 = vmatprep.subr.mxu0 0.0
    %3057 = vmatpush1.msra.mxu0 0.0
    %3058 = vmatprep.subr.mxu0 0.0
    %3059 = vmatpush1.msra.mxu0 0.0
    %3060 = vmatprep.subr.mxu0 0.0
    %3061 = vmatpush1.msra.mxu0 0.0
    %3062 = vmatprep.subr.mxu0 0.0
    %3063 = vmatpush1.msra.mxu0 0.0
    %3064 = vmatprep.subr.mxu0 0.0
    %3065 = vmatpush1.msra.mxu0 0.0
    %3066 = vmatprep.subr.mxu0 0.0
    %3067 = vmatpush1.msra.mxu0 0.0
    %3068 = vmatprep.subr.mxu0 0.0
    %3069 = vmatpush1.msra.mxu0 0.0
    %3070 = vmatprep.subr.mxu0 0.0
    %3071 = vmatpush1.msra.mxu0 0.0
    %3072 = vmatprep.subr.mxu0 0.0
    %3073 = vmatpush1.msra.mxu0 0.0
    %3074 = vmatprep.subr.mxu0 0.0
    %3075 = vmatpush1.msra.mxu0 0.0
    %3076 = vmatprep.subr.mxu0 0.0
    %3077 = vmatpush1.msra.mxu0 0.0
    %3078 = vmatprep.subr.mxu0 0.0
    %3079 = vmatpush1.msra.mxu0 0.0
    %3080 = vmatprep.subr.mxu0 0.0
    %3081 = vmatpush1.msra.mxu0 0.0
    %3082 = vmatprep.subr.mxu0 0.0
    %3083 = vmatpush1.msra.mxu0 0.0
    %3084 = vmatprep.subr.mxu0 0.0
    %3085 = vmatpush1.msra.mxu0 0.0
    %3086 = vmatprep.subr.mxu0 0.0
    %3087 = vmatpush1.msra.mxu0 0.0
    %3088 = vmatprep.subr.mxu0 0.0
    %3089 = vmatpush1.msra.mxu0 0.0
    %3090 = vmatprep.mubr.f32.mxu0 0.0
    %v3091 = vand.u32 %v2190, 4294901760
    %3092 = vmatmul.mubr.f32.gmra.mrb[0].mxu0 %v3091
    %v3093 = vpop.f32.mrb[0].mxu0
    %v3094 = vadd.f32 %v3010, %v3093
    %v3095 = vpop.f32.mrb[0].mxu0
    %v3096 = vadd.f32 %v3012, %v3095
    %3097 = vdwg.mxu0
    %v3098 = vand.u32 %v2183, 4294901760
    %3099 = vmatprep.subr.mxu0 %v3098
    %v3100 = vand.u32 %v2182, 4294901760
    %3101 = vmatpush1.msra.mxu0 %v3100
    %v3102 = vand.u32 %v2187, 4294901760
    %3103 = vmatprep.subr.mxu0 %v3102
    %v3104 = vand.u32 %v2186, 4294901760
    %3105 = vmatpush1.msra.mxu0 %v3104
    %3106 = vmatprep.subr.mxu0 0.0
    %3107 = vmatpush1.msra.mxu0 0.0
    %3108 = vmatprep.subr.mxu0 0.0
    %3109 = vmatpush1.msra.mxu0 0.0
    %3110 = vmatprep.subr.mxu0 0.0
    %3111 = vmatpush1.msra.mxu0 0.0
    %3112 = vmatprep.subr.mxu0 0.0
    %3113 = vmatpush1.msra.mxu0 0.0
    %3114 = vmatprep.subr.mxu0 0.0
    %3115 = vmatpush1.msra.mxu0 0.0
    %3116 = vmatprep.subr.mxu0 0.0
    %3117 = vmatpush1.msra.mxu0 0.0
    %3118 = vmatprep.subr.mxu0 0.0
    %3119 = vmatpush1.msra.mxu0 0.0
    %3120 = vmatprep.subr.mxu0 0.0
    %3121 = vmatpush1.msra.mxu0 0.0
    %3122 = vmatprep.subr.mxu0 0.0
    %3123 = vmatpush1.msra.mxu0 0.0
    %3124 = vmatprep.subr.mxu0 0.0
    %3125 = vmatpush1.msra.mxu0 0.0
    %3126 = vmatprep.subr.mxu0 0.0
    %3127 = vmatpush1.msra.mxu0 0.0
    %3128 = vmatprep.subr.mxu0 0.0
    %3129 = vmatpush1.msra.mxu0 0.0
    %3130 = vmatprep.subr.mxu0 0.0
    %3131 = vmatpush1.msra.mxu0 0.0
    %3132 = vmatprep.subr.mxu0 0.0
    %3133 = vmatpush1.msra.mxu0 0.0
    %3134 = vmatprep.subr.mxu0 0.0
    %3135 = vmatpush1.msra.mxu0 0.0
    %3136 = vmatprep.subr.mxu0 0.0
    %3137 = vmatpush1.msra.mxu0 0.0
    %3138 = vmatprep.subr.mxu0 0.0
    %3139 = vmatpush1.msra.mxu0 0.0
    %3140 = vmatprep.subr.mxu0 0.0
    %3141 = vmatpush1.msra.mxu0 0.0
    %3142 = vmatprep.subr.mxu0 0.0
    %3143 = vmatpush1.msra.mxu0 0.0
    %3144 = vmatprep.subr.mxu0 0.0
    %3145 = vmatpush1.msra.mxu0 0.0
    %3146 = vmatprep.subr.mxu0 0.0
    %3147 = vmatpush1.msra.mxu0 0.0
    %3148 = vmatprep.subr.mxu0 0.0
    %3149 = vmatpush1.msra.mxu0 0.0
    %3150 = vmatprep.subr.mxu0 0.0
    %3151 = vmatpush1.msra.mxu0 0.0
    %3152 = vmatprep.subr.mxu0 0.0
    %3153 = vmatpush1.msra.mxu0 0.0
    %3154 = vmatprep.subr.mxu0 0.0
    %3155 = vmatpush1.msra.mxu0 0.0
    %3156 = vmatprep.subr.mxu0 0.0
    %3157 = vmatpush1.msra.mxu0 0.0
    %3158 = vmatprep.subr.mxu0 0.0
    %3159 = vmatpush1.msra.mxu0 0.0
    %3160 = vmatprep.subr.mxu0 0.0
    %3161 = vmatpush1.msra.mxu0 0.0
    %3162 = vmatprep.subr.mxu0 0.0
    %3163 = vmatpush1.msra.mxu0 0.0
    %3164 = vmatprep.subr.mxu0 0.0
    %3165 = vmatpush1.msra.mxu0 0.0
    %3166 = vmatprep.mubr.f32.mxu0 0.0
    %v3167 = vand.u32 %v2190, 4294901760
    %3168 = vmatmul.mubr.f32.gmra.mrb[0].mxu0 %v3167
    %v3169 = vpop.f32.mrb[0].mxu0
    %v3170 = vadd.f32 %v3094, %v3169
    %v3171 = vpop.f32.mrb[0].mxu0
    %v3172 = vadd.f32 %v3096, %v3171
    %3173 = vdwg.mxu0
    %v3174 = vmul.f32 %v637, %v2679
    %v3175 = vmul.f32 %v639, %v2681
    %v3176 = vmul.f32 %v1180, %v3170
    %v3177 = vmul.f32 %v1182, %v3172
    %s3178 = scalar_lea.vmem %s6, 1
    %v3179 = vld [vmem:[%s3178] ss:$2 sm:$0xf]
    %v3181 = vlaneseq
    %v3182 = vshrl.u32 %v3181, 7
    %v3183 = vsub.s32 0, %v3182
    %v3184 = vrot.slane %v3179, %v3183
    %v3185 = vlaneseq
    %v3186 = vshrl.u32 %v3185, 7
    %v3187 = vsub.s32 1, %v3186
    %v3188 = vrot.slane %v3179, %v3187
    %v3189 = vlaneseq
    %v3190 = vshrl.u32 %v3189, 7
    %v3191 = vsub.s32 2, %v3190
    %v3192 = vrot.slane %v3179, %v3191
    %v3193 = vlaneseq
    %v3194 = vshrl.u32 %v3193, 7
    %v3195 = vsub.s32 3, %v3194
    %v3196 = vrot.slane %v3179, %v3195
    %v3201 = vadd.f32 %v3174, %v3184
    %v3202 = vadd.f32 %v3175, %v3188
    %v3203 = vadd.f32 %v3176, %v3192
    %v3204 = vadd.f32 %v3177, %v3196
    %3205 = vst [vmem:[#allocation7] sm:$0xff] %v3201
    %3206 = vst [vmem:[#allocation7 + $0x8] sm:$0xff] %v3202
    %3207 = vst [vmem:[#allocation7 + $0x10] sm:$0xff] %v3203
    %3208 = vst [vmem:[#allocation7 + $0x18] sm:$0xff] %v3204
    // Predicated region
    $region38: #{tpu_custom_call.1} parent=1 // pred_check
      _
    $region39: #{tpu_custom_call.1} parent=1 // pred_check_branch
      %3210 = sbr.rel (0) target = $region41
    $region40: #{tpu_custom_call.1} parent=1 // pred_region
      %s3212 = ssub.s32 512, 512
      %3213 = vsyncadd [#allocation4], %s3212
      %s3215 = sshll.u32 [#allocation7], 4
      %s3216 = int_to_ptr.vmem [resolvable:$true] %s3215
      %3218 = dma.vmem_to_hbm [thread:$0]  %s3216, 512, %s7, [#allocation4]
    $region41: #{tpu_custom_call.1} parent=1 // pred_fallthru
      _
    // Predicated region
    $region42: #{tpu_custom_call.1} parent=1 // pred_check
      _
    $region43: #{tpu_custom_call.1} parent=1 // pred_check_branch
      %3220 = sbr.rel (0) target = $region45
    $region44: #{tpu_custom_call.1} parent=1 // pred_region
      %3221 = dma.done [#allocation4], 512
    $region45: #{tpu_custom_call.1} parent=1 // pred_fallthru
      _
    %3222 = vsyncpa [#allocation3], 1
    %3223 = vsyncpa [#allocation6], 1
    %3224 = vsyncpa [#allocation4], 1

</llo_original>
